<compile_context>
chip_gen: v7x
topology: tpu7x:2x2x1
jax: 0.10.0
libtpu: 0.0.40
codegen_flags: <defaults>
</compile_context>

<pallas_src>
import functools

import jax
import jax.numpy as jnp
from jax import lax
from jax.experimental import pallas as pl
from jax.experimental.pallas import tpu as pltpu


# -----------------------------------------------------------------------------
# Network configuration (matches the PyTorch ConvAutoencoder exactly).
#   (kind, param name, stride, padding, output_padding, activation AFTER layer)
# -----------------------------------------------------------------------------
_LAYERS = (
    ("conv",  "e1", 2, 1, 0, "none"),
    ("conv",  "e2", 1, 1, 0, "relu"),
    ("conv",  "e3", 2, 2, 0, "none"),
    ("conv",  "e4", 1, 2, 0, "relu"),
    ("conv",  "e5", 2, 2, 0, "none"),      # -> latent
    ("convT", "d1", 2, 2, 1, "none"),
    ("conv",  "d2", 1, 2, 0, "relu"),
    ("convT", "d3", 2, 2, 1, "none"),
    ("conv",  "d4", 1, 1, 0, "relu"),
    ("convT", "d5", 2, 1, 1, "sigmoid"),
)

# Fuse consecutive convs that have no nonlinearity between them.  The latent
# (output of layer index 4, "e5") must be emitted, so it stays its own group.
_FUSION_PLAN = ((0, 1), (2, 3), (4,), (5, 6), (7, 8), (9,))
_LATENT_GROUP = 2


def _round_up(x, m):
    return ((x + m - 1) // m) * m


# -----------------------------------------------------------------------------
# One-time weight packing (plain JAX, runs once at init time, NOT per step).
# -----------------------------------------------------------------------------
def _conv2d_operator(w, H, W, stride, padding):
    """w: (Cout, Cin, k, k) PyTorch Conv2d weight -> (H*W*Cin, OH*OW*Cout)."""
    Cout, Cin, k, _ = w.shape
    OH = (H + 2 * padding - k) // stride + 1
    OW = (W + 2 * padding - k) // stride + 1

    oh = jnp.arange(OH).reshape(OH, 1, 1, 1, 1, 1)
    ow = jnp.arange(OW).reshape(1, OW, 1, 1, 1, 1)
    kh = jnp.arange(k).reshape(1, 1, k, 1, 1, 1)
    kw = jnp.arange(k).reshape(1, 1, 1, k, 1, 1)
    ci = jnp.arange(Cin).reshape(1, 1, 1, 1, Cin, 1)
    co = jnp.arange(Cout).reshape(1, 1, 1, 1, 1, Cout)

    ih = oh * stride + kh - padding
    iw = ow * stride + kw - padding
    valid = (ih >= 0) & (ih < H) & (iw >= 0) & (iw < W)

    rows = (ih * W + iw) * Cin + ci          # input  flat index, (h, w, c) order
    cols = (oh * OW + ow) * Cout + co        # output flat index, (h, w, c) order
    vals = w[co, ci, kh, kw].astype(jnp.float32)

    full = (OH, OW, k, k, Cin, Cout)
    valid = jnp.broadcast_to(valid, full).reshape(-1)
    rows = jnp.where(valid, jnp.broadcast_to(rows, full).reshape(-1), 0)
    cols = jnp.where(valid, jnp.broadcast_to(cols, full).reshape(-1), 0)
    vals = jnp.where(valid, jnp.broadcast_to(vals, full).reshape(-1), 0.0)

    mat = jnp.zeros((H * W * Cin, OH * OW * Cout), jnp.float32)
    mat = mat.at[rows, cols].add(vals)
    return mat, OH, OW


def _conv_transpose2d_operator(w, H, W, stride, padding, output_padding):
    """w: (Cin, Cout, k, k) PyTorch ConvTranspose2d weight."""
    Cin, Cout, k, _ = w.shape
    OH = (H - 1) * stride - 2 * padding + k + output_padding
    OW = (W - 1) * stride - 2 * padding + k + output_padding

    ih = jnp.arange(H).reshape(H, 1, 1, 1, 1, 1)
    iw = jnp.arange(W).reshape(1, W, 1, 1, 1, 1)
    kh = jnp.arange(k).reshape(1, 1, k, 1, 1, 1)
    kw = jnp.arange(k).reshape(1, 1, 1, k, 1, 1)
    ci = jnp.arange(Cin).reshape(1, 1, 1, 1, Cin, 1)
    co = jnp.arange(Cout).reshape(1, 1, 1, 1, 1, Cout)

    oh = ih * stride + kh - padding          # ConvTranspose2d: oh = ih*s + kh - p
    ow = iw * stride + kw - padding
    valid = (oh >= 0) & (oh < OH) & (ow >= 0) & (ow < OW)

    rows = (ih * W + iw) * Cin + ci
    cols = (oh * OW + ow) * Cout + co
    vals = w[ci, co, kh, kw].astype(jnp.float32)

    full = (H, W, k, k, Cin, Cout)
    valid = jnp.broadcast_to(valid, full).reshape(-1)
    rows = jnp.where(valid, jnp.broadcast_to(rows, full).reshape(-1), 0)
    cols = jnp.where(valid, jnp.broadcast_to(cols, full).reshape(-1), 0)
    vals = jnp.where(valid, jnp.broadcast_to(vals, full).reshape(-1), 0.0)

    mat = jnp.zeros((H * W * Cin, OH * OW * Cout), jnp.float32)
    mat = mat.at[rows, cols].add(vals)
    return mat, OH, OW


def prepare_operators(params, H, W):
    """Fold every layer (and every activation-free Conv->Conv pair) into a
    dense operator + per-position bias row.  Composition is done in f32
    (HIGHEST); the final operators are zero-padded to 128-lane multiples and
    cast to bf16 once.  Biases stay f32.  Returns static metadata too."""
    # Step 1: per-layer operators (f32).
    per_layer = []
    h, w_ = H, W
    for kind, name, stride, padding, out_pad, act in _LAYERS:
        wgt = params[name + "_w"]
        b = params[name + "_b"]
        if kind == "conv":
            mat, oh, ow = _conv2d_operator(wgt, h, w_, stride, padding)
            cout = wgt.shape[0]
        else:
            mat, oh, ow = _conv_transpose2d_operator(
                wgt, h, w_, stride, padding, out_pad)
            cout = wgt.shape[1]
        bias = jnp.tile(b.astype(jnp.float32), oh * ow).reshape(1, oh * ow * cout)
        per_layer.append((mat, bias, act, (oh, ow, cout)))
        h, w_ = oh, ow

    # Step 2: compose pairs with no nonlinearity in between (exact, f32 HIGHEST):
    #   (x M1 + b1) M2 + b2 == x (M1 M2) + (b1 M2 + b2)
    hi = lax.Precision.HIGHEST
    mats_f32, biases_f32, acts, shapes = [], [], [], []
    for group in _FUSION_PLAN:
        mat, bias, act, shp = per_layer[group[0]]
        for j in group[1:]:
            mat2, bias2, act, shp = per_layer[j]
            mat = jnp.dot(mat, mat2, precision=hi)
            bias = jnp.dot(bias, mat2, precision=hi) + bias2
        mats_f32.append(mat)
        biases_f32.append(bias)
        acts.append(act)
        shapes.append(shp)

    # Step 3: zero-pad every operator interface to a multiple of 128 lanes so
    # all GEMMs / stores in the kernel are lane-dense (this covers the N=16
    # latent).  Zero bias columns feed zero weight rows -> results unchanged.
    # Cast the mats to bf16 ONCE at the end; biases remain f32.
    mats, biases = [], []
    prev = _round_up(mats_f32[0].shape[0], 128)
    for mat, bias in zip(mats_f32, biases_f32):
        rows, cols = mat.shape
        cols_pad = _round_up(cols, 128)
        mp = jnp.zeros((prev, cols_pad), jnp.float32).at[:rows, :cols].set(mat)
        bp = jnp.zeros((1, cols_pad), jnp.float32).at[:, :cols].set(bias)
        mats.append(mp.astype(jnp.bfloat16))
        biases.append(bp)
        prev = cols_pad

    return tuple(mats), tuple(biases), tuple(acts), tuple(shapes)


# -----------------------------------------------------------------------------
# The fused Pallas kernel: six chained lane-dense bf16 GEMMs (f32 accumulate),
# bias + ReLU / Sigmoid fused, weights VMEM resident across the batch grid.
# -----------------------------------------------------------------------------
def _fused_autoencoder_kernel(*refs, acts, latent_index):
    n = len(acts)
    x_ref = refs[0]
    mat_refs = refs[1:1 + n]
    bias_refs = refs[1 + n:1 + 2 * n]
    out_ref = refs[1 + 2 * n]
    lat_ref = refs[2 + 2 * n]

    h = x_ref[...]                                        # (tm, K0) bf16
    for i in range(n):                                    # static unroll
        acc = jnp.dot(h, mat_refs[i][...],
                      preferred_element_type=jnp.float32)  # MXU bf16 -> f32 acc
        acc = acc + bias_refs[i][...]                      # f32 bias
        if acts[i] == "relu":
            acc = jnp.maximum(acc, 0.0)                    # VPU
        elif acts[i] == "sigmoid":
            acc = pl.reciprocal(1.0 + jnp.exp(-acc), approx=True)  # EUP exp + rcp
        if i == latent_index:
            lat_ref[...] = acc                             # lane-dense f32 store
        if i + 1 < n:
            h = acc.astype(jnp.bfloat16)                   # bf16 feed to next GEMM
        else:
            out_ref[...] = acc


def conv_autoencoder_forward(x_nchw, mats, biases, *, acts, shapes, latent_index,
                             batch_tile=128):
    """x_nchw: (B, C, H, W) -> (output NCHW, latent NCHW), like the PyTorch module."""
    B, C, H, W = x_nchw.shape
    n_in = H * W * C
    n_in_pad = mats[0].shape[0]
    n_out_pad = mats[-1].shape[1]
    n_lat_pad = mats[latent_index].shape[1]
    n_groups = len(mats)

    # NHWC-flatten, cast to bf16, pad batch to the tile and lanes to the
    # operator's (zero-padded) input width.
    x = jnp.transpose(x_nchw, (0, 2, 3, 1)).reshape(B, n_in).astype(jnp.bfloat16)
    tm = min(batch_tile, _round_up(B, 8))     # 8 for tiny batches, 128 otherwise
    Bp = _round_up(B, tm)
    x = jnp.pad(x, ((0, Bp - B), (0, n_in_pad - n_in)))

    grid = (Bp // tm,)
    # Activations march with the batch-tile index; weights/biases use a
    # constant index_map so they are DMA'd once and stay VMEM-resident.
    in_specs = [pl.BlockSpec((tm, n_in_pad), lambda b: (b, 0))]
    in_specs += [pl.BlockSpec(m.shape, lambda b: (0, 0)) for m in mats]
    in_specs += [pl.BlockSpec(bz.shape, lambda b: (0, 0)) for bz in biases]
    out_specs = (pl.BlockSpec((tm, n_out_pad), lambda b: (b, 0)),
                 pl.BlockSpec((tm, n_lat_pad), lambda b: (b, 0)))

    out_flat, lat_flat = pl.pallas_call(
        functools.partial(_fused_autoencoder_kernel,
                          acts=acts, latent_index=latent_index),
        grid=grid,
        out_shape=(jax.ShapeDtypeStruct((Bp, n_out_pad), jnp.float32),
                   jax.ShapeDtypeStruct((Bp, n_lat_pad), jnp.float32)),
        in_specs=in_specs,
        out_specs=out_specs,
        compiler_params=pltpu.CompilerParams(
            dimension_semantics=("parallel",)),   # batch tiles are independent
    )(x, *mats, *biases)

    lat_h, lat_w, lat_c = shapes[latent_index]
    out_h, out_w, out_c = shapes[-1]
    output = (out_flat[:B, :out_h * out_w * out_c]
              .reshape(B, out_h, out_w, out_c).transpose(0, 3, 1, 2))
    latent = (lat_flat[:B, :lat_h * lat_w * lat_c]
              .reshape(B, lat_h, lat_w, lat_c).transpose(0, 3, 1, 2))
    return output, latent


# -----------------------------------------------------------------------------
# Pure-JAX reference (verification only) and deterministic synthetic params.
# -----------------------------------------------------------------------------
def _reference_forward(x_nchw, params):
    dn = ("NHWC", "HWIO", "NHWC")
    hi = lax.Precision.HIGHEST

    def conv(h, w, b, s, p):
        wh = jnp.transpose(w, (2, 3, 1, 0))
        y = lax.conv_general_dilated(h, wh, (s, s), [(p, p), (p, p)],
                                     dimension_numbers=dn, precision=hi)
        return y + b

    def convt(h, w, b, s, p, op):
        k = w.shape[2]
        wh = jnp.transpose(jnp.flip(w, (2, 3)), (2, 3, 0, 1))
        y = lax.conv_general_dilated(h, wh, (1, 1),
                                     [(k - 1 - p, k - 1 - p + op)] * 2,
                                     lhs_dilation=(s, s),
                                     dimension_numbers=dn, precision=hi)
        return y + b

    h = jnp.transpose(x_nchw, (0, 2, 3, 1))
    h = conv(h, params["e1_w"], params["e1_b"], 2, 1)
    h = jnp.maximum(conv(h, params["e2_w"], params["e2_b"], 1, 1), 0.0)
    h = conv(h, params["e3_w"], params["e3_b"], 2, 2)
    h = jnp.maximum(conv(h, params["e4_w"], params["e4_b"], 1, 2), 0.0)
    lat = conv(h, params["e5_w"], params["e5_b"], 2, 2)
    d = convt(lat, params["d1_w"], params["d1_b"], 2, 2, 1)
    d = jnp.maximum(conv(d, params["d2_w"], params["d2_b"], 1, 2), 0.0)
    d = convt(d, params["d3_w"], params["d3_b"], 2, 2, 1)
    d = jnp.maximum(conv(d, params["d4_w"], params["d4_b"], 1, 1), 0.0)
    out = jax.nn.sigmoid(convt(d, params["d5_w"], params["d5_b"], 2, 1, 1))
    return jnp.transpose(out, (0, 3, 1, 2)), jnp.transpose(lat, (0, 3, 1, 2))


def init_params(key, bottle, inputs=1):
    """Deterministic synthetic parameters with the exact PyTorch shapes."""
    shapes = {
        # encoder: Conv2d weight (Cout, Cin, k, k)
        "e1_w": (16, inputs, 3, 3), "e1_b": (16,),
        "e2_w": (16, 16, 3, 3),     "e2_b": (16,),
        "e3_w": (8, 16, 5, 5),      "e3_b": (8,),
        "e4_w": (8, 8, 5, 5),       "e4_b": (8,),
        "e5_w": (bottle, 8, 5, 5),  "e5_b": (bottle,),
        # decoder: ConvTranspose2d weight (Cin, Cout, k, k), Conv2d (Cout, Cin, k, k)
        "d1_w": (bottle, 8, 5, 5),  "d1_b": (8,),
        "d2_w": (8, 8, 5, 5),       "d2_b": (8,),
        "d3_w": (8, 16, 5, 5),      "d3_b": (16,),
        "d4_w": (16, 16, 3, 3),     "d4_b": (16,),
        "d5_w": (16, 1, 3, 3),      "d5_b": (1,),
    }
    params = {}
    keys = jax.random.split(key, len(shapes))
    for k_, (name, shp) in zip(keys, sorted(shapes.items())):
        params[name] = 0.1 * jax.random.normal(k_, shp, dtype=jnp.float32)
    return params


if __name__ == "__main__":
    bottle, inputs = 4, 1
    key = jax.random.PRNGKey(0)
    kx, kp = jax.random.split(key)

    # Small input consistent with the module: batch=2, 1 channel, 16x16 image.
    x = jax.random.uniform(kx, (2, inputs, 16, 16), dtype=jnp.float32)
    params = init_params(kp, bottle, inputs)

    # One-time weight packing (outside the hot path).
    mats, biases, acts, shapes = prepare_operators(params, 16, 16)
    jax.block_until_ready((mats, biases))

    fwd = jax.jit(functools.partial(conv_autoencoder_forward,
                                    acts=acts, shapes=shapes,
                                    latent_index=_LATENT_GROUP))
    output, latent = fwd(x, mats, biases)
    jax.block_until_ready((output, latent))

    assert output.shape == (2, 1, 16, 16), output.shape
    assert latent.shape == (2, bottle, 2, 2), latent.shape
    # Sigmoid range (tiny slack for the EUP approx reciprocal).
    assert bool(jnp.all((output >= -1e-3) & (output <= 1.0 + 1e-3)))

    # Numerical check against a plain-JAX reference of the PyTorch module
    # (tolerance covers bf16 operators + approx reciprocal).
    ref_out, ref_lat = _reference_forward(x, params)
    assert bool(jnp.allclose(output, ref_out, atol=5e-2, rtol=5e-2)), \
        float(jnp.max(jnp.abs(output - ref_out)))
    assert bool(jnp.allclose(latent, ref_lat, atol=5e-2, rtol=5e-2)), \
        float(jnp.max(jnp.abs(latent - ref_lat)))

    print("KERNEL_OK")
</pallas_src>

<mosaic_0001>
module attributes {stable_mosaic.version = 11 : i64} {
  func.func @_fused_autoencoder_kernel(%arg0: i32, %arg1: memref<8x256xbf16, #tpu.memory_space<vmem>>, %arg2: memref<256x1024xbf16, #tpu.memory_space<vmem>>, %arg3: memref<1024x128xbf16, #tpu.memory_space<vmem>>, %arg4: memref<128x128xbf16, #tpu.memory_space<vmem>>, %arg5: memref<128x128xbf16, #tpu.memory_space<vmem>>, %arg6: memref<128x1024xbf16, #tpu.memory_space<vmem>>, %arg7: memref<1024x256xbf16, #tpu.memory_space<vmem>>, %arg8: memref<1x1024xf32, #tpu.memory_space<vmem>>, %arg9: memref<1x128xf32, #tpu.memory_space<vmem>>, %arg10: memref<1x128xf32, #tpu.memory_space<vmem>>, %arg11: memref<1x128xf32, #tpu.memory_space<vmem>>, %arg12: memref<1x1024xf32, #tpu.memory_space<vmem>>, %arg13: memref<1x256xf32, #tpu.memory_space<vmem>>, %arg14: memref<8x256xf32, #tpu.memory_space<vmem>>, %arg15: memref<8x128xf32, #tpu.memory_space<vmem>>) attributes {dimension_semantics = [#tpu.dimension_semantics<parallel>], iteration_bounds = array<i64: 1>, scalar_prefetch = 0 : i64, scratch_operands = 0 : i64, tpu.core_type = #tpu.core_type<tc>, window_params = [{transform_indices = @transform_0, window_bounds = array<i64: 8, 256>}, {pipeline_mode = #tpu.pipeline_mode<synchronous>, transform_indices = @transform_1, window_bounds = array<i64: 256, 1024>}, {pipeline_mode = #tpu.pipeline_mode<synchronous>, transform_indices = @transform_2, window_bounds = array<i64: 1024, 128>}, {pipeline_mode = #tpu.pipeline_mode<synchronous>, transform_indices = @transform_3, window_bounds = array<i64: 128, 128>}, {pipeline_mode = #tpu.pipeline_mode<synchronous>, transform_indices = @transform_4, window_bounds = array<i64: 128, 128>}, {pipeline_mode = #tpu.pipeline_mode<synchronous>, transform_indices = @transform_5, window_bounds = array<i64: 128, 1024>}, {pipeline_mode = #tpu.pipeline_mode<synchronous>, transform_indices = @transform_6, window_bounds = array<i64: 1024, 256>}, {pipeline_mode = #tpu.pipeline_mode<synchronous>, transform_indices = @transform_7, window_bounds = array<i64: 1, 1024>}, {pipeline_mode = #tpu.pipeline_mode<synchronous>, transform_indices = @transform_8, window_bounds = array<i64: 1, 128>}, {pipeline_mode = #tpu.pipeline_mode<synchronous>, transform_indices = @transform_9, window_bounds = array<i64: 1, 128>}, {pipeline_mode = #tpu.pipeline_mode<synchronous>, transform_indices = @transform_10, window_bounds = array<i64: 1, 128>}, {pipeline_mode = #tpu.pipeline_mode<synchronous>, transform_indices = @transform_11, window_bounds = array<i64: 1, 1024>}, {pipeline_mode = #tpu.pipeline_mode<synchronous>, transform_indices = @transform_12, window_bounds = array<i64: 1, 256>}, {transform_indices = @transform_13, window_bounds = array<i64: 8, 256>}, {transform_indices = @transform_14, window_bounds = array<i64: 8, 128>}]} {
    %c0 = arith.constant 0 : index
    %c0_0 = arith.constant 0 : index
    %0 = vector.load %arg1[%c0, %c0_0] : memref<8x256xbf16, #tpu.memory_space<vmem>>, vector<8x256xbf16>
    %c0_1 = arith.constant 0 : index
    %c0_2 = arith.constant 0 : index
    %1 = vector.load %arg2[%c0_1, %c0_2] : memref<256x1024xbf16, #tpu.memory_space<vmem>>, vector<256x1024xbf16>
    %cst = arith.constant dense<0.000000e+00> : vector<8x1024xf32>
    %2 = tpu.matmul %0, %1, %cst {dimension_numbers = #tpu.dot_dimension_numbers<[1], [0], [0], [1], [0, 0, 1, 1], [], []>} : vector<8x256xbf16>, vector<256x1024xbf16>, vector<8x1024xf32> -> vector<8x1024xf32>
    %c0_3 = arith.constant 0 : index
    %c0_4 = arith.constant 0 : index
    %3 = vector.load %arg8[%c0_3, %c0_4] : memref<1x1024xf32, #tpu.memory_space<vmem>>, vector<1x1024xf32>
    %4 = vector.broadcast %3 : vector<1x1024xf32> to vector<8x1024xf32>
    %5 = arith.addf %2, %4 : vector<8x1024xf32>
    %cst_5 = arith.constant 0.000000e+00 : f32
    %6 = vector.broadcast %cst_5 : f32 to vector<8x1024xf32>
    %7 = arith.maximumf %5, %6 : vector<8x1024xf32>
    %8 = arith.truncf %7 : vector<8x1024xf32> to vector<8x1024xbf16>
    %c0_6 = arith.constant 0 : index
    %c0_7 = arith.constant 0 : index
    %9 = vector.load %arg3[%c0_6, %c0_7] : memref<1024x128xbf16, #tpu.memory_space<vmem>>, vector<1024x128xbf16>
    %cst_8 = arith.constant dense<0.000000e+00> : vector<8x128xf32>
    %10 = tpu.matmul %8, %9, %cst_8 {dimension_numbers = #tpu.dot_dimension_numbers<[1], [0], [0], [1], [0, 0, 1, 1], [], []>} : vector<8x1024xbf16>, vector<1024x128xbf16>, vector<8x128xf32> -> vector<8x128xf32>
    %c0_9 = arith.constant 0 : index
    %c0_10 = arith.constant 0 : index
    %11 = vector.load %arg9[%c0_9, %c0_10] : memref<1x128xf32, #tpu.memory_space<vmem>>, vector<1x128xf32>
    %12 = vector.broadcast %11 : vector<1x128xf32> to vector<8x128xf32>
    %13 = arith.addf %10, %12 : vector<8x128xf32>
    %cst_11 = arith.constant 0.000000e+00 : f32
    %14 = vector.broadcast %cst_11 : f32 to vector<8x128xf32>
    %15 = arith.maximumf %13, %14 : vector<8x128xf32>
    %16 = arith.truncf %15 : vector<8x128xf32> to vector<8x128xbf16>
    %c0_12 = arith.constant 0 : index
    %c0_13 = arith.constant 0 : index
    %17 = vector.load %arg4[%c0_12, %c0_13] : memref<128x128xbf16, #tpu.memory_space<vmem>>, vector<128x128xbf16>
    %cst_14 = arith.constant dense<0.000000e+00> : vector<8x128xf32>
    %18 = tpu.matmul %16, %17, %cst_14 {dimension_numbers = #tpu.dot_dimension_numbers<[1], [0], [0], [1], [0, 0, 1, 1], [], []>} : vector<8x128xbf16>, vector<128x128xbf16>, vector<8x128xf32> -> vector<8x128xf32>
    %c0_15 = arith.constant 0 : index
    %c0_16 = arith.constant 0 : index
    %19 = vector.load %arg10[%c0_15, %c0_16] : memref<1x128xf32, #tpu.memory_space<vmem>>, vector<1x128xf32>
    %20 = vector.broadcast %19 : vector<1x128xf32> to vector<8x128xf32>
    %21 = arith.addf %18, %20 : vector<8x128xf32>
    %c0_17 = arith.constant 0 : index
    %c0_18 = arith.constant 0 : index
    %22 = vector.load %arg15[%c0_17, %c0_18] : memref<8x128xf32, #tpu.memory_space<vmem>>, vector<8x128xf32>
    tpu.vector_store %arg15[%c0_17, %c0_18], %21 {strides = array<i32>} : memref<8x128xf32, #tpu.memory_space<vmem>>, vector<8x128xf32>,
    %23 = arith.truncf %21 : vector<8x128xf32> to vector<8x128xbf16>
    %c0_19 = arith.constant 0 : index
    %c0_20 = arith.constant 0 : index
    %24 = vector.load %arg5[%c0_19, %c0_20] : memref<128x128xbf16, #tpu.memory_space<vmem>>, vector<128x128xbf16>
    %cst_21 = arith.constant dense<0.000000e+00> : vector<8x128xf32>
    %25 = tpu.matmul %23, %24, %cst_21 {dimension_numbers = #tpu.dot_dimension_numbers<[1], [0], [0], [1], [0, 0, 1, 1], [], []>} : vector<8x128xbf16>, vector<128x128xbf16>, vector<8x128xf32> -> vector<8x128xf32>
    %c0_22 = arith.constant 0 : index
    %c0_23 = arith.constant 0 : index
    %26 = vector.load %arg11[%c0_22, %c0_23] : memref<1x128xf32, #tpu.memory_space<vmem>>, vector<1x128xf32>
    %27 = vector.broadcast %26 : vector<1x128xf32> to vector<8x128xf32>
    %28 = arith.addf %25, %27 : vector<8x128xf32>
    %cst_24 = arith.constant 0.000000e+00 : f32
    %29 = vector.broadcast %cst_24 : f32 to vector<8x128xf32>
    %30 = arith.maximumf %28, %29 : vector<8x128xf32>
    %31 = arith.truncf %30 : vector<8x128xf32> to vector<8x128xbf16>
    %c0_25 = arith.constant 0 : index
    %c0_26 = arith.constant 0 : index
    %32 = vector.load %arg6[%c0_25, %c0_26] : memref<128x1024xbf16, #tpu.memory_space<vmem>>, vector<128x1024xbf16>
    %cst_27 = arith.constant dense<0.000000e+00> : vector<8x1024xf32>
    %33 = tpu.matmul %31, %32, %cst_27 {dimension_numbers = #tpu.dot_dimension_numbers<[1], [0], [0], [1], [0, 0, 1, 1], [], []>} : vector<8x128xbf16>, vector<128x1024xbf16>, vector<8x1024xf32> -> vector<8x1024xf32>
    %c0_28 = arith.constant 0 : index
    %c0_29 = arith.constant 0 : index
    %34 = vector.load %arg12[%c0_28, %c0_29] : memref<1x1024xf32, #tpu.memory_space<vmem>>, vector<1x1024xf32>
    %35 = vector.broadcast %34 : vector<1x1024xf32> to vector<8x1024xf32>
    %36 = arith.addf %33, %35 : vector<8x1024xf32>
    %cst_30 = arith.constant 0.000000e+00 : f32
    %37 = vector.broadcast %cst_30 : f32 to vector<8x1024xf32>
    %38 = arith.maximumf %36, %37 : vector<8x1024xf32>
    %39 = arith.truncf %38 : vector<8x1024xf32> to vector<8x1024xbf16>
    %c0_31 = arith.constant 0 : index
    %c0_32 = arith.constant 0 : index
    %40 = vector.load %arg7[%c0_31, %c0_32] : memref<1024x256xbf16, #tpu.memory_space<vmem>>, vector<1024x256xbf16>
    %cst_33 = arith.constant dense<0.000000e+00> : vector<8x256xf32>
    %41 = tpu.matmul %39, %40, %cst_33 {dimension_numbers = #tpu.dot_dimension_numbers<[1], [0], [0], [1], [0, 0, 1, 1], [], []>} : vector<8x1024xbf16>, vector<1024x256xbf16>, vector<8x256xf32> -> vector<8x256xf32>
    %c0_34 = arith.constant 0 : index
    %c0_35 = arith.constant 0 : index
    %42 = vector.load %arg13[%c0_34, %c0_35] : memref<1x256xf32, #tpu.memory_space<vmem>>, vector<1x256xf32>
    %43 = vector.broadcast %42 : vector<1x256xf32> to vector<8x256xf32>
    %44 = arith.addf %41, %43 : vector<8x256xf32>
    %cst_36 = arith.constant 0.000000e+00 : f32
    %45 = vector.broadcast %cst_36 : f32 to vector<8x256xf32>
    %46 = arith.subf %45, %44 : vector<8x256xf32>
    %47 = math.exp %46 : vector<8x256xf32>
    %cst_37 = arith.constant 1.000000e+00 : f32
    %48 = vector.broadcast %cst_37 : f32 to vector<8x256xf32>
    %49 = arith.addf %48, %47 : vector<8x256xf32>
    %50 = tpu.reciprocal %49 {approx = true} : vector<8x256xf32> -> vector<8x256xf32>
    %c0_38 = arith.constant 0 : index
    %c0_39 = arith.constant 0 : index
    %51 = vector.load %arg14[%c0_38, %c0_39] : memref<8x256xf32, #tpu.memory_space<vmem>>, vector<8x256xf32>
    tpu.vector_store %arg14[%c0_38, %c0_39], %50 {strides = array<i32>} : memref<8x256xf32, #tpu.memory_space<vmem>>, vector<8x256xf32>,
    return
  }
  func.func @transform_0(%arg0: i32) -> (i32, i32) {
    %c0_i32 = arith.constant 0 : i32
    %c0_i32_0 = arith.constant 0 : i32
    return %arg0, %c0_i32 : i32, i32
  }
  func.func @transform_1(%arg0: i32) -> (i32, i32) {
    %c0_i32 = arith.constant 0 : i32
    %c0_i32_0 = arith.constant 0 : i32
    %c0_i32_1 = arith.constant 0 : i32
    return %c0_i32, %c0_i32_0 : i32, i32
  }
  func.func @transform_2(%arg0: i32) -> (i32, i32) {
    %c0_i32 = arith.constant 0 : i32
    %c0_i32_0 = arith.constant 0 : i32
    %c0_i32_1 = arith.constant 0 : i32
    return %c0_i32, %c0_i32_0 : i32, i32
  }
  func.func @transform_3(%arg0: i32) -> (i32, i32) {
    %c0_i32 = arith.constant 0 : i32
    %c0_i32_0 = arith.constant 0 : i32
    %c0_i32_1 = arith.constant 0 : i32
    return %c0_i32, %c0_i32_0 : i32, i32
  }
  func.func @transform_4(%arg0: i32) -> (i32, i32) {
    %c0_i32 = arith.constant 0 : i32
    %c0_i32_0 = arith.constant 0 : i32
    %c0_i32_1 = arith.constant 0 : i32
    return %c0_i32, %c0_i32_0 : i32, i32
  }
  func.func @transform_5(%arg0: i32) -> (i32, i32) {
    %c0_i32 = arith.constant 0 : i32
    %c0_i32_0 = arith.constant 0 : i32
    %c0_i32_1 = arith.constant 0 : i32
    return %c0_i32, %c0_i32_0 : i32, i32
  }
  func.func @transform_6(%arg0: i32) -> (i32, i32) {
    %c0_i32 = arith.constant 0 : i32
    %c0_i32_0 = arith.constant 0 : i32
    %c0_i32_1 = arith.constant 0 : i32
    return %c0_i32, %c0_i32_0 : i32, i32
  }
  func.func @transform_7(%arg0: i32) -> (i32, i32) {
    %c0_i32 = arith.constant 0 : i32
    %c0_i32_0 = arith.constant 0 : i32
    %c0_i32_1 = arith.constant 0 : i32
    return %c0_i32, %c0_i32_0 : i32, i32
  }
  func.func @transform_8(%arg0: i32) -> (i32, i32) {
    %c0_i32 = arith.constant 0 : i32
    %c0_i32_0 = arith.constant 0 : i32
    %c0_i32_1 = arith.constant 0 : i32
    return %c0_i32, %c0_i32_0 : i32, i32
  }
  func.func @transform_9(%arg0: i32) -> (i32, i32) {
    %c0_i32 = arith.constant 0 : i32
    %c0_i32_0 = arith.constant 0 : i32
    %c0_i32_1 = arith.constant 0 : i32
    return %c0_i32, %c0_i32_0 : i32, i32
  }
  func.func @transform_10(%arg0: i32) -> (i32, i32) {
    %c0_i32 = arith.constant 0 : i32
    %c0_i32_0 = arith.constant 0 : i32
    %c0_i32_1 = arith.constant 0 : i32
    return %c0_i32, %c0_i32_0 : i32, i32
  }
  func.func @transform_11(%arg0: i32) -> (i32, i32) {
    %c0_i32 = arith.constant 0 : i32
    %c0_i32_0 = arith.constant 0 : i32
    %c0_i32_1 = arith.constant 0 : i32
    return %c0_i32, %c0_i32_0 : i32, i32
  }
  func.func @transform_12(%arg0: i32) -> (i32, i32) {
    %c0_i32 = arith.constant 0 : i32
    %c0_i32_0 = arith.constant 0 : i32
    %c0_i32_1 = arith.constant 0 : i32
    return %c0_i32, %c0_i32_0 : i32, i32
  }
  func.func @transform_13(%arg0: i32) -> (i32, i32) {
    %c0_i32 = arith.constant 0 : i32
    %c0_i32_0 = arith.constant 0 : i32
    return %arg0, %c0_i32 : i32, i32
  }
  func.func @transform_14(%arg0: i32) -> (i32, i32) {
    %c0_i32 = arith.constant 0 : i32
    %c0_i32_0 = arith.constant 0 : i32
    return %arg0, %c0_i32 : i32, i32
  }
}

</mosaic_0001>

<llo_original>
// kernel: conv_autoencoder_forward.1
$region0: #{conv_autoencoder_forward.1}
  #allocation0 [shape = 'u32[]', space=smem, size = 0x4, offset = 0x4, fixed_abs, tag = 'smem constant byte address 0x4 - core index']
  #allocation1 [shape = 'u32[144,128]{1,0:T(1,128)}', space=vmem, size = 0x12000, scoped, tag = 'internal scratch']
  %s0 = inlined_call_operand.vmem [shape: bf16[8,256], index: 0, kind: input, shape index: {}]
  %s1 = inlined_call_operand.hbm [shape: bf16[256,1024], index: 1, kind: input, shape index: {}]
  %s2 = inlined_call_operand.hbm [shape: bf16[1024,128], index: 2, kind: input, shape index: {}]
  %s3 = inlined_call_operand.vmem [shape: bf16[128,128], index: 3, kind: input, shape index: {}]
  %s4 = inlined_call_operand.hbm [shape: bf16[128,128], index: 4, kind: input, shape index: {}]
  %s5 = inlined_call_operand.hbm [shape: bf16[128,1024], index: 5, kind: input, shape index: {}]
  %s6 = inlined_call_operand.hbm [shape: bf16[1024,256], index: 6, kind: input, shape index: {}]
  %s7 = inlined_call_operand.vmem [shape: f32[1,1024], index: 7, kind: input, shape index: {}]
  %s8 = inlined_call_operand.vmem [shape: f32[1,128], index: 8, kind: input, shape index: {}]
  %s9 = inlined_call_operand.vmem [shape: f32[1,128], index: 9, kind: input, shape index: {}]
  %s10 = inlined_call_operand.vmem [shape: f32[1,128], index: 10, kind: input, shape index: {}]
  %s11 = inlined_call_operand.vmem [shape: f32[1,1024], index: 11, kind: input, shape index: {}]
  %s12 = inlined_call_operand.vmem [shape: f32[1,256], index: 12, kind: input, shape index: {}]
  %s13 = inlined_call_operand.vmem [shape: f32[8,256], index: 13, kind: output, shape index: {0}]
  %s14 = inlined_call_operand.vmem [shape: f32[8,128], index: 14, kind: output, shape index: {1}]
  %15 = xla_tuple %s13, %s14
  %s16 = sld [smem:[#allocation0]]
  $region90: #{conv_autoencoder_forward.1} parent=0
    _
  %s18 = ssub.s32 1, %s16
  %s19 = scalar_select 0, %s18, %s16
  $region1: #{conv_autoencoder_forward.1} parent=0
    #allocation2 [shape = 'u8[524288]{0}', space=vmem, size = 0x80000, scoped, tag = 'input window, operand 1, single buffered']
    #allocation3 [shape = 's32[1]{0}', space=sflag, size = 0x4, scoped, tag = 'scoped memory for conv_autoencoder_forward.1']
    #allocation4 [shape = 'u8[262144]{0}', space=vmem, size = 0x40000, scoped, tag = 'input window, operand 2, single buffered']
    #allocation5 [shape = 's32[1]{0}', space=sflag, size = 0x4, scoped, tag = 'scoped memory for conv_autoencoder_forward.1']
    #allocation6 [shape = 'u8[32768]{0}', space=vmem, size = 0x8000, scoped, tag = 'input window, operand 4, single buffered']
    #allocation7 [shape = 'u8[262144]{0}', space=vmem, size = 0x40000, scoped, tag = 'input window, operand 5, single buffered']
    #allocation8 [shape = 's32[1]{0}', space=sflag, size = 0x4, scoped, tag = 'scoped memory for conv_autoencoder_forward.1']
    #allocation9 [shape = 'u8[524288]{0}', space=vmem, size = 0x80000, scoped, tag = 'input window, operand 6, single buffered']
    %20 = vsyncpa [#allocation3], 0
    %21 = vsyncpa [#allocation5], 0
    %22 = vsyncpa [#allocation8], 0
    // Predicated region
    $region2: #{conv_autoencoder_forward.1} parent=1 // pred_check
      _
    $region3: #{conv_autoencoder_forward.1} parent=1 // pred_check_branch
      %24 = sbr.rel (0) target = $region5
    $region4: #{conv_autoencoder_forward.1} parent=1 // pred_region
      _
    $region5: #{conv_autoencoder_forward.1} parent=1 // pred_fallthru
      _
    // Predicated region
    $region6: #{conv_autoencoder_forward.1} parent=1 // pred_check
      _
    $region7: #{conv_autoencoder_forward.1} parent=1 // pred_check_branch
      %26 = sbr.rel (0) target = $region9
    $region8: #{conv_autoencoder_forward.1} parent=1 // pred_region
      %s28 = ssub.s32 16384, 16384
      %29 = vsyncadd [#allocation3], %s28
      %s30 = sshll.u32 [#allocation2], 4
      %s31 = int_to_ptr.vmem [resolvable:$true] %s30
      %36 = dma.hbm_to_vmem [thread:$0]  %s1, 16384, %s31, [#allocation3], 512, 512, 32
    $region9: #{conv_autoencoder_forward.1} parent=1 // pred_fallthru
      _
    // Predicated region
    $region10: #{conv_autoencoder_forward.1} parent=1 // pred_check
      _
    $region11: #{conv_autoencoder_forward.1} parent=1 // pred_check_branch
      %38 = sbr.rel (0) target = $region13
    $region12: #{conv_autoencoder_forward.1} parent=1 // pred_region
      %s40 = ssub.s32 8192, 8192
      %41 = vsyncadd [#allocation5], %s40
      %s42 = sshll.u32 [#allocation4], 4
      %s43 = int_to_ptr.vmem [resolvable:$true] %s42
      %48 = dma.hbm_to_vmem [thread:$0]  %s2, 8192, %s43, [#allocation5], 64, 64, 4
    $region13: #{conv_autoencoder_forward.1} parent=1 // pred_fallthru
      _
    // Predicated region
    $region14: #{conv_autoencoder_forward.1} parent=1 // pred_check
      _
    $region15: #{conv_autoencoder_forward.1} parent=1 // pred_check_branch
      %50 = sbr.rel (0) target = $region17
    $region16: #{conv_autoencoder_forward.1} parent=1 // pred_region
      _
    $region17: #{conv_autoencoder_forward.1} parent=1 // pred_fallthru
      _
    // Predicated region
    $region18: #{conv_autoencoder_forward.1} parent=1 // pred_check
      _
    $region19: #{conv_autoencoder_forward.1} parent=1 // pred_check_branch
      %52 = sbr.rel (0) target = $region21
    $region20: #{conv_autoencoder_forward.1} parent=1 // pred_region
      %s54 = ssub.s32 1024, 1024
      %55 = vsyncadd [#allocation5], %s54
      %s56 = sshll.u32 [#allocation6], 4
      %s57 = int_to_ptr.vmem [resolvable:$true] %s56
      %62 = dma.hbm_to_vmem [thread:$0]  %s4, 1024, %s57, [#allocation5], 64, 64, 4
    $region21: #{conv_autoencoder_forward.1} parent=1 // pred_fallthru
      _
    // Predicated region
    $region22: #{conv_autoencoder_forward.1} parent=1 // pred_check
      _
    $region23: #{conv_autoencoder_forward.1} parent=1 // pred_check_branch
      %64 = sbr.rel (0) target = $region25
    $region24: #{conv_autoencoder_forward.1} parent=1 // pred_region
      %s66 = ssub.s32 8192, 8192
      %67 = vsyncadd [#allocation8], %s66
      %s68 = sshll.u32 [#allocation7], 4
      %s69 = int_to_ptr.vmem [resolvable:$true] %s68
      %74 = dma.hbm_to_vmem [thread:$0]  %s5, 8192, %s69, [#allocation8], 512, 512, 32
    $region25: #{conv_autoencoder_forward.1} parent=1 // pred_fallthru
      _
    // Predicated region
    $region26: #{conv_autoencoder_forward.1} parent=1 // pred_check
      _
    $region27: #{conv_autoencoder_forward.1} parent=1 // pred_check_branch
      %76 = sbr.rel (0) target = $region29
    $region28: #{conv_autoencoder_forward.1} parent=1 // pred_region
      %s78 = ssub.s32 16384, 16384
      %79 = vsyncadd [#allocation8], %s78
      %s80 = sshll.u32 [#allocation9], 4
      %s81 = int_to_ptr.vmem [resolvable:$true] %s80
      %86 = dma.hbm_to_vmem [thread:$0]  %s6, 16384, %s81, [#allocation8], 128, 128, 8
    $region29: #{conv_autoencoder_forward.1} parent=1 // pred_fallthru
      _
    // Predicated region
    $region30: #{conv_autoencoder_forward.1} parent=1 // pred_check
      _
    $region31: #{conv_autoencoder_forward.1} parent=1 // pred_check_branch
      %88 = sbr.rel (0) target = $region33
    $region32: #{conv_autoencoder_forward.1} parent=1 // pred_region
      _
    $region33: #{conv_autoencoder_forward.1} parent=1 // pred_fallthru
      _
    // Predicated region
    $region34: #{conv_autoencoder_forward.1} parent=1 // pred_check
      _
    $region35: #{conv_autoencoder_forward.1} parent=1 // pred_check_branch
      %90 = sbr.rel (0) target = $region37
    $region36: #{conv_autoencoder_forward.1} parent=1 // pred_region
      _
    $region37: #{conv_autoencoder_forward.1} parent=1 // pred_fallthru
      _
    // Predicated region
    $region38: #{conv_autoencoder_forward.1} parent=1 // pred_check
      _
    $region39: #{conv_autoencoder_forward.1} parent=1 // pred_check_branch
      %92 = sbr.rel (0) target = $region41
    $region40: #{conv_autoencoder_forward.1} parent=1 // pred_region
      _
    $region41: #{conv_autoencoder_forward.1} parent=1 // pred_fallthru
      _
    // Predicated region
    $region42: #{conv_autoencoder_forward.1} parent=1 // pred_check
      _
    $region43: #{conv_autoencoder_forward.1} parent=1 // pred_check_branch
      %94 = sbr.rel (0) target = $region45
    $region44: #{conv_autoencoder_forward.1} parent=1 // pred_region
      _
    $region45: #{conv_autoencoder_forward.1} parent=1 // pred_fallthru
      _
    // Predicated region
    $region46: #{conv_autoencoder_forward.1} parent=1 // pred_check
      _
    $region47: #{conv_autoencoder_forward.1} parent=1 // pred_check_branch
      %96 = sbr.rel (0) target = $region49
    $region48: #{conv_autoencoder_forward.1} parent=1 // pred_region
      _
    $region49: #{conv_autoencoder_forward.1} parent=1 // pred_fallthru
      _
    // Predicated region
    $region50: #{conv_autoencoder_forward.1} parent=1 // pred_check
      _
    $region51: #{conv_autoencoder_forward.1} parent=1 // pred_check_branch
      %98 = sbr.rel (0) target = $region53
    $region52: #{conv_autoencoder_forward.1} parent=1 // pred_region
      _
    $region53: #{conv_autoencoder_forward.1} parent=1 // pred_fallthru
      _
    // Predicated region
    $region54: #{conv_autoencoder_forward.1} parent=1 // pred_check
      _
    $region55: #{conv_autoencoder_forward.1} parent=1 // pred_check_branch
      %100 = sbr.rel (0) target = $region57
    $region56: #{conv_autoencoder_forward.1} parent=1 // pred_region
      %101 = dma.done [#allocation3], 16384
    $region57: #{conv_autoencoder_forward.1} parent=1 // pred_fallthru
      _
    // Predicated region
    $region58: #{conv_autoencoder_forward.1} parent=1 // pred_check
      _
    $region59: #{conv_autoencoder_forward.1} parent=1 // pred_check_branch
      %103 = sbr.rel (0) target = $region61
    $region60: #{conv_autoencoder_forward.1} parent=1 // pred_region
      %104 = dma.done [#allocation5], 8192
    $region61: #{conv_autoencoder_forward.1} parent=1 // pred_fallthru
      _
    // Predicated region
    $region62: #{conv_autoencoder_forward.1} parent=1 // pred_check
      _
    $region63: #{conv_autoencoder_forward.1} parent=1 // pred_check_branch
      %106 = sbr.rel (0) target = $region65
    $region64: #{conv_autoencoder_forward.1} parent=1 // pred_region
      %107 = dma.done [#allocation5], 1024
    $region65: #{conv_autoencoder_forward.1} parent=1 // pred_fallthru
      _
    // Predicated region
    $region66: #{conv_autoencoder_forward.1} parent=1 // pred_check
      _
    $region67: #{conv_autoencoder_forward.1} parent=1 // pred_check_branch
      %109 = sbr.rel (0) target = $region69
    $region68: #{conv_autoencoder_forward.1} parent=1 // pred_region
      %110 = dma.done [#allocation8], 8192
    $region69: #{conv_autoencoder_forward.1} parent=1 // pred_fallthru
      _
    // Predicated region
    $region70: #{conv_autoencoder_forward.1} parent=1 // pred_check
      _
    $region71: #{conv_autoencoder_forward.1} parent=1 // pred_check_branch
      %112 = sbr.rel (0) target = $region73
    $region72: #{conv_autoencoder_forward.1} parent=1 // pred_region
      %113 = dma.done [#allocation8], 16384
    $region73: #{conv_autoencoder_forward.1} parent=1 // pred_fallthru
      _
    %v115 = vld [vmem:[%s0] sm:$0xff]
    %v116 = vld [vmem:[#allocation2] sm:$0xff]
    %v117 = vld [vmem:[#allocation2 + $0x8] sm:$0xff]
    %v118 = vld [vmem:[#allocation2 + $0x10] sm:$0xff]
    %v119 = vld [vmem:[#allocation2 + $0x18] sm:$0xff]
    %v120 = vld [vmem:[#allocation2 + $0x20] sm:$0xff]
    %v121 = vld [vmem:[#allocation2 + $0x28] sm:$0xff]
    %v122 = vld [vmem:[#allocation2 + $0x30] sm:$0xff]
    %v123 = vld [vmem:[#allocation2 + $0x38] sm:$0xff]
    %v124 = vld [vmem:[#allocation2 + $0x40] sm:$0xff]
    %v125 = vld [vmem:[#allocation2 + $0x48] sm:$0xff]
    %v126 = vld [vmem:[#allocation2 + $0x50] sm:$0xff]
    %v127 = vld [vmem:[#allocation2 + $0x58] sm:$0xff]
    %v128 = vld [vmem:[#allocation2 + $0x60] sm:$0xff]
    %v129 = vld [vmem:[#allocation2 + $0x68] sm:$0xff]
    %v130 = vld [vmem:[#allocation2 + $0x70] sm:$0xff]
    %v131 = vld [vmem:[#allocation2 + $0x78] sm:$0xff]
    %v132 = vld [vmem:[#allocation2 + $0x80] sm:$0xff]
    %v133 = vld [vmem:[#allocation2 + $0x88] sm:$0xff]
    %v134 = vld [vmem:[#allocation2 + $0x90] sm:$0xff]
    %v135 = vld [vmem:[#allocation2 + $0x98] sm:$0xff]
    %v136 = vld [vmem:[#allocation2 + $0xa0] sm:$0xff]
    %v137 = vld [vmem:[#allocation2 + $0xa8] sm:$0xff]
    %v138 = vld [vmem:[#allocation2 + $0xb0] sm:$0xff]
    %v139 = vld [vmem:[#allocation2 + $0xb8] sm:$0xff]
    %v140 = vld [vmem:[#allocation2 + $0xc0] sm:$0xff]
    %v141 = vld [vmem:[#allocation2 + $0xc8] sm:$0xff]
    %v142 = vld [vmem:[#allocation2 + $0xd0] sm:$0xff]
    %v143 = vld [vmem:[#allocation2 + $0xd8] sm:$0xff]
    %v144 = vld [vmem:[#allocation2 + $0xe0] sm:$0xff]
    %v145 = vld [vmem:[#allocation2 + $0xe8] sm:$0xff]
    %v146 = vld [vmem:[#allocation2 + $0xf0] sm:$0xff]
    %v147 = vld [vmem:[#allocation2 + $0xf8] sm:$0xff]
    %v148 = vld [vmem:[#allocation2 + $0x100] sm:$0xff]
    %v149 = vld [vmem:[#allocation2 + $0x108] sm:$0xff]
    %v150 = vld [vmem:[#allocation2 + $0x110] sm:$0xff]
    %v151 = vld [vmem:[#allocation2 + $0x118] sm:$0xff]
    %v152 = vld [vmem:[#allocation2 + $0x120] sm:$0xff]
    %v153 = vld [vmem:[#allocation2 + $0x128] sm:$0xff]
    %v154 = vld [vmem:[#allocation2 + $0x130] sm:$0xff]
    %v155 = vld [vmem:[#allocation2 + $0x138] sm:$0xff]
    %v156 = vld [vmem:[#allocation2 + $0x140] sm:$0xff]
    %v157 = vld [vmem:[#allocation2 + $0x148] sm:$0xff]
    %v158 = vld [vmem:[#allocation2 + $0x150] sm:$0xff]
    %v159 = vld [vmem:[#allocation2 + $0x158] sm:$0xff]
    %v160 = vld [vmem:[#allocation2 + $0x160] sm:$0xff]
    %v161 = vld [vmem:[#allocation2 + $0x168] sm:$0xff]
    %v162 = vld [vmem:[#allocation2 + $0x170] sm:$0xff]
    %v163 = vld [vmem:[#allocation2 + $0x178] sm:$0xff]
    %v164 = vld [vmem:[#allocation2 + $0x180] sm:$0xff]
    %v165 = vld [vmem:[#allocation2 + $0x188] sm:$0xff]
    %v166 = vld [vmem:[#allocation2 + $0x190] sm:$0xff]
    %v167 = vld [vmem:[#allocation2 + $0x198] sm:$0xff]
    %v168 = vld [vmem:[#allocation2 + $0x1a0] sm:$0xff]
    %v169 = vld [vmem:[#allocation2 + $0x1a8] sm:$0xff]
    %v170 = vld [vmem:[#allocation2 + $0x1b0] sm:$0xff]
    %v171 = vld [vmem:[#allocation2 + $0x1b8] sm:$0xff]
    %v172 = vld [vmem:[#allocation2 + $0x1c0] sm:$0xff]
    %v173 = vld [vmem:[#allocation2 + $0x1c8] sm:$0xff]
    %v174 = vld [vmem:[#allocation2 + $0x1d0] sm:$0xff]
    %v175 = vld [vmem:[#allocation2 + $0x1d8] sm:$0xff]
    %v176 = vld [vmem:[#allocation2 + $0x1e0] sm:$0xff]
    %v177 = vld [vmem:[#allocation2 + $0x1e8] sm:$0xff]
    %v178 = vld [vmem:[#allocation2 + $0x1f0] sm:$0xff]
    %v179 = vld [vmem:[#allocation2 + $0x1f8] sm:$0xff]
    %v180 = vld [vmem:[#allocation2 + $0x200] sm:$0xff]
    %v181 = vld [vmem:[#allocation2 + $0x208] sm:$0xff]
    %v182 = vld [vmem:[#allocation2 + $0x210] sm:$0xff]
    %v183 = vld [vmem:[#allocation2 + $0x218] sm:$0xff]
    %v184 = vld [vmem:[#allocation2 + $0x220] sm:$0xff]
    %v185 = vld [vmem:[#allocation2 + $0x228] sm:$0xff]
    %v186 = vld [vmem:[#allocation2 + $0x230] sm:$0xff]
    %v187 = vld [vmem:[#allocation2 + $0x238] sm:$0xff]
    %v188 = vld [vmem:[#allocation2 + $0x240] sm:$0xff]
    %v189 = vld [vmem:[#allocation2 + $0x248] sm:$0xff]
    %v190 = vld [vmem:[#allocation2 + $0x250] sm:$0xff]
    %v191 = vld [vmem:[#allocation2 + $0x258] sm:$0xff]
    %v192 = vld [vmem:[#allocation2 + $0x260] sm:$0xff]
    %v193 = vld [vmem:[#allocation2 + $0x268] sm:$0xff]
    %v194 = vld [vmem:[#allocation2 + $0x270] sm:$0xff]
    %v195 = vld [vmem:[#allocation2 + $0x278] sm:$0xff]
    %v196 = vld [vmem:[#allocation2 + $0x280] sm:$0xff]
    %v197 = vld [vmem:[#allocation2 + $0x288] sm:$0xff]
    %v198 = vld [vmem:[#allocation2 + $0x290] sm:$0xff]
    %v199 = vld [vmem:[#allocation2 + $0x298] sm:$0xff]
    %v200 = vld [vmem:[#allocation2 + $0x2a0] sm:$0xff]
    %v201 = vld [vmem:[#allocation2 + $0x2a8] sm:$0xff]
    %v202 = vld [vmem:[#allocation2 + $0x2b0] sm:$0xff]
    %v203 = vld [vmem:[#allocation2 + $0x2b8] sm:$0xff]
    %v204 = vld [vmem:[#allocation2 + $0x2c0] sm:$0xff]
    %v205 = vld [vmem:[#allocation2 + $0x2c8] sm:$0xff]
    %v206 = vld [vmem:[#allocation2 + $0x2d0] sm:$0xff]
    %v207 = vld [vmem:[#allocation2 + $0x2d8] sm:$0xff]
    %v208 = vld [vmem:[#allocation2 + $0x2e0] sm:$0xff]
    %v209 = vld [vmem:[#allocation2 + $0x2e8] sm:$0xff]
    %v210 = vld [vmem:[#allocation2 + $0x2f0] sm:$0xff]
    %v211 = vld [vmem:[#allocation2 + $0x2f8] sm:$0xff]
    %v212 = vld [vmem:[#allocation2 + $0x300] sm:$0xff]
    %v213 = vld [vmem:[#allocation2 + $0x308] sm:$0xff]
    %v214 = vld [vmem:[#allocation2 + $0x310] sm:$0xff]
    %v215 = vld [vmem:[#allocation2 + $0x318] sm:$0xff]
    %v216 = vld [vmem:[#allocation2 + $0x320] sm:$0xff]
    %v217 = vld [vmem:[#allocation2 + $0x328] sm:$0xff]
    %v218 = vld [vmem:[#allocation2 + $0x330] sm:$0xff]
    %v219 = vld [vmem:[#allocation2 + $0x338] sm:$0xff]
    %v220 = vld [vmem:[#allocation2 + $0x340] sm:$0xff]
    %v221 = vld [vmem:[#allocation2 + $0x348] sm:$0xff]
    %v222 = vld [vmem:[#allocation2 + $0x350] sm:$0xff]
    %v223 = vld [vmem:[#allocation2 + $0x358] sm:$0xff]
    %v224 = vld [vmem:[#allocation2 + $0x360] sm:$0xff]
    %v225 = vld [vmem:[#allocation2 + $0x368] sm:$0xff]
    %v226 = vld [vmem:[#allocation2 + $0x370] sm:$0xff]
    %v227 = vld [vmem:[#allocation2 + $0x378] sm:$0xff]
    %v228 = vld [vmem:[#allocation2 + $0x380] sm:$0xff]
    %v229 = vld [vmem:[#allocation2 + $0x388] sm:$0xff]
    %v230 = vld [vmem:[#allocation2 + $0x390] sm:$0xff]
    %v231 = vld [vmem:[#allocation2 + $0x398] sm:$0xff]
    %v232 = vld [vmem:[#allocation2 + $0x3a0] sm:$0xff]
    %v233 = vld [vmem:[#allocation2 + $0x3a8] sm:$0xff]
    %v234 = vld [vmem:[#allocation2 + $0x3b0] sm:$0xff]
    %v235 = vld [vmem:[#allocation2 + $0x3b8] sm:$0xff]
    %v236 = vld [vmem:[#allocation2 + $0x3c0] sm:$0xff]
    %v237 = vld [vmem:[#allocation2 + $0x3c8] sm:$0xff]
    %v238 = vld [vmem:[#allocation2 + $0x3d0] sm:$0xff]
    %v239 = vld [vmem:[#allocation2 + $0x3d8] sm:$0xff]
    %v240 = vld [vmem:[#allocation2 + $0x3e0] sm:$0xff]
    %v241 = vld [vmem:[#allocation2 + $0x3e8] sm:$0xff]
    %v242 = vld [vmem:[#allocation2 + $0x3f0] sm:$0xff]
    %v243 = vld [vmem:[#allocation2 + $0x3f8] sm:$0xff]
    %v244 = vld [vmem:[%s7] sm:$0xff]
    %v246 = vlaneseq
    %v247 = vshrl.u32 %v246, 7
    %v248 = vsub.s32 0, %v247
    %v249 = vrot.slane %v244, %v248
    %v250 = vlaneseq
    %v251 = vshrl.u32 %v250, 7
    %v252 = vsub.s32 1, %v251
    %v253 = vrot.slane %v244, %v252
    %v254 = vlaneseq
    %v255 = vshrl.u32 %v254, 7
    %v256 = vsub.s32 2, %v255
    %v257 = vrot.slane %v244, %v256
    %v258 = vlaneseq
    %v259 = vshrl.u32 %v258, 7
    %v260 = vsub.s32 3, %v259
    %v261 = vrot.slane %v244, %v260
    %v262 = vlaneseq
    %v263 = vshrl.u32 %v262, 7
    %v264 = vsub.s32 4, %v263
    %v265 = vrot.slane %v244, %v264
    %v266 = vlaneseq
    %v267 = vshrl.u32 %v266, 7
    %v268 = vsub.s32 5, %v267
    %v269 = vrot.slane %v244, %v268
    %v270 = vlaneseq
    %v271 = vshrl.u32 %v270, 7
    %v272 = vsub.s32 6, %v271
    %v273 = vrot.slane %v244, %v272
    %v274 = vlaneseq
    %v275 = vshrl.u32 %v274, 7
    %v276 = vsub.s32 7, %v275
    %v277 = vrot.slane %v244, %v276
    %v287 = vunpack.c.l.b16 %v115
    %v288 = vunpack.c.h.b16 %v115
    %v289 = vpack.c.b16 %v287, %v287
    %v290 = vpack.c.b16 %v288, %v288
    %v421 = vunpack.c.l.b16 %v116
    %v422 = vunpack.c.h.b16 %v116
    %v423 = vunpack.c.l.b16 %v117
    %v424 = vunpack.c.h.b16 %v117
    %v425 = vunpack.c.l.b16 %v118
    %v426 = vunpack.c.h.b16 %v118
    %v427 = vunpack.c.l.b16 %v119
    %v428 = vunpack.c.h.b16 %v119
    %v429 = vunpack.c.l.b16 %v120
    %v430 = vunpack.c.h.b16 %v120
    %v431 = vunpack.c.l.b16 %v121
    %v432 = vunpack.c.h.b16 %v121
    %v433 = vunpack.c.l.b16 %v122
    %v434 = vunpack.c.h.b16 %v122
    %v435 = vunpack.c.l.b16 %v123
    %v436 = vunpack.c.h.b16 %v123
    %v437 = vunpack.c.l.b16 %v124
    %v438 = vunpack.c.h.b16 %v124
    %v439 = vunpack.c.l.b16 %v125
    %v440 = vunpack.c.h.b16 %v125
    %v441 = vunpack.c.l.b16 %v126
    %v442 = vunpack.c.h.b16 %v126
    %v443 = vunpack.c.l.b16 %v127
    %v444 = vunpack.c.h.b16 %v127
    %v445 = vunpack.c.l.b16 %v128
    %v446 = vunpack.c.h.b16 %v128
    %v447 = vunpack.c.l.b16 %v129
    %v448 = vunpack.c.h.b16 %v129
    %v449 = vunpack.c.l.b16 %v130
    %v450 = vunpack.c.h.b16 %v130
    %v451 = vunpack.c.l.b16 %v131
    %v452 = vunpack.c.h.b16 %v131
    %v453 = vunpack.c.l.b16 %v132
    %v454 = vunpack.c.h.b16 %v132
    %v455 = vunpack.c.l.b16 %v133
    %v456 = vunpack.c.h.b16 %v133
    %v457 = vunpack.c.l.b16 %v134
    %v458 = vunpack.c.h.b16 %v134
    %v459 = vunpack.c.l.b16 %v135
    %v460 = vunpack.c.h.b16 %v135
    %v461 = vunpack.c.l.b16 %v136
    %v462 = vunpack.c.h.b16 %v136
    %v463 = vunpack.c.l.b16 %v137
    %v464 = vunpack.c.h.b16 %v137
    %v465 = vunpack.c.l.b16 %v138
    %v466 = vunpack.c.h.b16 %v138
    %v467 = vunpack.c.l.b16 %v139
    %v468 = vunpack.c.h.b16 %v139
    %v469 = vunpack.c.l.b16 %v140
    %v470 = vunpack.c.h.b16 %v140
    %v471 = vunpack.c.l.b16 %v141
    %v472 = vunpack.c.h.b16 %v141
    %v473 = vunpack.c.l.b16 %v142
    %v474 = vunpack.c.h.b16 %v142
    %v475 = vunpack.c.l.b16 %v143
    %v476 = vunpack.c.h.b16 %v143
    %v477 = vunpack.c.l.b16 %v144
    %v478 = vunpack.c.h.b16 %v144
    %v479 = vunpack.c.l.b16 %v145
    %v480 = vunpack.c.h.b16 %v145
    %v481 = vunpack.c.l.b16 %v146
    %v482 = vunpack.c.h.b16 %v146
    %v483 = vunpack.c.l.b16 %v147
    %v484 = vunpack.c.h.b16 %v147
    %v485 = vunpack.c.l.b16 %v148
    %v486 = vunpack.c.h.b16 %v148
    %v487 = vunpack.c.l.b16 %v149
    %v488 = vunpack.c.h.b16 %v149
    %v489 = vunpack.c.l.b16 %v150
    %v490 = vunpack.c.h.b16 %v150
    %v491 = vunpack.c.l.b16 %v151
    %v492 = vunpack.c.h.b16 %v151
    %v493 = vunpack.c.l.b16 %v152
    %v494 = vunpack.c.h.b16 %v152
    %v495 = vunpack.c.l.b16 %v153
    %v496 = vunpack.c.h.b16 %v153
    %v497 = vunpack.c.l.b16 %v154
    %v498 = vunpack.c.h.b16 %v154
    %v499 = vunpack.c.l.b16 %v155
    %v500 = vunpack.c.h.b16 %v155
    %v501 = vunpack.c.l.b16 %v156
    %v502 = vunpack.c.h.b16 %v156
    %v503 = vunpack.c.l.b16 %v157
    %v504 = vunpack.c.h.b16 %v157
    %v505 = vunpack.c.l.b16 %v158
    %v506 = vunpack.c.h.b16 %v158
    %v507 = vunpack.c.l.b16 %v159
    %v508 = vunpack.c.h.b16 %v159
    %v509 = vunpack.c.l.b16 %v160
    %v510 = vunpack.c.h.b16 %v160
    %v511 = vunpack.c.l.b16 %v161
    %v512 = vunpack.c.h.b16 %v161
    %v513 = vunpack.c.l.b16 %v162
    %v514 = vunpack.c.h.b16 %v162
    %v515 = vunpack.c.l.b16 %v163
    %v516 = vunpack.c.h.b16 %v163
    %v517 = vunpack.c.l.b16 %v164
    %v518 = vunpack.c.h.b16 %v164
    %v519 = vunpack.c.l.b16 %v165
    %v520 = vunpack.c.h.b16 %v165
    %v521 = vunpack.c.l.b16 %v166
    %v522 = vunpack.c.h.b16 %v166
    %v523 = vunpack.c.l.b16 %v167
    %v524 = vunpack.c.h.b16 %v167
    %v525 = vunpack.c.l.b16 %v168
    %v526 = vunpack.c.h.b16 %v168
    %v527 = vunpack.c.l.b16 %v169
    %v528 = vunpack.c.h.b16 %v169
    %v529 = vunpack.c.l.b16 %v170
    %v530 = vunpack.c.h.b16 %v170
    %v531 = vunpack.c.l.b16 %v171
    %v532 = vunpack.c.h.b16 %v171
    %v533 = vunpack.c.l.b16 %v172
    %v534 = vunpack.c.h.b16 %v172
    %v535 = vunpack.c.l.b16 %v173
    %v536 = vunpack.c.h.b16 %v173
    %v537 = vunpack.c.l.b16 %v174
    %v538 = vunpack.c.h.b16 %v174
    %v539 = vunpack.c.l.b16 %v175
    %v540 = vunpack.c.h.b16 %v175
    %v541 = vunpack.c.l.b16 %v176
    %v542 = vunpack.c.h.b16 %v176
    %v543 = vunpack.c.l.b16 %v177
    %v544 = vunpack.c.h.b16 %v177
    %v545 = vunpack.c.l.b16 %v178
    %v546 = vunpack.c.h.b16 %v178
    %v547 = vunpack.c.l.b16 %v179
    %v548 = vunpack.c.h.b16 %v179
    %v549 = vunpack.c.l.b16 %v180
    %v550 = vunpack.c.h.b16 %v180
    %v551 = vunpack.c.l.b16 %v181
    %v552 = vunpack.c.h.b16 %v181
    %v553 = vunpack.c.l.b16 %v182
    %v554 = vunpack.c.h.b16 %v182
    %v555 = vunpack.c.l.b16 %v183
    %v556 = vunpack.c.h.b16 %v183
    %v557 = vunpack.c.l.b16 %v184
    %v558 = vunpack.c.h.b16 %v184
    %v559 = vunpack.c.l.b16 %v185
    %v560 = vunpack.c.h.b16 %v185
    %v561 = vunpack.c.l.b16 %v186
    %v562 = vunpack.c.h.b16 %v186
    %v563 = vunpack.c.l.b16 %v187
    %v564 = vunpack.c.h.b16 %v187
    %v565 = vunpack.c.l.b16 %v188
    %v566 = vunpack.c.h.b16 %v188
    %v567 = vunpack.c.l.b16 %v189
    %v568 = vunpack.c.h.b16 %v189
    %v569 = vunpack.c.l.b16 %v190
    %v570 = vunpack.c.h.b16 %v190
    %v571 = vunpack.c.l.b16 %v191
    %v572 = vunpack.c.h.b16 %v191
    %v573 = vunpack.c.l.b16 %v192
    %v574 = vunpack.c.h.b16 %v192
    %v575 = vunpack.c.l.b16 %v193
    %v576 = vunpack.c.h.b16 %v193
    %v577 = vunpack.c.l.b16 %v194
    %v578 = vunpack.c.h.b16 %v194
    %v579 = vunpack.c.l.b16 %v195
    %v580 = vunpack.c.h.b16 %v195
    %v581 = vunpack.c.l.b16 %v196
    %v582 = vunpack.c.h.b16 %v196
    %v583 = vunpack.c.l.b16 %v197
    %v584 = vunpack.c.h.b16 %v197
    %v585 = vunpack.c.l.b16 %v198
    %v586 = vunpack.c.h.b16 %v198
    %v587 = vunpack.c.l.b16 %v199
    %v588 = vunpack.c.h.b16 %v199
    %v589 = vunpack.c.l.b16 %v200
    %v590 = vunpack.c.h.b16 %v200
    %v591 = vunpack.c.l.b16 %v201
    %v592 = vunpack.c.h.b16 %v201
    %v593 = vunpack.c.l.b16 %v202
    %v594 = vunpack.c.h.b16 %v202
    %v595 = vunpack.c.l.b16 %v203
    %v596 = vunpack.c.h.b16 %v203
    %v597 = vunpack.c.l.b16 %v204
    %v598 = vunpack.c.h.b16 %v204
    %v599 = vunpack.c.l.b16 %v205
    %v600 = vunpack.c.h.b16 %v205
    %v601 = vunpack.c.l.b16 %v206
    %v602 = vunpack.c.h.b16 %v206
    %v603 = vunpack.c.l.b16 %v207
    %v604 = vunpack.c.h.b16 %v207
    %v605 = vunpack.c.l.b16 %v208
    %v606 = vunpack.c.h.b16 %v208
    %v607 = vunpack.c.l.b16 %v209
    %v608 = vunpack.c.h.b16 %v209
    %v609 = vunpack.c.l.b16 %v210
    %v610 = vunpack.c.h.b16 %v210
    %v611 = vunpack.c.l.b16 %v211
    %v612 = vunpack.c.h.b16 %v211
    %v613 = vunpack.c.l.b16 %v212
    %v614 = vunpack.c.h.b16 %v212
    %v615 = vunpack.c.l.b16 %v213
    %v616 = vunpack.c.h.b16 %v213
    %v617 = vunpack.c.l.b16 %v214
    %v618 = vunpack.c.h.b16 %v214
    %v619 = vunpack.c.l.b16 %v215
    %v620 = vunpack.c.h.b16 %v215
    %v621 = vunpack.c.l.b16 %v216
    %v622 = vunpack.c.h.b16 %v216
    %v623 = vunpack.c.l.b16 %v217
    %v624 = vunpack.c.h.b16 %v217
    %v625 = vunpack.c.l.b16 %v218
    %v626 = vunpack.c.h.b16 %v218
    %v627 = vunpack.c.l.b16 %v219
    %v628 = vunpack.c.h.b16 %v219
    %v629 = vunpack.c.l.b16 %v220
    %v630 = vunpack.c.h.b16 %v220
    %v631 = vunpack.c.l.b16 %v221
    %v632 = vunpack.c.h.b16 %v221
    %v633 = vunpack.c.l.b16 %v222
    %v634 = vunpack.c.h.b16 %v222
    %v635 = vunpack.c.l.b16 %v223
    %v636 = vunpack.c.h.b16 %v223
    %v637 = vunpack.c.l.b16 %v224
    %v638 = vunpack.c.h.b16 %v224
    %v639 = vunpack.c.l.b16 %v225
    %v640 = vunpack.c.h.b16 %v225
    %v641 = vunpack.c.l.b16 %v226
    %v642 = vunpack.c.h.b16 %v226
    %v643 = vunpack.c.l.b16 %v227
    %v644 = vunpack.c.h.b16 %v227
    %v645 = vunpack.c.l.b16 %v228
    %v646 = vunpack.c.h.b16 %v228
    %v647 = vunpack.c.l.b16 %v229
    %v648 = vunpack.c.h.b16 %v229
    %v649 = vunpack.c.l.b16 %v230
    %v650 = vunpack.c.h.b16 %v230
    %v651 = vunpack.c.l.b16 %v231
    %v652 = vunpack.c.h.b16 %v231
    %v653 = vunpack.c.l.b16 %v232
    %v654 = vunpack.c.h.b16 %v232
    %v655 = vunpack.c.l.b16 %v233
    %v656 = vunpack.c.h.b16 %v233
    %v657 = vunpack.c.l.b16 %v234
    %v658 = vunpack.c.h.b16 %v234
    %v659 = vunpack.c.l.b16 %v235
    %v660 = vunpack.c.h.b16 %v235
    %v661 = vunpack.c.l.b16 %v236
    %v662 = vunpack.c.h.b16 %v236
    %v663 = vunpack.c.l.b16 %v237
    %v664 = vunpack.c.h.b16 %v237
    %v665 = vunpack.c.l.b16 %v238
    %v666 = vunpack.c.h.b16 %v238
    %v667 = vunpack.c.l.b16 %v239
    %v668 = vunpack.c.h.b16 %v239
    %v669 = vunpack.c.l.b16 %v240
    %v670 = vunpack.c.h.b16 %v240
    %v671 = vunpack.c.l.b16 %v241
    %v672 = vunpack.c.h.b16 %v241
    %v673 = vunpack.c.l.b16 %v242
    %v674 = vunpack.c.h.b16 %v242
    %v675 = vunpack.c.l.b16 %v243
    %v676 = vunpack.c.h.b16 %v243
    %v677 = vpack.c.b16 %v429, %v421
    %v678 = vpack.c.b16 %v430, %v422
    %v679 = vpack.c.b16 %v431, %v423
    %v680 = vpack.c.b16 %v432, %v424
    %v681 = vpack.c.b16 %v433, %v425
    %v682 = vpack.c.b16 %v434, %v426
    %v683 = vpack.c.b16 %v435, %v427
    %v684 = vpack.c.b16 %v436, %v428
    %v685 = vpack.c.b16 %v445, %v437
    %v686 = vpack.c.b16 %v446, %v438
    %v687 = vpack.c.b16 %v447, %v439
    %v688 = vpack.c.b16 %v448, %v440
    %v689 = vpack.c.b16 %v449, %v441
    %v690 = vpack.c.b16 %v450, %v442
    %v691 = vpack.c.b16 %v451, %v443
    %v692 = vpack.c.b16 %v452, %v444
    %v693 = vpack.c.b16 %v461, %v453
    %v694 = vpack.c.b16 %v462, %v454
    %v695 = vpack.c.b16 %v463, %v455
    %v696 = vpack.c.b16 %v464, %v456
    %v697 = vpack.c.b16 %v465, %v457
    %v698 = vpack.c.b16 %v466, %v458
    %v699 = vpack.c.b16 %v467, %v459
    %v700 = vpack.c.b16 %v468, %v460
    %v701 = vpack.c.b16 %v477, %v469
    %v702 = vpack.c.b16 %v478, %v470
    %v703 = vpack.c.b16 %v479, %v471
    %v704 = vpack.c.b16 %v480, %v472
    %v705 = vpack.c.b16 %v481, %v473
    %v706 = vpack.c.b16 %v482, %v474
    %v707 = vpack.c.b16 %v483, %v475
    %v708 = vpack.c.b16 %v484, %v476
    %v709 = vpack.c.b16 %v493, %v485
    %v710 = vpack.c.b16 %v494, %v486
    %v711 = vpack.c.b16 %v495, %v487
    %v712 = vpack.c.b16 %v496, %v488
    %v713 = vpack.c.b16 %v497, %v489
    %v714 = vpack.c.b16 %v498, %v490
    %v715 = vpack.c.b16 %v499, %v491
    %v716 = vpack.c.b16 %v500, %v492
    %v717 = vpack.c.b16 %v509, %v501
    %v718 = vpack.c.b16 %v510, %v502
    %v719 = vpack.c.b16 %v511, %v503
    %v720 = vpack.c.b16 %v512, %v504
    %v721 = vpack.c.b16 %v513, %v505
    %v722 = vpack.c.b16 %v514, %v506
    %v723 = vpack.c.b16 %v515, %v507
    %v724 = vpack.c.b16 %v516, %v508
    %v725 = vpack.c.b16 %v525, %v517
    %v726 = vpack.c.b16 %v526, %v518
    %v727 = vpack.c.b16 %v527, %v519
    %v728 = vpack.c.b16 %v528, %v520
    %v729 = vpack.c.b16 %v529, %v521
    %v730 = vpack.c.b16 %v530, %v522
    %v731 = vpack.c.b16 %v531, %v523
    %v732 = vpack.c.b16 %v532, %v524
    %v733 = vpack.c.b16 %v541, %v533
    %v734 = vpack.c.b16 %v542, %v534
    %v735 = vpack.c.b16 %v543, %v535
    %v736 = vpack.c.b16 %v544, %v536
    %v737 = vpack.c.b16 %v545, %v537
    %v738 = vpack.c.b16 %v546, %v538
    %v739 = vpack.c.b16 %v547, %v539
    %v740 = vpack.c.b16 %v548, %v540
    %v741 = vpack.c.b16 %v557, %v549
    %v742 = vpack.c.b16 %v558, %v550
    %v743 = vpack.c.b16 %v559, %v551
    %v744 = vpack.c.b16 %v560, %v552
    %v745 = vpack.c.b16 %v561, %v553
    %v746 = vpack.c.b16 %v562, %v554
    %v747 = vpack.c.b16 %v563, %v555
    %v748 = vpack.c.b16 %v564, %v556
    %v749 = vpack.c.b16 %v573, %v565
    %v750 = vpack.c.b16 %v574, %v566
    %v751 = vpack.c.b16 %v575, %v567
    %v752 = vpack.c.b16 %v576, %v568
    %v753 = vpack.c.b16 %v577, %v569
    %v754 = vpack.c.b16 %v578, %v570
    %v755 = vpack.c.b16 %v579, %v571
    %v756 = vpack.c.b16 %v580, %v572
    %v757 = vpack.c.b16 %v589, %v581
    %v758 = vpack.c.b16 %v590, %v582
    %v759 = vpack.c.b16 %v591, %v583
    %v760 = vpack.c.b16 %v592, %v584
    %v761 = vpack.c.b16 %v593, %v585
    %v762 = vpack.c.b16 %v594, %v586
    %v763 = vpack.c.b16 %v595, %v587
    %v764 = vpack.c.b16 %v596, %v588
    %v765 = vpack.c.b16 %v605, %v597
    %v766 = vpack.c.b16 %v606, %v598
    %v767 = vpack.c.b16 %v607, %v599
    %v768 = vpack.c.b16 %v608, %v600
    %v769 = vpack.c.b16 %v609, %v601
    %v770 = vpack.c.b16 %v610, %v602
    %v771 = vpack.c.b16 %v611, %v603
    %v772 = vpack.c.b16 %v612, %v604
    %v773 = vpack.c.b16 %v621, %v613
    %v774 = vpack.c.b16 %v622, %v614
    %v775 = vpack.c.b16 %v623, %v615
    %v776 = vpack.c.b16 %v624, %v616
    %v777 = vpack.c.b16 %v625, %v617
    %v778 = vpack.c.b16 %v626, %v618
    %v779 = vpack.c.b16 %v627, %v619
    %v780 = vpack.c.b16 %v628, %v620
    %v781 = vpack.c.b16 %v637, %v629
    %v782 = vpack.c.b16 %v638, %v630
    %v783 = vpack.c.b16 %v639, %v631
    %v784 = vpack.c.b16 %v640, %v632
    %v785 = vpack.c.b16 %v641, %v633
    %v786 = vpack.c.b16 %v642, %v634
    %v787 = vpack.c.b16 %v643, %v635
    %v788 = vpack.c.b16 %v644, %v636
    %v789 = vpack.c.b16 %v653, %v645
    %v790 = vpack.c.b16 %v654, %v646
    %v791 = vpack.c.b16 %v655, %v647
    %v792 = vpack.c.b16 %v656, %v648
    %v793 = vpack.c.b16 %v657, %v649
    %v794 = vpack.c.b16 %v658, %v650
    %v795 = vpack.c.b16 %v659, %v651
    %v796 = vpack.c.b16 %v660, %v652
    %v797 = vpack.c.b16 %v669, %v661
    %v798 = vpack.c.b16 %v670, %v662
    %v799 = vpack.c.b16 %v671, %v663
    %v800 = vpack.c.b16 %v672, %v664
    %v801 = vpack.c.b16 %v673, %v665
    %v802 = vpack.c.b16 %v674, %v666
    %v803 = vpack.c.b16 %v675, %v667
    %v804 = vpack.c.b16 %v676, %v668
    %933 = vmatprep.subr.bf16.mxu0 %v678
    %934 = vmatpush1.bf16.msra.mxu0 %v677
    %935 = vmatprep.subr.bf16.mxu0 %v686
    %936 = vmatpush1.bf16.msra.mxu0 %v685
    %937 = vmatprep.subr.bf16.mxu0 %v694
    %938 = vmatpush1.bf16.msra.mxu0 %v693
    %939 = vmatprep.subr.bf16.mxu0 %v702
    %940 = vmatpush1.bf16.msra.mxu0 %v701
    %941 = vmatprep.subr.bf16.mxu0 %v710
    %942 = vmatpush1.bf16.msra.mxu0 %v709
    %943 = vmatprep.subr.bf16.mxu0 %v718
    %944 = vmatpush1.bf16.msra.mxu0 %v717
    %945 = vmatprep.subr.bf16.mxu0 %v726
    %946 = vmatpush1.bf16.msra.mxu0 %v725
    %947 = vmatprep.subr.bf16.mxu0 %v734
    %948 = vmatpush1.bf16.msra.mxu0 %v733
    %949 = vmatprep.subr.bf16.mxu0 %v742
    %950 = vmatpush1.bf16.msra.mxu0 %v741
    %951 = vmatprep.subr.bf16.mxu0 %v750
    %952 = vmatpush1.bf16.msra.mxu0 %v749
    %953 = vmatprep.subr.bf16.mxu0 %v758
    %954 = vmatpush1.bf16.msra.mxu0 %v757
    %955 = vmatprep.subr.bf16.mxu0 %v766
    %956 = vmatpush1.bf16.msra.mxu0 %v765
    %957 = vmatprep.subr.bf16.mxu0 %v774
    %958 = vmatpush1.bf16.msra.mxu0 %v773
    %959 = vmatprep.subr.bf16.mxu0 %v782
    %960 = vmatpush1.bf16.msra.mxu0 %v781
    %961 = vmatprep.subr.bf16.mxu0 %v790
    %962 = vmatpush1.bf16.msra.mxu0 %v789
    %963 = vmatprep.subr.bf16.mxu0 %v798
    %964 = vmatpush1.bf16.msra.mxu0 %v797
    %965 = vmatprep.mubr.bf16.mxu0 %v290
    %966 = vmatmul.mubr.bf16.gmra.mrb[0].mxu0 %v289
    %v967 = vpop.f32.mrb[0].mxu0
    %v968 = vadd.f32 %v249, %v967
    %v969 = vpop.f32.mrb[0].mxu0
    %v970 = vadd.f32 %v253, %v969
    %v971 = vpop.f32.mrb[0].mxu0
    %v972 = vpop.f32.mrb[0].mxu0
    %973 = vdwg.mxu0
    %974 = vmatprep.subr.bf16.mxu0 %v680
    %975 = vmatpush1.bf16.msra.mxu0 %v679
    %976 = vmatprep.subr.bf16.mxu0 %v688
    %977 = vmatpush1.bf16.msra.mxu0 %v687
    %978 = vmatprep.subr.bf16.mxu0 %v696
    %979 = vmatpush1.bf16.msra.mxu0 %v695
    %980 = vmatprep.subr.bf16.mxu0 %v704
    %981 = vmatpush1.bf16.msra.mxu0 %v703
    %982 = vmatprep.subr.bf16.mxu0 %v712
    %983 = vmatpush1.bf16.msra.mxu0 %v711
    %984 = vmatprep.subr.bf16.mxu0 %v720
    %985 = vmatpush1.bf16.msra.mxu0 %v719
    %986 = vmatprep.subr.bf16.mxu0 %v728
    %987 = vmatpush1.bf16.msra.mxu0 %v727
    %988 = vmatprep.subr.bf16.mxu0 %v736
    %989 = vmatpush1.bf16.msra.mxu0 %v735
    %990 = vmatprep.subr.bf16.mxu0 %v744
    %991 = vmatpush1.bf16.msra.mxu0 %v743
    %992 = vmatprep.subr.bf16.mxu0 %v752
    %993 = vmatpush1.bf16.msra.mxu0 %v751
    %994 = vmatprep.subr.bf16.mxu0 %v760
    %995 = vmatpush1.bf16.msra.mxu0 %v759
    %996 = vmatprep.subr.bf16.mxu0 %v768
    %997 = vmatpush1.bf16.msra.mxu0 %v767
    %998 = vmatprep.subr.bf16.mxu0 %v776
    %999 = vmatpush1.bf16.msra.mxu0 %v775
    %1000 = vmatprep.subr.bf16.mxu0 %v784
    %1001 = vmatpush1.bf16.msra.mxu0 %v783
    %1002 = vmatprep.subr.bf16.mxu0 %v792
    %1003 = vmatpush1.bf16.msra.mxu0 %v791
    %1004 = vmatprep.subr.bf16.mxu0 %v800
    %1005 = vmatpush1.bf16.msra.mxu0 %v799
    %1006 = vmatprep.mubr.bf16.mxu0 %v290
    %1007 = vmatmul.mubr.bf16.gmra.mrb[0].mxu0 %v289
    %v1008 = vpop.f32.mrb[0].mxu0
    %v1009 = vadd.f32 %v257, %v1008
    %v1010 = vpop.f32.mrb[0].mxu0
    %v1011 = vadd.f32 %v261, %v1010
    %v1012 = vpop.f32.mrb[0].mxu0
    %v1013 = vpop.f32.mrb[0].mxu0
    %1014 = vdwg.mxu0
    %1015 = vmatprep.subr.bf16.mxu0 %v682
    %1016 = vmatpush1.bf16.msra.mxu0 %v681
    %1017 = vmatprep.subr.bf16.mxu0 %v690
    %1018 = vmatpush1.bf16.msra.mxu0 %v689
    %1019 = vmatprep.subr.bf16.mxu0 %v698
    %1020 = vmatpush1.bf16.msra.mxu0 %v697
    %1021 = vmatprep.subr.bf16.mxu0 %v706
    %1022 = vmatpush1.bf16.msra.mxu0 %v705
    %1023 = vmatprep.subr.bf16.mxu0 %v714
    %1024 = vmatpush1.bf16.msra.mxu0 %v713
    %1025 = vmatprep.subr.bf16.mxu0 %v722
    %1026 = vmatpush1.bf16.msra.mxu0 %v721
    %1027 = vmatprep.subr.bf16.mxu0 %v730
    %1028 = vmatpush1.bf16.msra.mxu0 %v729
    %1029 = vmatprep.subr.bf16.mxu0 %v738
    %1030 = vmatpush1.bf16.msra.mxu0 %v737
    %1031 = vmatprep.subr.bf16.mxu0 %v746
    %1032 = vmatpush1.bf16.msra.mxu0 %v745
    %1033 = vmatprep.subr.bf16.mxu0 %v754
    %1034 = vmatpush1.bf16.msra.mxu0 %v753
    %1035 = vmatprep.subr.bf16.mxu0 %v762
    %1036 = vmatpush1.bf16.msra.mxu0 %v761
    %1037 = vmatprep.subr.bf16.mxu0 %v770
    %1038 = vmatpush1.bf16.msra.mxu0 %v769
    %1039 = vmatprep.subr.bf16.mxu0 %v778
    %1040 = vmatpush1.bf16.msra.mxu0 %v777
    %1041 = vmatprep.subr.bf16.mxu0 %v786
    %1042 = vmatpush1.bf16.msra.mxu0 %v785
    %1043 = vmatprep.subr.bf16.mxu0 %v794
    %1044 = vmatpush1.bf16.msra.mxu0 %v793
    %1045 = vmatprep.subr.bf16.mxu0 %v802
    %1046 = vmatpush1.bf16.msra.mxu0 %v801
    %1047 = vmatprep.mubr.bf16.mxu0 %v290
    %1048 = vmatmul.mubr.bf16.gmra.mrb[0].mxu0 %v289
    %v1049 = vpop.f32.mrb[0].mxu0
    %v1050 = vadd.f32 %v265, %v1049
    %v1051 = vpop.f32.mrb[0].mxu0
    %v1052 = vadd.f32 %v269, %v1051
    %v1053 = vpop.f32.mrb[0].mxu0
    %v1054 = vpop.f32.mrb[0].mxu0
    %1055 = vdwg.mxu0
    %1056 = vmatprep.subr.bf16.mxu0 %v684
    %1057 = vmatpush1.bf16.msra.mxu0 %v683
    %1058 = vmatprep.subr.bf16.mxu0 %v692
    %1059 = vmatpush1.bf16.msra.mxu0 %v691
    %1060 = vmatprep.subr.bf16.mxu0 %v700
    %1061 = vmatpush1.bf16.msra.mxu0 %v699
    %1062 = vmatprep.subr.bf16.mxu0 %v708
    %1063 = vmatpush1.bf16.msra.mxu0 %v707
    %1064 = vmatprep.subr.bf16.mxu0 %v716
    %1065 = vmatpush1.bf16.msra.mxu0 %v715
    %1066 = vmatprep.subr.bf16.mxu0 %v724
    %1067 = vmatpush1.bf16.msra.mxu0 %v723
    %1068 = vmatprep.subr.bf16.mxu0 %v732
    %1069 = vmatpush1.bf16.msra.mxu0 %v731
    %1070 = vmatprep.subr.bf16.mxu0 %v740
    %1071 = vmatpush1.bf16.msra.mxu0 %v739
    %1072 = vmatprep.subr.bf16.mxu0 %v748
    %1073 = vmatpush1.bf16.msra.mxu0 %v747
    %1074 = vmatprep.subr.bf16.mxu0 %v756
    %1075 = vmatpush1.bf16.msra.mxu0 %v755
    %1076 = vmatprep.subr.bf16.mxu0 %v764
    %1077 = vmatpush1.bf16.msra.mxu0 %v763
    %1078 = vmatprep.subr.bf16.mxu0 %v772
    %1079 = vmatpush1.bf16.msra.mxu0 %v771
    %1080 = vmatprep.subr.bf16.mxu0 %v780
    %1081 = vmatpush1.bf16.msra.mxu0 %v779
    %1082 = vmatprep.subr.bf16.mxu0 %v788
    %1083 = vmatpush1.bf16.msra.mxu0 %v787
    %1084 = vmatprep.subr.bf16.mxu0 %v796
    %1085 = vmatpush1.bf16.msra.mxu0 %v795
    %1086 = vmatprep.subr.bf16.mxu0 %v804
    %1087 = vmatpush1.bf16.msra.mxu0 %v803
    %1088 = vmatprep.mubr.bf16.mxu0 %v290
    %1089 = vmatmul.mubr.bf16.gmra.mrb[0].mxu0 %v289
    %v1090 = vpop.f32.mrb[0].mxu0
    %v1091 = vadd.f32 %v273, %v1090
    %v1092 = vpop.f32.mrb[0].mxu0
    %v1093 = vadd.f32 %v277, %v1092
    %v1094 = vpop.f32.mrb[0].mxu0
    %v1095 = vpop.f32.mrb[0].mxu0
    %1096 = vdwg.mxu0
    %v1097 = vmax.f32 %v968, 0.0
    %v1098 = vmax.f32 %v970, 0.0
    %v1099 = vmax.f32 %v1009, 0.0
    %v1100 = vmax.f32 %v1011, 0.0
    %v1101 = vmax.f32 %v1050, 0.0
    %v1102 = vmax.f32 %v1052, 0.0
    %v1103 = vmax.f32 %v1091, 0.0
    %v1104 = vmax.f32 %v1093, 0.0
    %v1105 = vpack.c.bf16 %v1097, %v1097
    %v1106 = vpack.c.bf16 %v1098, %v1098
    %v1107 = vpack.c.bf16 %v1099, %v1099
    %v1108 = vpack.c.bf16 %v1100, %v1100
    %v1109 = vpack.c.bf16 %v1101, %v1101
    %v1110 = vpack.c.bf16 %v1102, %v1102
    %v1111 = vpack.c.bf16 %v1103, %v1103
    %v1112 = vpack.c.bf16 %v1104, %v1104
    %v1113 = vld [vmem:[#allocation4] sm:$0xf]
    %v1114 = vld [vmem:[#allocation4 + $0x4] sm:$0xf]
    %v1115 = vld [vmem:[#allocation4 + $0x8] sm:$0xf]
    %v1116 = vld [vmem:[#allocation4 + $0xc] sm:$0xf]
    %v1117 = vld [vmem:[#allocation4 + $0x10] sm:$0xf]
    %v1118 = vld [vmem:[#allocation4 + $0x14] sm:$0xf]
    %v1119 = vld [vmem:[#allocation4 + $0x18] sm:$0xf]
    %v1120 = vld [vmem:[#allocation4 + $0x1c] sm:$0xf]
    %v1121 = vld [vmem:[#allocation4 + $0x20] sm:$0xf]
    %v1122 = vld [vmem:[#allocation4 + $0x24] sm:$0xf]
    %v1123 = vld [vmem:[#allocation4 + $0x28] sm:$0xf]
    %v1124 = vld [vmem:[#allocation4 + $0x2c] sm:$0xf]
    %v1125 = vld [vmem:[#allocation4 + $0x30] sm:$0xf]
    %v1126 = vld [vmem:[#allocation4 + $0x34] sm:$0xf]
    %v1127 = vld [vmem:[#allocation4 + $0x38] sm:$0xf]
    %v1128 = vld [vmem:[#allocation4 + $0x3c] sm:$0xf]
    %v1129 = vld [vmem:[#allocation4 + $0x40] sm:$0xf]
    %v1130 = vld [vmem:[#allocation4 + $0x44] sm:$0xf]
    %v1131 = vld [vmem:[#allocation4 + $0x48] sm:$0xf]
    %v1132 = vld [vmem:[#allocation4 + $0x4c] sm:$0xf]
    %v1133 = vld [vmem:[#allocation4 + $0x50] sm:$0xf]
    %v1134 = vld [vmem:[#allocation4 + $0x54] sm:$0xf]
    %v1135 = vld [vmem:[#allocation4 + $0x58] sm:$0xf]
    %v1136 = vld [vmem:[#allocation4 + $0x5c] sm:$0xf]
    %v1137 = vld [vmem:[#allocation4 + $0x60] sm:$0xf]
    %v1138 = vld [vmem:[#allocation4 + $0x64] sm:$0xf]
    %v1139 = vld [vmem:[#allocation4 + $0x68] sm:$0xf]
    %v1140 = vld [vmem:[#allocation4 + $0x6c] sm:$0xf]
    %v1141 = vld [vmem:[#allocation4 + $0x70] sm:$0xf]
    %v1142 = vld [vmem:[#allocation4 + $0x74] sm:$0xf]
    %v1143 = vld [vmem:[#allocation4 + $0x78] sm:$0xf]
    %v1144 = vld [vmem:[#allocation4 + $0x7c] sm:$0xf]
    %v1145 = vld [vmem:[#allocation4 + $0x80] sm:$0xf]
    %v1146 = vld [vmem:[#allocation4 + $0x84] sm:$0xf]
    %v1147 = vld [vmem:[#allocation4 + $0x88] sm:$0xf]
    %v1148 = vld [vmem:[#allocation4 + $0x8c] sm:$0xf]
    %v1149 = vld [vmem:[#allocation4 + $0x90] sm:$0xf]
    %v1150 = vld [vmem:[#allocation4 + $0x94] sm:$0xf]
    %v1151 = vld [vmem:[#allocation4 + $0x98] sm:$0xf]
    %v1152 = vld [vmem:[#allocation4 + $0x9c] sm:$0xf]
    %v1153 = vld [vmem:[#allocation4 + $0xa0] sm:$0xf]
    %v1154 = vld [vmem:[#allocation4 + $0xa4] sm:$0xf]
    %v1155 = vld [vmem:[#allocation4 + $0xa8] sm:$0xf]
    %v1156 = vld [vmem:[#allocation4 + $0xac] sm:$0xf]
    %v1157 = vld [vmem:[#allocation4 + $0xb0] sm:$0xf]
    %v1158 = vld [vmem:[#allocation4 + $0xb4] sm:$0xf]
    %v1159 = vld [vmem:[#allocation4 + $0xb8] sm:$0xf]
    %v1160 = vld [vmem:[#allocation4 + $0xbc] sm:$0xf]
    %v1161 = vld [vmem:[#allocation4 + $0xc0] sm:$0xf]
    %v1162 = vld [vmem:[#allocation4 + $0xc4] sm:$0xf]
    %v1163 = vld [vmem:[#allocation4 + $0xc8] sm:$0xf]
    %v1164 = vld [vmem:[#allocation4 + $0xcc] sm:$0xf]
    %v1165 = vld [vmem:[#allocation4 + $0xd0] sm:$0xf]
    %v1166 = vld [vmem:[#allocation4 + $0xd4] sm:$0xf]
    %v1167 = vld [vmem:[#allocation4 + $0xd8] sm:$0xf]
    %v1168 = vld [vmem:[#allocation4 + $0xdc] sm:$0xf]
    %v1169 = vld [vmem:[#allocation4 + $0xe0] sm:$0xf]
    %v1170 = vld [vmem:[#allocation4 + $0xe4] sm:$0xf]
    %v1171 = vld [vmem:[#allocation4 + $0xe8] sm:$0xf]
    %v1172 = vld [vmem:[#allocation4 + $0xec] sm:$0xf]
    %v1173 = vld [vmem:[#allocation4 + $0xf0] sm:$0xf]
    %v1174 = vld [vmem:[#allocation4 + $0xf4] sm:$0xf]
    %v1175 = vld [vmem:[#allocation4 + $0xf8] sm:$0xf]
    %v1176 = vld [vmem:[#allocation4 + $0xfc] sm:$0xf]
    %v1177 = vld [vmem:[#allocation4 + $0x100] sm:$0xf]
    %v1178 = vld [vmem:[#allocation4 + $0x104] sm:$0xf]
    %v1179 = vld [vmem:[#allocation4 + $0x108] sm:$0xf]
    %v1180 = vld [vmem:[#allocation4 + $0x10c] sm:$0xf]
    %v1181 = vld [vmem:[#allocation4 + $0x110] sm:$0xf]
    %v1182 = vld [vmem:[#allocation4 + $0x114] sm:$0xf]
    %v1183 = vld [vmem:[#allocation4 + $0x118] sm:$0xf]
    %v1184 = vld [vmem:[#allocation4 + $0x11c] sm:$0xf]
    %v1185 = vld [vmem:[#allocation4 + $0x120] sm:$0xf]
    %v1186 = vld [vmem:[#allocation4 + $0x124] sm:$0xf]
    %v1187 = vld [vmem:[#allocation4 + $0x128] sm:$0xf]
    %v1188 = vld [vmem:[#allocation4 + $0x12c] sm:$0xf]
    %v1189 = vld [vmem:[#allocation4 + $0x130] sm:$0xf]
    %v1190 = vld [vmem:[#allocation4 + $0x134] sm:$0xf]
    %v1191 = vld [vmem:[#allocation4 + $0x138] sm:$0xf]
    %v1192 = vld [vmem:[#allocation4 + $0x13c] sm:$0xf]
    %v1193 = vld [vmem:[#allocation4 + $0x140] sm:$0xf]
    %v1194 = vld [vmem:[#allocation4 + $0x144] sm:$0xf]
    %v1195 = vld [vmem:[#allocation4 + $0x148] sm:$0xf]
    %v1196 = vld [vmem:[#allocation4 + $0x14c] sm:$0xf]
    %v1197 = vld [vmem:[#allocation4 + $0x150] sm:$0xf]
    %v1198 = vld [vmem:[#allocation4 + $0x154] sm:$0xf]
    %v1199 = vld [vmem:[#allocation4 + $0x158] sm:$0xf]
    %v1200 = vld [vmem:[#allocation4 + $0x15c] sm:$0xf]
    %v1201 = vld [vmem:[#allocation4 + $0x160] sm:$0xf]
    %v1202 = vld [vmem:[#allocation4 + $0x164] sm:$0xf]
    %v1203 = vld [vmem:[#allocation4 + $0x168] sm:$0xf]
    %v1204 = vld [vmem:[#allocation4 + $0x16c] sm:$0xf]
    %v1205 = vld [vmem:[#allocation4 + $0x170] sm:$0xf]
    %v1206 = vld [vmem:[#allocation4 + $0x174] sm:$0xf]
    %v1207 = vld [vmem:[#allocation4 + $0x178] sm:$0xf]
    %v1208 = vld [vmem:[#allocation4 + $0x17c] sm:$0xf]
    %v1209 = vld [vmem:[#allocation4 + $0x180] sm:$0xf]
    %v1210 = vld [vmem:[#allocation4 + $0x184] sm:$0xf]
    %v1211 = vld [vmem:[#allocation4 + $0x188] sm:$0xf]
    %v1212 = vld [vmem:[#allocation4 + $0x18c] sm:$0xf]
    %v1213 = vld [vmem:[#allocation4 + $0x190] sm:$0xf]
    %v1214 = vld [vmem:[#allocation4 + $0x194] sm:$0xf]
    %v1215 = vld [vmem:[#allocation4 + $0x198] sm:$0xf]
    %v1216 = vld [vmem:[#allocation4 + $0x19c] sm:$0xf]
    %v1217 = vld [vmem:[#allocation4 + $0x1a0] sm:$0xf]
    %v1218 = vld [vmem:[#allocation4 + $0x1a4] sm:$0xf]
    %v1219 = vld [vmem:[#allocation4 + $0x1a8] sm:$0xf]
    %v1220 = vld [vmem:[#allocation4 + $0x1ac] sm:$0xf]
    %v1221 = vld [vmem:[#allocation4 + $0x1b0] sm:$0xf]
    %v1222 = vld [vmem:[#allocation4 + $0x1b4] sm:$0xf]
    %v1223 = vld [vmem:[#allocation4 + $0x1b8] sm:$0xf]
    %v1224 = vld [vmem:[#allocation4 + $0x1bc] sm:$0xf]
    %v1225 = vld [vmem:[#allocation4 + $0x1c0] sm:$0xf]
    %v1226 = vld [vmem:[#allocation4 + $0x1c4] sm:$0xf]
    %v1227 = vld [vmem:[#allocation4 + $0x1c8] sm:$0xf]
    %v1228 = vld [vmem:[#allocation4 + $0x1cc] sm:$0xf]
    %v1229 = vld [vmem:[#allocation4 + $0x1d0] sm:$0xf]
    %v1230 = vld [vmem:[#allocation4 + $0x1d4] sm:$0xf]
    %v1231 = vld [vmem:[#allocation4 + $0x1d8] sm:$0xf]
    %v1232 = vld [vmem:[#allocation4 + $0x1dc] sm:$0xf]
    %v1233 = vld [vmem:[#allocation4 + $0x1e0] sm:$0xf]
    %v1234 = vld [vmem:[#allocation4 + $0x1e4] sm:$0xf]
    %v1235 = vld [vmem:[#allocation4 + $0x1e8] sm:$0xf]
    %v1236 = vld [vmem:[#allocation4 + $0x1ec] sm:$0xf]
    %v1237 = vld [vmem:[#allocation4 + $0x1f0] sm:$0xf]
    %v1238 = vld [vmem:[#allocation4 + $0x1f4] sm:$0xf]
    %v1239 = vld [vmem:[#allocation4 + $0x1f8] sm:$0xf]
    %v1240 = vld [vmem:[#allocation4 + $0x1fc] sm:$0xf]
    %v1241 = vld [vmem:[%s8] sm:$0x1]
    %v1243 = vlaneseq
    %v1244 = vshrl.u32 %v1243, 7
    %v1245 = vsub.s32 0, %v1244
    %v1246 = vrot.slane %v1241, %v1245
    %v1376 = vunpack.c.l.b16 %v1113
    %v1377 = vunpack.c.l.b16 %v1114
    %v1378 = vunpack.c.l.b16 %v1115
    %v1379 = vunpack.c.l.b16 %v1116
    %v1380 = vunpack.c.l.b16 %v1117
    %v1381 = vunpack.c.l.b16 %v1118
    %v1382 = vunpack.c.l.b16 %v1119
    %v1383 = vunpack.c.l.b16 %v1120
    %v1384 = vunpack.c.l.b16 %v1121
    %v1385 = vunpack.c.l.b16 %v1122
    %v1386 = vunpack.c.l.b16 %v1123
    %v1387 = vunpack.c.l.b16 %v1124
    %v1388 = vunpack.c.l.b16 %v1125
    %v1389 = vunpack.c.l.b16 %v1126
    %v1390 = vunpack.c.l.b16 %v1127
    %v1391 = vunpack.c.l.b16 %v1128
    %v1392 = vunpack.c.l.b16 %v1129
    %v1393 = vunpack.c.l.b16 %v1130
    %v1394 = vunpack.c.l.b16 %v1131
    %v1395 = vunpack.c.l.b16 %v1132
    %v1396 = vunpack.c.l.b16 %v1133
    %v1397 = vunpack.c.l.b16 %v1134
    %v1398 = vunpack.c.l.b16 %v1135
    %v1399 = vunpack.c.l.b16 %v1136
    %v1400 = vunpack.c.l.b16 %v1137
    %v1401 = vunpack.c.l.b16 %v1138
    %v1402 = vunpack.c.l.b16 %v1139
    %v1403 = vunpack.c.l.b16 %v1140
    %v1404 = vunpack.c.l.b16 %v1141
    %v1405 = vunpack.c.l.b16 %v1142
    %v1406 = vunpack.c.l.b16 %v1143
    %v1407 = vunpack.c.l.b16 %v1144
    %v1408 = vunpack.c.l.b16 %v1145
    %v1409 = vunpack.c.l.b16 %v1146
    %v1410 = vunpack.c.l.b16 %v1147
    %v1411 = vunpack.c.l.b16 %v1148
    %v1412 = vunpack.c.l.b16 %v1149
    %v1413 = vunpack.c.l.b16 %v1150
    %v1414 = vunpack.c.l.b16 %v1151
    %v1415 = vunpack.c.l.b16 %v1152
    %v1416 = vunpack.c.l.b16 %v1153
    %v1417 = vunpack.c.l.b16 %v1154
    %v1418 = vunpack.c.l.b16 %v1155
    %v1419 = vunpack.c.l.b16 %v1156
    %v1420 = vunpack.c.l.b16 %v1157
    %v1421 = vunpack.c.l.b16 %v1158
    %v1422 = vunpack.c.l.b16 %v1159
    %v1423 = vunpack.c.l.b16 %v1160
    %v1424 = vunpack.c.l.b16 %v1161
    %v1425 = vunpack.c.l.b16 %v1162
    %v1426 = vunpack.c.l.b16 %v1163
    %v1427 = vunpack.c.l.b16 %v1164
    %v1428 = vunpack.c.l.b16 %v1165
    %v1429 = vunpack.c.l.b16 %v1166
    %v1430 = vunpack.c.l.b16 %v1167
    %v1431 = vunpack.c.l.b16 %v1168
    %v1432 = vunpack.c.l.b16 %v1169
    %v1433 = vunpack.c.l.b16 %v1170
    %v1434 = vunpack.c.l.b16 %v1171
    %v1435 = vunpack.c.l.b16 %v1172
    %v1436 = vunpack.c.l.b16 %v1173
    %v1437 = vunpack.c.l.b16 %v1174
    %v1438 = vunpack.c.l.b16 %v1175
    %v1439 = vunpack.c.l.b16 %v1176
    %v1440 = vunpack.c.l.b16 %v1177
    %v1441 = vunpack.c.l.b16 %v1178
    %v1442 = vunpack.c.l.b16 %v1179
    %v1443 = vunpack.c.l.b16 %v1180
    %v1444 = vunpack.c.l.b16 %v1181
    %v1445 = vunpack.c.l.b16 %v1182
    %v1446 = vunpack.c.l.b16 %v1183
    %v1447 = vunpack.c.l.b16 %v1184
    %v1448 = vunpack.c.l.b16 %v1185
    %v1449 = vunpack.c.l.b16 %v1186
    %v1450 = vunpack.c.l.b16 %v1187
    %v1451 = vunpack.c.l.b16 %v1188
    %v1452 = vunpack.c.l.b16 %v1189
    %v1453 = vunpack.c.l.b16 %v1190
    %v1454 = vunpack.c.l.b16 %v1191
    %v1455 = vunpack.c.l.b16 %v1192
    %v1456 = vunpack.c.l.b16 %v1193
    %v1457 = vunpack.c.l.b16 %v1194
    %v1458 = vunpack.c.l.b16 %v1195
    %v1459 = vunpack.c.l.b16 %v1196
    %v1460 = vunpack.c.l.b16 %v1197
    %v1461 = vunpack.c.l.b16 %v1198
    %v1462 = vunpack.c.l.b16 %v1199
    %v1463 = vunpack.c.l.b16 %v1200
    %v1464 = vunpack.c.l.b16 %v1201
    %v1465 = vunpack.c.l.b16 %v1202
    %v1466 = vunpack.c.l.b16 %v1203
    %v1467 = vunpack.c.l.b16 %v1204
    %v1468 = vunpack.c.l.b16 %v1205
    %v1469 = vunpack.c.l.b16 %v1206
    %v1470 = vunpack.c.l.b16 %v1207
    %v1471 = vunpack.c.l.b16 %v1208
    %v1472 = vunpack.c.l.b16 %v1209
    %v1473 = vunpack.c.l.b16 %v1210
    %v1474 = vunpack.c.l.b16 %v1211
    %v1475 = vunpack.c.l.b16 %v1212
    %v1476 = vunpack.c.l.b16 %v1213
    %v1477 = vunpack.c.l.b16 %v1214
    %v1478 = vunpack.c.l.b16 %v1215
    %v1479 = vunpack.c.l.b16 %v1216
    %v1480 = vunpack.c.l.b16 %v1217
    %v1481 = vunpack.c.l.b16 %v1218
    %v1482 = vunpack.c.l.b16 %v1219
    %v1483 = vunpack.c.l.b16 %v1220
    %v1484 = vunpack.c.l.b16 %v1221
    %v1485 = vunpack.c.l.b16 %v1222
    %v1486 = vunpack.c.l.b16 %v1223
    %v1487 = vunpack.c.l.b16 %v1224
    %v1488 = vunpack.c.l.b16 %v1225
    %v1489 = vunpack.c.l.b16 %v1226
    %v1490 = vunpack.c.l.b16 %v1227
    %v1491 = vunpack.c.l.b16 %v1228
    %v1492 = vunpack.c.l.b16 %v1229
    %v1493 = vunpack.c.l.b16 %v1230
    %v1494 = vunpack.c.l.b16 %v1231
    %v1495 = vunpack.c.l.b16 %v1232
    %v1496 = vunpack.c.l.b16 %v1233
    %v1497 = vunpack.c.l.b16 %v1234
    %v1498 = vunpack.c.l.b16 %v1235
    %v1499 = vunpack.c.l.b16 %v1236
    %v1500 = vunpack.c.l.b16 %v1237
    %v1501 = vunpack.c.l.b16 %v1238
    %v1502 = vunpack.c.l.b16 %v1239
    %v1503 = vunpack.c.l.b16 %v1240
    %v1504 = vpack.c.b16 %v1377, %v1376
    %v1505 = vpack.c.b16 %v1379, %v1378
    %v1506 = vpack.c.b16 %v1381, %v1380
    %v1507 = vpack.c.b16 %v1383, %v1382
    %v1508 = vpack.c.b16 %v1385, %v1384
    %v1509 = vpack.c.b16 %v1387, %v1386
    %v1510 = vpack.c.b16 %v1389, %v1388
    %v1511 = vpack.c.b16 %v1391, %v1390
    %v1512 = vpack.c.b16 %v1393, %v1392
    %v1513 = vpack.c.b16 %v1395, %v1394
    %v1514 = vpack.c.b16 %v1397, %v1396
    %v1515 = vpack.c.b16 %v1399, %v1398
    %v1516 = vpack.c.b16 %v1401, %v1400
    %v1517 = vpack.c.b16 %v1403, %v1402
    %v1518 = vpack.c.b16 %v1405, %v1404
    %v1519 = vpack.c.b16 %v1407, %v1406
    %v1520 = vpack.c.b16 %v1409, %v1408
    %v1521 = vpack.c.b16 %v1411, %v1410
    %v1522 = vpack.c.b16 %v1413, %v1412
    %v1523 = vpack.c.b16 %v1415, %v1414
    %v1524 = vpack.c.b16 %v1417, %v1416
    %v1525 = vpack.c.b16 %v1419, %v1418
    %v1526 = vpack.c.b16 %v1421, %v1420
    %v1527 = vpack.c.b16 %v1423, %v1422
    %v1528 = vpack.c.b16 %v1425, %v1424
    %v1529 = vpack.c.b16 %v1427, %v1426
    %v1530 = vpack.c.b16 %v1429, %v1428
    %v1531 = vpack.c.b16 %v1431, %v1430
    %v1532 = vpack.c.b16 %v1433, %v1432
    %v1533 = vpack.c.b16 %v1435, %v1434
    %v1534 = vpack.c.b16 %v1437, %v1436
    %v1535 = vpack.c.b16 %v1439, %v1438
    %v1536 = vpack.c.b16 %v1441, %v1440
    %v1537 = vpack.c.b16 %v1443, %v1442
    %v1538 = vpack.c.b16 %v1445, %v1444
    %v1539 = vpack.c.b16 %v1447, %v1446
    %v1540 = vpack.c.b16 %v1449, %v1448
    %v1541 = vpack.c.b16 %v1451, %v1450
    %v1542 = vpack.c.b16 %v1453, %v1452
    %v1543 = vpack.c.b16 %v1455, %v1454
    %v1544 = vpack.c.b16 %v1457, %v1456
    %v1545 = vpack.c.b16 %v1459, %v1458
    %v1546 = vpack.c.b16 %v1461, %v1460
    %v1547 = vpack.c.b16 %v1463, %v1462
    %v1548 = vpack.c.b16 %v1465, %v1464
    %v1549 = vpack.c.b16 %v1467, %v1466
    %v1550 = vpack.c.b16 %v1469, %v1468
    %v1551 = vpack.c.b16 %v1471, %v1470
    %v1552 = vpack.c.b16 %v1473, %v1472
    %v1553 = vpack.c.b16 %v1475, %v1474
    %v1554 = vpack.c.b16 %v1477, %v1476
    %v1555 = vpack.c.b16 %v1479, %v1478
    %v1556 = vpack.c.b16 %v1481, %v1480
    %v1557 = vpack.c.b16 %v1483, %v1482
    %v1558 = vpack.c.b16 %v1485, %v1484
    %v1559 = vpack.c.b16 %v1487, %v1486
    %v1560 = vpack.c.b16 %v1489, %v1488
    %v1561 = vpack.c.b16 %v1491, %v1490
    %v1562 = vpack.c.b16 %v1493, %v1492
    %v1563 = vpack.c.b16 %v1495, %v1494
    %v1564 = vpack.c.b16 %v1497, %v1496
    %v1565 = vpack.c.b16 %v1499, %v1498
    %v1566 = vpack.c.b16 %v1501, %v1500
    %v1567 = vpack.c.b16 %v1503, %v1502
    %1632 = vmatprep.subr.bf16.mxu0 0
    %1633 = vmatpush1.bf16.msra.mxu0 %v1504
    %1634 = vmatprep.subr.bf16.mxu0 0
    %1635 = vmatpush1.bf16.msra.mxu0 %v1505
    %1636 = vmatprep.subr.bf16.mxu0 0
    %1637 = vmatpush1.bf16.msra.mxu0 %v1506
    %1638 = vmatprep.subr.bf16.mxu0 0
    %1639 = vmatpush1.bf16.msra.mxu0 %v1507
    %1640 = vmatprep.subr.bf16.mxu0 0
    %1641 = vmatpush1.bf16.msra.mxu0 %v1508
    %1642 = vmatprep.subr.bf16.mxu0 0
    %1643 = vmatpush1.bf16.msra.mxu0 %v1509
    %1644 = vmatprep.subr.bf16.mxu0 0
    %1645 = vmatpush1.bf16.msra.mxu0 %v1510
    %1646 = vmatprep.subr.bf16.mxu0 0
    %1647 = vmatpush1.bf16.msra.mxu0 %v1511
    %1648 = vmatprep.subr.bf16.mxu0 0
    %1649 = vmatpush1.bf16.msra.mxu0 %v1512
    %1650 = vmatprep.subr.bf16.mxu0 0
    %1651 = vmatpush1.bf16.msra.mxu0 %v1513
    %1652 = vmatprep.subr.bf16.mxu0 0
    %1653 = vmatpush1.bf16.msra.mxu0 %v1514
    %1654 = vmatprep.subr.bf16.mxu0 0
    %1655 = vmatpush1.bf16.msra.mxu0 %v1515
    %1656 = vmatprep.subr.bf16.mxu0 0
    %1657 = vmatpush1.bf16.msra.mxu0 %v1516
    %1658 = vmatprep.subr.bf16.mxu0 0
    %1659 = vmatpush1.bf16.msra.mxu0 %v1517
    %1660 = vmatprep.subr.bf16.mxu0 0
    %1661 = vmatpush1.bf16.msra.mxu0 %v1518
    %1662 = vmatprep.subr.bf16.mxu0 0
    %1663 = vmatpush1.bf16.msra.mxu0 %v1519
    %1664 = vmatprep.mubr.bf16.mxu0 %v1106
    %1665 = vmatmul.mubr.bf16.gmra.mrb[0].mxu0 %v1105
    %v1666 = vpop.f32.mrb[0].mxu0
    %v1667 = vadd.f32 %v1246, %v1666
    %v1668 = vpop.f32.mrb[0].mxu0
    %v1669 = vpop.f32.mrb[0].mxu0
    %v1670 = vpop.f32.mrb[0].mxu0
    %1671 = vdwg.mxu0
    %1672 = vmatprep.subr.bf16.mxu0 0
    %1673 = vmatpush1.bf16.msra.mxu0 %v1520
    %1674 = vmatprep.subr.bf16.mxu0 0
    %1675 = vmatpush1.bf16.msra.mxu0 %v1521
    %1676 = vmatprep.subr.bf16.mxu0 0
    %1677 = vmatpush1.bf16.msra.mxu0 %v1522
    %1678 = vmatprep.subr.bf16.mxu0 0
    %1679 = vmatpush1.bf16.msra.mxu0 %v1523
    %1680 = vmatprep.subr.bf16.mxu0 0
    %1681 = vmatpush1.bf16.msra.mxu0 %v1524
    %1682 = vmatprep.subr.bf16.mxu0 0
    %1683 = vmatpush1.bf16.msra.mxu0 %v1525
    %1684 = vmatprep.subr.bf16.mxu0 0
    %1685 = vmatpush1.bf16.msra.mxu0 %v1526
    %1686 = vmatprep.subr.bf16.mxu0 0
    %1687 = vmatpush1.bf16.msra.mxu0 %v1527
    %1688 = vmatprep.subr.bf16.mxu0 0
    %1689 = vmatpush1.bf16.msra.mxu0 %v1528
    %1690 = vmatprep.subr.bf16.mxu0 0
    %1691 = vmatpush1.bf16.msra.mxu0 %v1529
    %1692 = vmatprep.subr.bf16.mxu0 0
    %1693 = vmatpush1.bf16.msra.mxu0 %v1530
    %1694 = vmatprep.subr.bf16.mxu0 0
    %1695 = vmatpush1.bf16.msra.mxu0 %v1531
    %1696 = vmatprep.subr.bf16.mxu0 0
    %1697 = vmatpush1.bf16.msra.mxu0 %v1532
    %1698 = vmatprep.subr.bf16.mxu0 0
    %1699 = vmatpush1.bf16.msra.mxu0 %v1533
    %1700 = vmatprep.subr.bf16.mxu0 0
    %1701 = vmatpush1.bf16.msra.mxu0 %v1534
    %1702 = vmatprep.subr.bf16.mxu0 0
    %1703 = vmatpush1.bf16.msra.mxu0 %v1535
    %1704 = vmatprep.mubr.bf16.mxu0 %v1108
    %1705 = vmatmul.mubr.bf16.gmra.mrb[0].mxu0 %v1107
    %v1706 = vpop.f32.mrb[0].mxu0
    %v1707 = vadd.f32 %v1667, %v1706
    %v1708 = vpop.f32.mrb[0].mxu0
    %v1709 = vpop.f32.mrb[0].mxu0
    %v1710 = vpop.f32.mrb[0].mxu0
    %1711 = vdwg.mxu0
    %1712 = vmatprep.subr.bf16.mxu0 0
    %1713 = vmatpush1.bf16.msra.mxu0 %v1536
    %1714 = vmatprep.subr.bf16.mxu0 0
    %1715 = vmatpush1.bf16.msra.mxu0 %v1537
    %1716 = vmatprep.subr.bf16.mxu0 0
    %1717 = vmatpush1.bf16.msra.mxu0 %v1538
    %1718 = vmatprep.subr.bf16.mxu0 0
    %1719 = vmatpush1.bf16.msra.mxu0 %v1539
    %1720 = vmatprep.subr.bf16.mxu0 0
    %1721 = vmatpush1.bf16.msra.mxu0 %v1540
    %1722 = vmatprep.subr.bf16.mxu0 0
    %1723 = vmatpush1.bf16.msra.mxu0 %v1541
    %1724 = vmatprep.subr.bf16.mxu0 0
    %1725 = vmatpush1.bf16.msra.mxu0 %v1542
    %1726 = vmatprep.subr.bf16.mxu0 0
    %1727 = vmatpush1.bf16.msra.mxu0 %v1543
    %1728 = vmatprep.subr.bf16.mxu0 0
    %1729 = vmatpush1.bf16.msra.mxu0 %v1544
    %1730 = vmatprep.subr.bf16.mxu0 0
    %1731 = vmatpush1.bf16.msra.mxu0 %v1545
    %1732 = vmatprep.subr.bf16.mxu0 0
    %1733 = vmatpush1.bf16.msra.mxu0 %v1546
    %1734 = vmatprep.subr.bf16.mxu0 0
    %1735 = vmatpush1.bf16.msra.mxu0 %v1547
    %1736 = vmatprep.subr.bf16.mxu0 0
    %1737 = vmatpush1.bf16.msra.mxu0 %v1548
    %1738 = vmatprep.subr.bf16.mxu0 0
    %1739 = vmatpush1.bf16.msra.mxu0 %v1549
    %1740 = vmatprep.subr.bf16.mxu0 0
    %1741 = vmatpush1.bf16.msra.mxu0 %v1550
    %1742 = vmatprep.subr.bf16.mxu0 0
    %1743 = vmatpush1.bf16.msra.mxu0 %v1551
    %1744 = vmatprep.mubr.bf16.mxu0 %v1110
    %1745 = vmatmul.mubr.bf16.gmra.mrb[0].mxu0 %v1109
    %v1746 = vpop.f32.mrb[0].mxu0
    %v1747 = vadd.f32 %v1707, %v1746
    %v1748 = vpop.f32.mrb[0].mxu0
    %v1749 = vpop.f32.mrb[0].mxu0
    %v1750 = vpop.f32.mrb[0].mxu0
    %1751 = vdwg.mxu0
    %1752 = vmatprep.subr.bf16.mxu0 0
    %1753 = vmatpush1.bf16.msra.mxu0 %v1552
    %1754 = vmatprep.subr.bf16.mxu0 0
    %1755 = vmatpush1.bf16.msra.mxu0 %v1553
    %1756 = vmatprep.subr.bf16.mxu0 0
    %1757 = vmatpush1.bf16.msra.mxu0 %v1554
    %1758 = vmatprep.subr.bf16.mxu0 0
    %1759 = vmatpush1.bf16.msra.mxu0 %v1555
    %1760 = vmatprep.subr.bf16.mxu0 0
    %1761 = vmatpush1.bf16.msra.mxu0 %v1556
    %1762 = vmatprep.subr.bf16.mxu0 0
    %1763 = vmatpush1.bf16.msra.mxu0 %v1557
    %1764 = vmatprep.subr.bf16.mxu0 0
    %1765 = vmatpush1.bf16.msra.mxu0 %v1558
    %1766 = vmatprep.subr.bf16.mxu0 0
    %1767 = vmatpush1.bf16.msra.mxu0 %v1559
    %1768 = vmatprep.subr.bf16.mxu0 0
    %1769 = vmatpush1.bf16.msra.mxu0 %v1560
    %1770 = vmatprep.subr.bf16.mxu0 0
    %1771 = vmatpush1.bf16.msra.mxu0 %v1561
    %1772 = vmatprep.subr.bf16.mxu0 0
    %1773 = vmatpush1.bf16.msra.mxu0 %v1562
    %1774 = vmatprep.subr.bf16.mxu0 0
    %1775 = vmatpush1.bf16.msra.mxu0 %v1563
    %1776 = vmatprep.subr.bf16.mxu0 0
    %1777 = vmatpush1.bf16.msra.mxu0 %v1564
    %1778 = vmatprep.subr.bf16.mxu0 0
    %1779 = vmatpush1.bf16.msra.mxu0 %v1565
    %1780 = vmatprep.subr.bf16.mxu0 0
    %1781 = vmatpush1.bf16.msra.mxu0 %v1566
    %1782 = vmatprep.subr.bf16.mxu0 0
    %1783 = vmatpush1.bf16.msra.mxu0 %v1567
    %1784 = vmatprep.mubr.bf16.mxu0 %v1112
    %1785 = vmatmul.mubr.bf16.gmra.mrb[0].mxu0 %v1111
    %v1786 = vpop.f32.mrb[0].mxu0
    %v1787 = vadd.f32 %v1747, %v1786
    %v1788 = vpop.f32.mrb[0].mxu0
    %v1789 = vpop.f32.mrb[0].mxu0
    %v1790 = vpop.f32.mrb[0].mxu0
    %1791 = vdwg.mxu0
    %v1792 = vmax.f32 %v1787, 0.0
    %v1793 = vpack.c.bf16 %v1792, %v1792
    %v1794 = vld [vmem:[%s3] sm:$0xf]
    %v1795 = vld [vmem:[%s3 + $0x4] sm:$0xf]
    %v1796 = vld [vmem:[%s3 + $0x8] sm:$0xf]
    %v1797 = vld [vmem:[%s3 + $0xc] sm:$0xf]
    %v1798 = vld [vmem:[%s3 + $0x10] sm:$0xf]
    %v1799 = vld [vmem:[%s3 + $0x14] sm:$0xf]
    %v1800 = vld [vmem:[%s3 + $0x18] sm:$0xf]
    %v1801 = vld [vmem:[%s3 + $0x1c] sm:$0xf]
    %v1802 = vld [vmem:[%s3 + $0x20] sm:$0xf]
    %v1803 = vld [vmem:[%s3 + $0x24] sm:$0xf]
    %v1804 = vld [vmem:[%s3 + $0x28] sm:$0xf]
    %v1805 = vld [vmem:[%s3 + $0x2c] sm:$0xf]
    %v1806 = vld [vmem:[%s3 + $0x30] sm:$0xf]
    %v1807 = vld [vmem:[%s3 + $0x34] sm:$0xf]
    %v1808 = vld [vmem:[%s3 + $0x38] sm:$0xf]
    %v1809 = vld [vmem:[%s3 + $0x3c] sm:$0xf]
    %v1810 = vld [vmem:[%s9] sm:$0x1]
    %v1812 = vlaneseq
    %v1813 = vshrl.u32 %v1812, 7
    %v1814 = vsub.s32 0, %v1813
    %v1815 = vrot.slane %v1810, %v1814
    %v1833 = vunpack.c.l.b16 %v1794
    %v1834 = vunpack.c.l.b16 %v1795
    %v1835 = vunpack.c.l.b16 %v1796
    %v1836 = vunpack.c.l.b16 %v1797
    %v1837 = vunpack.c.l.b16 %v1798
    %v1838 = vunpack.c.l.b16 %v1799
    %v1839 = vunpack.c.l.b16 %v1800
    %v1840 = vunpack.c.l.b16 %v1801
    %v1841 = vunpack.c.l.b16 %v1802
    %v1842 = vunpack.c.l.b16 %v1803
    %v1843 = vunpack.c.l.b16 %v1804
    %v1844 = vunpack.c.l.b16 %v1805
    %v1845 = vunpack.c.l.b16 %v1806
    %v1846 = vunpack.c.l.b16 %v1807
    %v1847 = vunpack.c.l.b16 %v1808
    %v1848 = vunpack.c.l.b16 %v1809
    %v1849 = vpack.c.b16 %v1834, %v1833
    %v1850 = vpack.c.b16 %v1836, %v1835
    %v1851 = vpack.c.b16 %v1838, %v1837
    %v1852 = vpack.c.b16 %v1840, %v1839
    %v1853 = vpack.c.b16 %v1842, %v1841
    %v1854 = vpack.c.b16 %v1844, %v1843
    %v1855 = vpack.c.b16 %v1846, %v1845
    %v1856 = vpack.c.b16 %v1848, %v1847
    %1865 = vmatprep.subr.bf16.mxu0 0
    %1866 = vmatpush1.bf16.msra.mxu0 %v1849
    %1867 = vmatprep.subr.bf16.mxu0 0
    %1868 = vmatpush1.bf16.msra.mxu0 %v1850
    %1869 = vmatprep.subr.bf16.mxu0 0
    %1870 = vmatpush1.bf16.msra.mxu0 %v1851
    %1871 = vmatprep.subr.bf16.mxu0 0
    %1872 = vmatpush1.bf16.msra.mxu0 %v1852
    %1873 = vmatprep.subr.bf16.mxu0 0
    %1874 = vmatpush1.bf16.msra.mxu0 %v1853
    %1875 = vmatprep.subr.bf16.mxu0 0
    %1876 = vmatpush1.bf16.msra.mxu0 %v1854
    %1877 = vmatprep.subr.bf16.mxu0 0
    %1878 = vmatpush1.bf16.msra.mxu0 %v1855
    %1879 = vmatprep.subr.bf16.mxu0 0
    %1880 = vmatpush1.bf16.msra.mxu0 %v1856
    %1881 = vmatprep.subr.bf16.mxu0 0
    %1882 = vmatpush1.bf16.msra.mxu0 0
    %1883 = vmatprep.subr.bf16.mxu0 0
    %1884 = vmatpush1.bf16.msra.mxu0 0
    %1885 = vmatprep.subr.bf16.mxu0 0
    %1886 = vmatpush1.bf16.msra.mxu0 0
    %1887 = vmatprep.subr.bf16.mxu0 0
    %1888 = vmatpush1.bf16.msra.mxu0 0
    %1889 = vmatprep.subr.bf16.mxu0 0
    %1890 = vmatpush1.bf16.msra.mxu0 0
    %1891 = vmatprep.subr.bf16.mxu0 0
    %1892 = vmatpush1.bf16.msra.mxu0 0
    %1893 = vmatprep.subr.bf16.mxu0 0
    %1894 = vmatpush1.bf16.msra.mxu0 0
    %1895 = vmatprep.subr.bf16.mxu0 0
    %1896 = vmatpush1.bf16.msra.mxu0 0
    %1897 = vmatprep.mubr.bf16.mxu0 0
    %1898 = vmatmul.mubr.bf16.gmra.mrb[0].mxu0 %v1793
    %v1899 = vpop.f32.mrb[0].mxu0
    %v1900 = vadd.f32 %v1815, %v1899
    %v1901 = vpop.f32.mrb[0].mxu0
    %v1902 = vpop.f32.mrb[0].mxu0
    %v1903 = vpop.f32.mrb[0].mxu0
    %1904 = vdwg.mxu0
    %1905 = vst [vmem:[%s14] sm:$0xff] %v1900
    %v1906 = vpack.c.bf16 %v1900, %v1900
    %v1907 = vld [vmem:[#allocation6] sm:$0xf]
    %v1908 = vld [vmem:[#allocation6 + $0x4] sm:$0xf]
    %v1909 = vld [vmem:[#allocation6 + $0x8] sm:$0xf]
    %v1910 = vld [vmem:[#allocation6 + $0xc] sm:$0xf]
    %v1911 = vld [vmem:[#allocation6 + $0x10] sm:$0xf]
    %v1912 = vld [vmem:[#allocation6 + $0x14] sm:$0xf]
    %v1913 = vld [vmem:[#allocation6 + $0x18] sm:$0xf]
    %v1914 = vld [vmem:[#allocation6 + $0x1c] sm:$0xf]
    %v1915 = vld [vmem:[#allocation6 + $0x20] sm:$0xf]
    %v1916 = vld [vmem:[#allocation6 + $0x24] sm:$0xf]
    %v1917 = vld [vmem:[#allocation6 + $0x28] sm:$0xf]
    %v1918 = vld [vmem:[#allocation6 + $0x2c] sm:$0xf]
    %v1919 = vld [vmem:[#allocation6 + $0x30] sm:$0xf]
    %v1920 = vld [vmem:[#allocation6 + $0x34] sm:$0xf]
    %v1921 = vld [vmem:[#allocation6 + $0x38] sm:$0xf]
    %v1922 = vld [vmem:[#allocation6 + $0x3c] sm:$0xf]
    %v1923 = vld [vmem:[%s10] sm:$0x1]
    %v1925 = vlaneseq
    %v1926 = vshrl.u32 %v1925, 7
    %v1927 = vsub.s32 0, %v1926
    %v1928 = vrot.slane %v1923, %v1927
    %v1946 = vunpack.c.l.b16 %v1907
    %v1947 = vunpack.c.l.b16 %v1908
    %v1948 = vunpack.c.l.b16 %v1909
    %v1949 = vunpack.c.l.b16 %v1910
    %v1950 = vunpack.c.l.b16 %v1911
    %v1951 = vunpack.c.l.b16 %v1912
    %v1952 = vunpack.c.l.b16 %v1913
    %v1953 = vunpack.c.l.b16 %v1914
    %v1954 = vunpack.c.l.b16 %v1915
    %v1955 = vunpack.c.l.b16 %v1916
    %v1956 = vunpack.c.l.b16 %v1917
    %v1957 = vunpack.c.l.b16 %v1918
    %v1958 = vunpack.c.l.b16 %v1919
    %v1959 = vunpack.c.l.b16 %v1920
    %v1960 = vunpack.c.l.b16 %v1921
    %v1961 = vunpack.c.l.b16 %v1922
    %v1962 = vpack.c.b16 %v1947, %v1946
    %v1963 = vpack.c.b16 %v1949, %v1948
    %v1964 = vpack.c.b16 %v1951, %v1950
    %v1965 = vpack.c.b16 %v1953, %v1952
    %v1966 = vpack.c.b16 %v1955, %v1954
    %v1967 = vpack.c.b16 %v1957, %v1956
    %v1968 = vpack.c.b16 %v1959, %v1958
    %v1969 = vpack.c.b16 %v1961, %v1960
    %1978 = vmatprep.subr.bf16.mxu0 0
    %1979 = vmatpush1.bf16.msra.mxu0 %v1962
    %1980 = vmatprep.subr.bf16.mxu0 0
    %1981 = vmatpush1.bf16.msra.mxu0 %v1963
    %1982 = vmatprep.subr.bf16.mxu0 0
    %1983 = vmatpush1.bf16.msra.mxu0 %v1964
    %1984 = vmatprep.subr.bf16.mxu0 0
    %1985 = vmatpush1.bf16.msra.mxu0 %v1965
    %1986 = vmatprep.subr.bf16.mxu0 0
    %1987 = vmatpush1.bf16.msra.mxu0 %v1966
    %1988 = vmatprep.subr.bf16.mxu0 0
    %1989 = vmatpush1.bf16.msra.mxu0 %v1967
    %1990 = vmatprep.subr.bf16.mxu0 0
    %1991 = vmatpush1.bf16.msra.mxu0 %v1968
    %1992 = vmatprep.subr.bf16.mxu0 0
    %1993 = vmatpush1.bf16.msra.mxu0 %v1969
    %1994 = vmatprep.subr.bf16.mxu0 0
    %1995 = vmatpush1.bf16.msra.mxu0 0
    %1996 = vmatprep.subr.bf16.mxu0 0
    %1997 = vmatpush1.bf16.msra.mxu0 0
    %1998 = vmatprep.subr.bf16.mxu0 0
    %1999 = vmatpush1.bf16.msra.mxu0 0
    %2000 = vmatprep.subr.bf16.mxu0 0
    %2001 = vmatpush1.bf16.msra.mxu0 0
    %2002 = vmatprep.subr.bf16.mxu0 0
    %2003 = vmatpush1.bf16.msra.mxu0 0
    %2004 = vmatprep.subr.bf16.mxu0 0
    %2005 = vmatpush1.bf16.msra.mxu0 0
    %2006 = vmatprep.subr.bf16.mxu0 0
    %2007 = vmatpush1.bf16.msra.mxu0 0
    %2008 = vmatprep.subr.bf16.mxu0 0
    %2009 = vmatpush1.bf16.msra.mxu0 0
    %2010 = vmatprep.mubr.bf16.mxu0 0
    %2011 = vmatmul.mubr.bf16.gmra.mrb[0].mxu0 %v1906
    %v2012 = vpop.f32.mrb[0].mxu0
    %v2013 = vadd.f32 %v1928, %v2012
    %v2014 = vpop.f32.mrb[0].mxu0
    %v2015 = vpop.f32.mrb[0].mxu0
    %v2016 = vpop.f32.mrb[0].mxu0
    %2017 = vdwg.mxu0
    %v2018 = vmax.f32 %v2013, 0.0
    %v2019 = vpack.c.bf16 %v2018, %v2018
    %v2020 = vld [vmem:[#allocation7] sm:$0xff]
    %v2021 = vld [vmem:[#allocation7 + $0x8] sm:$0xff]
    %v2022 = vld [vmem:[#allocation7 + $0x10] sm:$0xff]
    %v2023 = vld [vmem:[#allocation7 + $0x18] sm:$0xff]
    %v2024 = vld [vmem:[#allocation7 + $0x20] sm:$0xff]
    %v2025 = vld [vmem:[#allocation7 + $0x28] sm:$0xff]
    %v2026 = vld [vmem:[#allocation7 + $0x30] sm:$0xff]
    %v2027 = vld [vmem:[#allocation7 + $0x38] sm:$0xff]
    %v2028 = vld [vmem:[#allocation7 + $0x40] sm:$0xff]
    %v2029 = vld [vmem:[#allocation7 + $0x48] sm:$0xff]
    %v2030 = vld [vmem:[#allocation7 + $0x50] sm:$0xff]
    %v2031 = vld [vmem:[#allocation7 + $0x58] sm:$0xff]
    %v2032 = vld [vmem:[#allocation7 + $0x60] sm:$0xff]
    %v2033 = vld [vmem:[#allocation7 + $0x68] sm:$0xff]
    %v2034 = vld [vmem:[#allocation7 + $0x70] sm:$0xff]
    %v2035 = vld [vmem:[#allocation7 + $0x78] sm:$0xff]
    %v2036 = vld [vmem:[#allocation7 + $0x80] sm:$0xff]
    %v2037 = vld [vmem:[#allocation7 + $0x88] sm:$0xff]
    %v2038 = vld [vmem:[#allocation7 + $0x90] sm:$0xff]
    %v2039 = vld [vmem:[#allocation7 + $0x98] sm:$0xff]
    %v2040 = vld [vmem:[#allocation7 + $0xa0] sm:$0xff]
    %v2041 = vld [vmem:[#allocation7 + $0xa8] sm:$0xff]
    %v2042 = vld [vmem:[#allocation7 + $0xb0] sm:$0xff]
    %v2043 = vld [vmem:[#allocation7 + $0xb8] sm:$0xff]
    %v2044 = vld [vmem:[#allocation7 + $0xc0] sm:$0xff]
    %v2045 = vld [vmem:[#allocation7 + $0xc8] sm:$0xff]
    %v2046 = vld [vmem:[#allocation7 + $0xd0] sm:$0xff]
    %v2047 = vld [vmem:[#allocation7 + $0xd8] sm:$0xff]
    %v2048 = vld [vmem:[#allocation7 + $0xe0] sm:$0xff]
    %v2049 = vld [vmem:[#allocation7 + $0xe8] sm:$0xff]
    %v2050 = vld [vmem:[#allocation7 + $0xf0] sm:$0xff]
    %v2051 = vld [vmem:[#allocation7 + $0xf8] sm:$0xff]
    %v2052 = vld [vmem:[#allocation7 + $0x100] sm:$0xff]
    %v2053 = vld [vmem:[#allocation7 + $0x108] sm:$0xff]
    %v2054 = vld [vmem:[#allocation7 + $0x110] sm:$0xff]
    %v2055 = vld [vmem:[#allocation7 + $0x118] sm:$0xff]
    %v2056 = vld [vmem:[#allocation7 + $0x120] sm:$0xff]
    %v2057 = vld [vmem:[#allocation7 + $0x128] sm:$0xff]
    %v2058 = vld [vmem:[#allocation7 + $0x130] sm:$0xff]
    %v2059 = vld [vmem:[#allocation7 + $0x138] sm:$0xff]
    %v2060 = vld [vmem:[#allocation7 + $0x140] sm:$0xff]
    %v2061 = vld [vmem:[#allocation7 + $0x148] sm:$0xff]
    %v2062 = vld [vmem:[#allocation7 + $0x150] sm:$0xff]
    %v2063 = vld [vmem:[#allocation7 + $0x158] sm:$0xff]
    %v2064 = vld [vmem:[#allocation7 + $0x160] sm:$0xff]
    %v2065 = vld [vmem:[#allocation7 + $0x168] sm:$0xff]
    %v2066 = vld [vmem:[#allocation7 + $0x170] sm:$0xff]
    %v2067 = vld [vmem:[#allocation7 + $0x178] sm:$0xff]
    %v2068 = vld [vmem:[#allocation7 + $0x180] sm:$0xff]
    %v2069 = vld [vmem:[#allocation7 + $0x188] sm:$0xff]
    %v2070 = vld [vmem:[#allocation7 + $0x190] sm:$0xff]
    %v2071 = vld [vmem:[#allocation7 + $0x198] sm:$0xff]
    %v2072 = vld [vmem:[#allocation7 + $0x1a0] sm:$0xff]
    %v2073 = vld [vmem:[#allocation7 + $0x1a8] sm:$0xff]
    %v2074 = vld [vmem:[#allocation7 + $0x1b0] sm:$0xff]
    %v2075 = vld [vmem:[#allocation7 + $0x1b8] sm:$0xff]
    %v2076 = vld [vmem:[#allocation7 + $0x1c0] sm:$0xff]
    %v2077 = vld [vmem:[#allocation7 + $0x1c8] sm:$0xff]
    %v2078 = vld [vmem:[#allocation7 + $0x1d0] sm:$0xff]
    %v2079 = vld [vmem:[#allocation7 + $0x1d8] sm:$0xff]
    %v2080 = vld [vmem:[#allocation7 + $0x1e0] sm:$0xff]
    %v2081 = vld [vmem:[#allocation7 + $0x1e8] sm:$0xff]
    %v2082 = vld [vmem:[#allocation7 + $0x1f0] sm:$0xff]
    %v2083 = vld [vmem:[#allocation7 + $0x1f8] sm:$0xff]
    %v2084 = vld [vmem:[%s11] sm:$0xff]
    %v2086 = vlaneseq
    %v2087 = vshrl.u32 %v2086, 7
    %v2088 = vsub.s32 0, %v2087
    %v2089 = vrot.slane %v2084, %v2088
    %v2090 = vlaneseq
    %v2091 = vshrl.u32 %v2090, 7
    %v2092 = vsub.s32 1, %v2091
    %v2093 = vrot.slane %v2084, %v2092
    %v2094 = vlaneseq
    %v2095 = vshrl.u32 %v2094, 7
    %v2096 = vsub.s32 2, %v2095
    %v2097 = vrot.slane %v2084, %v2096
    %v2098 = vlaneseq
    %v2099 = vshrl.u32 %v2098, 7
    %v2100 = vsub.s32 3, %v2099
    %v2101 = vrot.slane %v2084, %v2100
    %v2102 = vlaneseq
    %v2103 = vshrl.u32 %v2102, 7
    %v2104 = vsub.s32 4, %v2103
    %v2105 = vrot.slane %v2084, %v2104
    %v2106 = vlaneseq
    %v2107 = vshrl.u32 %v2106, 7
    %v2108 = vsub.s32 5, %v2107
    %v2109 = vrot.slane %v2084, %v2108
    %v2110 = vlaneseq
    %v2111 = vshrl.u32 %v2110, 7
    %v2112 = vsub.s32 6, %v2111
    %v2113 = vrot.slane %v2084, %v2112
    %v2114 = vlaneseq
    %v2115 = vshrl.u32 %v2114, 7
    %v2116 = vsub.s32 7, %v2115
    %v2117 = vrot.slane %v2084, %v2116
    %v2190 = vunpack.c.l.b16 %v2020
    %v2191 = vunpack.c.h.b16 %v2020
    %v2192 = vunpack.c.l.b16 %v2021
    %v2193 = vunpack.c.h.b16 %v2021
    %v2194 = vunpack.c.l.b16 %v2022
    %v2195 = vunpack.c.h.b16 %v2022
    %v2196 = vunpack.c.l.b16 %v2023
    %v2197 = vunpack.c.h.b16 %v2023
    %v2198 = vunpack.c.l.b16 %v2024
    %v2199 = vunpack.c.h.b16 %v2024
    %v2200 = vunpack.c.l.b16 %v2025
    %v2201 = vunpack.c.h.b16 %v2025
    %v2202 = vunpack.c.l.b16 %v2026
    %v2203 = vunpack.c.h.b16 %v2026
    %v2204 = vunpack.c.l.b16 %v2027
    %v2205 = vunpack.c.h.b16 %v2027
    %v2206 = vunpack.c.l.b16 %v2028
    %v2207 = vunpack.c.h.b16 %v2028
    %v2208 = vunpack.c.l.b16 %v2029
    %v2209 = vunpack.c.h.b16 %v2029
    %v2210 = vunpack.c.l.b16 %v2030
    %v2211 = vunpack.c.h.b16 %v2030
    %v2212 = vunpack.c.l.b16 %v2031
    %v2213 = vunpack.c.h.b16 %v2031
    %v2214 = vunpack.c.l.b16 %v2032
    %v2215 = vunpack.c.h.b16 %v2032
    %v2216 = vunpack.c.l.b16 %v2033
    %v2217 = vunpack.c.h.b16 %v2033
    %v2218 = vunpack.c.l.b16 %v2034
    %v2219 = vunpack.c.h.b16 %v2034
    %v2220 = vunpack.c.l.b16 %v2035
    %v2221 = vunpack.c.h.b16 %v2035
    %v2222 = vunpack.c.l.b16 %v2036
    %v2223 = vunpack.c.h.b16 %v2036
    %v2224 = vunpack.c.l.b16 %v2037
    %v2225 = vunpack.c.h.b16 %v2037
    %v2226 = vunpack.c.l.b16 %v2038
    %v2227 = vunpack.c.h.b16 %v2038
    %v2228 = vunpack.c.l.b16 %v2039
    %v2229 = vunpack.c.h.b16 %v2039
    %v2230 = vunpack.c.l.b16 %v2040
    %v2231 = vunpack.c.h.b16 %v2040
    %v2232 = vunpack.c.l.b16 %v2041
    %v2233 = vunpack.c.h.b16 %v2041
    %v2234 = vunpack.c.l.b16 %v2042
    %v2235 = vunpack.c.h.b16 %v2042
    %v2236 = vunpack.c.l.b16 %v2043
    %v2237 = vunpack.c.h.b16 %v2043
    %v2238 = vunpack.c.l.b16 %v2044
    %v2239 = vunpack.c.h.b16 %v2044
    %v2240 = vunpack.c.l.b16 %v2045
    %v2241 = vunpack.c.h.b16 %v2045
    %v2242 = vunpack.c.l.b16 %v2046
    %v2243 = vunpack.c.h.b16 %v2046
    %v2244 = vunpack.c.l.b16 %v2047
    %v2245 = vunpack.c.h.b16 %v2047
    %v2246 = vunpack.c.l.b16 %v2048
    %v2247 = vunpack.c.h.b16 %v2048
    %v2248 = vunpack.c.l.b16 %v2049
    %v2249 = vunpack.c.h.b16 %v2049
    %v2250 = vunpack.c.l.b16 %v2050
    %v2251 = vunpack.c.h.b16 %v2050
    %v2252 = vunpack.c.l.b16 %v2051
    %v2253 = vunpack.c.h.b16 %v2051
    %v2254 = vunpack.c.l.b16 %v2052
    %v2255 = vunpack.c.h.b16 %v2052
    %v2256 = vunpack.c.l.b16 %v2053
    %v2257 = vunpack.c.h.b16 %v2053
    %v2258 = vunpack.c.l.b16 %v2054
    %v2259 = vunpack.c.h.b16 %v2054
    %v2260 = vunpack.c.l.b16 %v2055
    %v2261 = vunpack.c.h.b16 %v2055
    %v2262 = vunpack.c.l.b16 %v2056
    %v2263 = vunpack.c.h.b16 %v2056
    %v2264 = vunpack.c.l.b16 %v2057
    %v2265 = vunpack.c.h.b16 %v2057
    %v2266 = vunpack.c.l.b16 %v2058
    %v2267 = vunpack.c.h.b16 %v2058
    %v2268 = vunpack.c.l.b16 %v2059
    %v2269 = vunpack.c.h.b16 %v2059
    %v2270 = vunpack.c.l.b16 %v2060
    %v2271 = vunpack.c.h.b16 %v2060
    %v2272 = vunpack.c.l.b16 %v2061
    %v2273 = vunpack.c.h.b16 %v2061
    %v2274 = vunpack.c.l.b16 %v2062
    %v2275 = vunpack.c.h.b16 %v2062
    %v2276 = vunpack.c.l.b16 %v2063
    %v2277 = vunpack.c.h.b16 %v2063
    %v2278 = vunpack.c.l.b16 %v2064
    %v2279 = vunpack.c.h.b16 %v2064
    %v2280 = vunpack.c.l.b16 %v2065
    %v2281 = vunpack.c.h.b16 %v2065
    %v2282 = vunpack.c.l.b16 %v2066
    %v2283 = vunpack.c.h.b16 %v2066
    %v2284 = vunpack.c.l.b16 %v2067
    %v2285 = vunpack.c.h.b16 %v2067
    %v2286 = vunpack.c.l.b16 %v2068
    %v2287 = vunpack.c.h.b16 %v2068
    %v2288 = vunpack.c.l.b16 %v2069
    %v2289 = vunpack.c.h.b16 %v2069
    %v2290 = vunpack.c.l.b16 %v2070
    %v2291 = vunpack.c.h.b16 %v2070
    %v2292 = vunpack.c.l.b16 %v2071
    %v2293 = vunpack.c.h.b16 %v2071
    %v2294 = vunpack.c.l.b16 %v2072
    %v2295 = vunpack.c.h.b16 %v2072
    %v2296 = vunpack.c.l.b16 %v2073
    %v2297 = vunpack.c.h.b16 %v2073
    %v2298 = vunpack.c.l.b16 %v2074
    %v2299 = vunpack.c.h.b16 %v2074
    %v2300 = vunpack.c.l.b16 %v2075
    %v2301 = vunpack.c.h.b16 %v2075
    %v2302 = vunpack.c.l.b16 %v2076
    %v2303 = vunpack.c.h.b16 %v2076
    %v2304 = vunpack.c.l.b16 %v2077
    %v2305 = vunpack.c.h.b16 %v2077
    %v2306 = vunpack.c.l.b16 %v2078
    %v2307 = vunpack.c.h.b16 %v2078
    %v2308 = vunpack.c.l.b16 %v2079
    %v2309 = vunpack.c.h.b16 %v2079
    %v2310 = vunpack.c.l.b16 %v2080
    %v2311 = vunpack.c.h.b16 %v2080
    %v2312 = vunpack.c.l.b16 %v2081
    %v2313 = vunpack.c.h.b16 %v2081
    %v2314 = vunpack.c.l.b16 %v2082
    %v2315 = vunpack.c.h.b16 %v2082
    %v2316 = vunpack.c.l.b16 %v2083
    %v2317 = vunpack.c.h.b16 %v2083
    %v2318 = vpack.c.b16 %v2198, %v2190
    %v2319 = vpack.c.b16 %v2199, %v2191
    %v2320 = vpack.c.b16 %v2200, %v2192
    %v2321 = vpack.c.b16 %v2201, %v2193
    %v2322 = vpack.c.b16 %v2202, %v2194
    %v2323 = vpack.c.b16 %v2203, %v2195
    %v2324 = vpack.c.b16 %v2204, %v2196
    %v2325 = vpack.c.b16 %v2205, %v2197
    %v2326 = vpack.c.b16 %v2214, %v2206
    %v2327 = vpack.c.b16 %v2215, %v2207
    %v2328 = vpack.c.b16 %v2216, %v2208
    %v2329 = vpack.c.b16 %v2217, %v2209
    %v2330 = vpack.c.b16 %v2218, %v2210
    %v2331 = vpack.c.b16 %v2219, %v2211
    %v2332 = vpack.c.b16 %v2220, %v2212
    %v2333 = vpack.c.b16 %v2221, %v2213
    %v2334 = vpack.c.b16 %v2230, %v2222
    %v2335 = vpack.c.b16 %v2231, %v2223
    %v2336 = vpack.c.b16 %v2232, %v2224
    %v2337 = vpack.c.b16 %v2233, %v2225
    %v2338 = vpack.c.b16 %v2234, %v2226
    %v2339 = vpack.c.b16 %v2235, %v2227
    %v2340 = vpack.c.b16 %v2236, %v2228
    %v2341 = vpack.c.b16 %v2237, %v2229
    %v2342 = vpack.c.b16 %v2246, %v2238
    %v2343 = vpack.c.b16 %v2247, %v2239
    %v2344 = vpack.c.b16 %v2248, %v2240
    %v2345 = vpack.c.b16 %v2249, %v2241
    %v2346 = vpack.c.b16 %v2250, %v2242
    %v2347 = vpack.c.b16 %v2251, %v2243
    %v2348 = vpack.c.b16 %v2252, %v2244
    %v2349 = vpack.c.b16 %v2253, %v2245
    %v2350 = vpack.c.b16 %v2262, %v2254
    %v2351 = vpack.c.b16 %v2263, %v2255
    %v2352 = vpack.c.b16 %v2264, %v2256
    %v2353 = vpack.c.b16 %v2265, %v2257
    %v2354 = vpack.c.b16 %v2266, %v2258
    %v2355 = vpack.c.b16 %v2267, %v2259
    %v2356 = vpack.c.b16 %v2268, %v2260
    %v2357 = vpack.c.b16 %v2269, %v2261
    %v2358 = vpack.c.b16 %v2278, %v2270
    %v2359 = vpack.c.b16 %v2279, %v2271
    %v2360 = vpack.c.b16 %v2280, %v2272
    %v2361 = vpack.c.b16 %v2281, %v2273
    %v2362 = vpack.c.b16 %v2282, %v2274
    %v2363 = vpack.c.b16 %v2283, %v2275
    %v2364 = vpack.c.b16 %v2284, %v2276
    %v2365 = vpack.c.b16 %v2285, %v2277
    %v2366 = vpack.c.b16 %v2294, %v2286
    %v2367 = vpack.c.b16 %v2295, %v2287
    %v2368 = vpack.c.b16 %v2296, %v2288
    %v2369 = vpack.c.b16 %v2297, %v2289
    %v2370 = vpack.c.b16 %v2298, %v2290
    %v2371 = vpack.c.b16 %v2299, %v2291
    %v2372 = vpack.c.b16 %v2300, %v2292
    %v2373 = vpack.c.b16 %v2301, %v2293
    %v2374 = vpack.c.b16 %v2310, %v2302
    %v2375 = vpack.c.b16 %v2311, %v2303
    %v2376 = vpack.c.b16 %v2312, %v2304
    %v2377 = vpack.c.b16 %v2313, %v2305
    %v2378 = vpack.c.b16 %v2314, %v2306
    %v2379 = vpack.c.b16 %v2315, %v2307
    %v2380 = vpack.c.b16 %v2316, %v2308
    %v2381 = vpack.c.b16 %v2317, %v2309
    %2446 = vmatprep.subr.bf16.mxu0 %v2319
    %2447 = vmatpush1.bf16.msra.mxu0 %v2318
    %2448 = vmatprep.subr.bf16.mxu0 %v2327
    %2449 = vmatpush1.bf16.msra.mxu0 %v2326
    %2450 = vmatprep.subr.bf16.mxu0 %v2335
    %2451 = vmatpush1.bf16.msra.mxu0 %v2334
    %2452 = vmatprep.subr.bf16.mxu0 %v2343
    %2453 = vmatpush1.bf16.msra.mxu0 %v2342
    %2454 = vmatprep.subr.bf16.mxu0 %v2351
    %2455 = vmatpush1.bf16.msra.mxu0 %v2350
    %2456 = vmatprep.subr.bf16.mxu0 %v2359
    %2457 = vmatpush1.bf16.msra.mxu0 %v2358
    %2458 = vmatprep.subr.bf16.mxu0 %v2367
    %2459 = vmatpush1.bf16.msra.mxu0 %v2366
    %2460 = vmatprep.subr.bf16.mxu0 %v2375
    %2461 = vmatpush1.bf16.msra.mxu0 %v2374
    %2462 = vmatprep.subr.bf16.mxu0 0
    %2463 = vmatpush1.bf16.msra.mxu0 0
    %2464 = vmatprep.subr.bf16.mxu0 0
    %2465 = vmatpush1.bf16.msra.mxu0 0
    %2466 = vmatprep.subr.bf16.mxu0 0
    %2467 = vmatpush1.bf16.msra.mxu0 0
    %2468 = vmatprep.subr.bf16.mxu0 0
    %2469 = vmatpush1.bf16.msra.mxu0 0
    %2470 = vmatprep.subr.bf16.mxu0 0
    %2471 = vmatpush1.bf16.msra.mxu0 0
    %2472 = vmatprep.subr.bf16.mxu0 0
    %2473 = vmatpush1.bf16.msra.mxu0 0
    %2474 = vmatprep.subr.bf16.mxu0 0
    %2475 = vmatpush1.bf16.msra.mxu0 0
    %2476 = vmatprep.subr.bf16.mxu0 0
    %2477 = vmatpush1.bf16.msra.mxu0 0
    %2478 = vmatprep.mubr.bf16.mxu0 0
    %2479 = vmatmul.mubr.bf16.gmra.mrb[0].mxu0 %v2019
    %v2480 = vpop.f32.mrb[0].mxu0
    %v2481 = vadd.f32 %v2089, %v2480
    %v2482 = vpop.f32.mrb[0].mxu0
    %v2483 = vadd.f32 %v2093, %v2482
    %v2484 = vpop.f32.mrb[0].mxu0
    %v2485 = vpop.f32.mrb[0].mxu0
    %2486 = vdwg.mxu0
    %2487 = vmatprep.subr.bf16.mxu0 %v2321
    %2488 = vmatpush1.bf16.msra.mxu0 %v2320
    %2489 = vmatprep.subr.bf16.mxu0 %v2329
    %2490 = vmatpush1.bf16.msra.mxu0 %v2328
    %2491 = vmatprep.subr.bf16.mxu0 %v2337
    %2492 = vmatpush1.bf16.msra.mxu0 %v2336
    %2493 = vmatprep.subr.bf16.mxu0 %v2345
    %2494 = vmatpush1.bf16.msra.mxu0 %v2344
    %2495 = vmatprep.subr.bf16.mxu0 %v2353
    %2496 = vmatpush1.bf16.msra.mxu0 %v2352
    %2497 = vmatprep.subr.bf16.mxu0 %v2361
    %2498 = vmatpush1.bf16.msra.mxu0 %v2360
    %2499 = vmatprep.subr.bf16.mxu0 %v2369
    %2500 = vmatpush1.bf16.msra.mxu0 %v2368
    %2501 = vmatprep.subr.bf16.mxu0 %v2377
    %2502 = vmatpush1.bf16.msra.mxu0 %v2376
    %2503 = vmatprep.subr.bf16.mxu0 0
    %2504 = vmatpush1.bf16.msra.mxu0 0
    %2505 = vmatprep.subr.bf16.mxu0 0
    %2506 = vmatpush1.bf16.msra.mxu0 0
    %2507 = vmatprep.subr.bf16.mxu0 0
    %2508 = vmatpush1.bf16.msra.mxu0 0
    %2509 = vmatprep.subr.bf16.mxu0 0
    %2510 = vmatpush1.bf16.msra.mxu0 0
    %2511 = vmatprep.subr.bf16.mxu0 0
    %2512 = vmatpush1.bf16.msra.mxu0 0
    %2513 = vmatprep.subr.bf16.mxu0 0
    %2514 = vmatpush1.bf16.msra.mxu0 0
    %2515 = vmatprep.subr.bf16.mxu0 0
    %2516 = vmatpush1.bf16.msra.mxu0 0
    %2517 = vmatprep.subr.bf16.mxu0 0
    %2518 = vmatpush1.bf16.msra.mxu0 0
    %2519 = vmatprep.mubr.bf16.mxu0 0
    %2520 = vmatmul.mubr.bf16.gmra.mrb[0].mxu0 %v2019
    %v2521 = vpop.f32.mrb[0].mxu0
    %v2522 = vadd.f32 %v2097, %v2521
    %v2523 = vpop.f32.mrb[0].mxu0
    %v2524 = vadd.f32 %v2101, %v2523
    %v2525 = vpop.f32.mrb[0].mxu0
    %v2526 = vpop.f32.mrb[0].mxu0
    %2527 = vdwg.mxu0
    %2528 = vmatprep.subr.bf16.mxu0 %v2323
    %2529 = vmatpush1.bf16.msra.mxu0 %v2322
    %2530 = vmatprep.subr.bf16.mxu0 %v2331
    %2531 = vmatpush1.bf16.msra.mxu0 %v2330
    %2532 = vmatprep.subr.bf16.mxu0 %v2339
    %2533 = vmatpush1.bf16.msra.mxu0 %v2338
    %2534 = vmatprep.subr.bf16.mxu0 %v2347
    %2535 = vmatpush1.bf16.msra.mxu0 %v2346
    %2536 = vmatprep.subr.bf16.mxu0 %v2355
    %2537 = vmatpush1.bf16.msra.mxu0 %v2354
    %2538 = vmatprep.subr.bf16.mxu0 %v2363
    %2539 = vmatpush1.bf16.msra.mxu0 %v2362
    %2540 = vmatprep.subr.bf16.mxu0 %v2371
    %2541 = vmatpush1.bf16.msra.mxu0 %v2370
    %2542 = vmatprep.subr.bf16.mxu0 %v2379
    %2543 = vmatpush1.bf16.msra.mxu0 %v2378
    %2544 = vmatprep.subr.bf16.mxu0 0
    %2545 = vmatpush1.bf16.msra.mxu0 0
    %2546 = vmatprep.subr.bf16.mxu0 0
    %2547 = vmatpush1.bf16.msra.mxu0 0
    %2548 = vmatprep.subr.bf16.mxu0 0
    %2549 = vmatpush1.bf16.msra.mxu0 0
    %2550 = vmatprep.subr.bf16.mxu0 0
    %2551 = vmatpush1.bf16.msra.mxu0 0
    %2552 = vmatprep.subr.bf16.mxu0 0
    %2553 = vmatpush1.bf16.msra.mxu0 0
    %2554 = vmatprep.subr.bf16.mxu0 0
    %2555 = vmatpush1.bf16.msra.mxu0 0
    %2556 = vmatprep.subr.bf16.mxu0 0
    %2557 = vmatpush1.bf16.msra.mxu0 0
    %2558 = vmatprep.subr.bf16.mxu0 0
    %2559 = vmatpush1.bf16.msra.mxu0 0
    %2560 = vmatprep.mubr.bf16.mxu0 0
    %2561 = vmatmul.mubr.bf16.gmra.mrb[0].mxu0 %v2019
    %v2562 = vpop.f32.mrb[0].mxu0
    %v2563 = vadd.f32 %v2105, %v2562
    %v2564 = vpop.f32.mrb[0].mxu0
    %v2565 = vadd.f32 %v2109, %v2564
    %v2566 = vpop.f32.mrb[0].mxu0
    %v2567 = vpop.f32.mrb[0].mxu0
    %2568 = vdwg.mxu0
    %2569 = vmatprep.subr.bf16.mxu0 %v2325
    %2570 = vmatpush1.bf16.msra.mxu0 %v2324
    %2571 = vmatprep.subr.bf16.mxu0 %v2333
    %2572 = vmatpush1.bf16.msra.mxu0 %v2332
    %2573 = vmatprep.subr.bf16.mxu0 %v2341
    %2574 = vmatpush1.bf16.msra.mxu0 %v2340
    %2575 = vmatprep.subr.bf16.mxu0 %v2349
    %2576 = vmatpush1.bf16.msra.mxu0 %v2348
    %2577 = vmatprep.subr.bf16.mxu0 %v2357
    %2578 = vmatpush1.bf16.msra.mxu0 %v2356
    %2579 = vmatprep.subr.bf16.mxu0 %v2365
    %2580 = vmatpush1.bf16.msra.mxu0 %v2364
    %2581 = vmatprep.subr.bf16.mxu0 %v2373
    %2582 = vmatpush1.bf16.msra.mxu0 %v2372
    %2583 = vmatprep.subr.bf16.mxu0 %v2381
    %2584 = vmatpush1.bf16.msra.mxu0 %v2380
    %2585 = vmatprep.subr.bf16.mxu0 0
    %2586 = vmatpush1.bf16.msra.mxu0 0
    %2587 = vmatprep.subr.bf16.mxu0 0
    %2588 = vmatpush1.bf16.msra.mxu0 0
    %2589 = vmatprep.subr.bf16.mxu0 0
    %2590 = vmatpush1.bf16.msra.mxu0 0
    %2591 = vmatprep.subr.bf16.mxu0 0
    %2592 = vmatpush1.bf16.msra.mxu0 0
    %2593 = vmatprep.subr.bf16.mxu0 0
    %2594 = vmatpush1.bf16.msra.mxu0 0
    %2595 = vmatprep.subr.bf16.mxu0 0
    %2596 = vmatpush1.bf16.msra.mxu0 0
    %2597 = vmatprep.subr.bf16.mxu0 0
    %2598 = vmatpush1.bf16.msra.mxu0 0
    %2599 = vmatprep.subr.bf16.mxu0 0
    %2600 = vmatpush1.bf16.msra.mxu0 0
    %2601 = vmatprep.mubr.bf16.mxu0 0
    %2602 = vmatmul.mubr.bf16.gmra.mrb[0].mxu0 %v2019
    %v2603 = vpop.f32.mrb[0].mxu0
    %v2604 = vadd.f32 %v2113, %v2603
    %v2605 = vpop.f32.mrb[0].mxu0
    %v2606 = vadd.f32 %v2117, %v2605
    %v2607 = vpop.f32.mrb[0].mxu0
    %v2608 = vpop.f32.mrb[0].mxu0
    %2609 = vdwg.mxu0
    %v2610 = vmax.f32 %v2481, 0.0
    %v2611 = vmax.f32 %v2483, 0.0
    %v2612 = vmax.f32 %v2522, 0.0
    %v2613 = vmax.f32 %v2524, 0.0
    %v2614 = vmax.f32 %v2563, 0.0
    %v2615 = vmax.f32 %v2565, 0.0
    %v2616 = vmax.f32 %v2604, 0.0
    %v2617 = vmax.f32 %v2606, 0.0
    %v2618 = vpack.c.bf16 %v2610, %v2610
    %v2619 = vpack.c.bf16 %v2611, %v2611
    %v2620 = vpack.c.bf16 %v2612, %v2612
    %v2621 = vpack.c.bf16 %v2613, %v2613
    %v2622 = vpack.c.bf16 %v2614, %v2614
    %v2623 = vpack.c.bf16 %v2615, %v2615
    %v2624 = vpack.c.bf16 %v2616, %v2616
    %v2625 = vpack.c.bf16 %v2617, %v2617
    %v2626 = vld [vmem:[#allocation9] sm:$0xff]
    %v2627 = vld [vmem:[#allocation9 + $0x8] sm:$0xff]
    %v2628 = vld [vmem:[#allocation9 + $0x10] sm:$0xff]
    %v2629 = vld [vmem:[#allocation9 + $0x18] sm:$0xff]
    %v2630 = vld [vmem:[#allocation9 + $0x20] sm:$0xff]
    %v2631 = vld [vmem:[#allocation9 + $0x28] sm:$0xff]
    %v2632 = vld [vmem:[#allocation9 + $0x30] sm:$0xff]
    %v2633 = vld [vmem:[#allocation9 + $0x38] sm:$0xff]
    %v2634 = vld [vmem:[#allocation9 + $0x40] sm:$0xff]
    %v2635 = vld [vmem:[#allocation9 + $0x48] sm:$0xff]
    %v2636 = vld [vmem:[#allocation9 + $0x50] sm:$0xff]
    %v2637 = vld [vmem:[#allocation9 + $0x58] sm:$0xff]
    %v2638 = vld [vmem:[#allocation9 + $0x60] sm:$0xff]
    %v2639 = vld [vmem:[#allocation9 + $0x68] sm:$0xff]
    %v2640 = vld [vmem:[#allocation9 + $0x70] sm:$0xff]
    %v2641 = vld [vmem:[#allocation9 + $0x78] sm:$0xff]
    %v2642 = vld [vmem:[#allocation9 + $0x80] sm:$0xff]
    %v2643 = vld [vmem:[#allocation9 + $0x88] sm:$0xff]
    %v2644 = vld [vmem:[#allocation9 + $0x90] sm:$0xff]
    %v2645 = vld [vmem:[#allocation9 + $0x98] sm:$0xff]
    %v2646 = vld [vmem:[#allocation9 + $0xa0] sm:$0xff]
    %v2647 = vld [vmem:[#allocation9 + $0xa8] sm:$0xff]
    %v2648 = vld [vmem:[#allocation9 + $0xb0] sm:$0xff]
    %v2649 = vld [vmem:[#allocation9 + $0xb8] sm:$0xff]
    %v2650 = vld [vmem:[#allocation9 + $0xc0] sm:$0xff]
    %v2651 = vld [vmem:[#allocation9 + $0xc8] sm:$0xff]
    %v2652 = vld [vmem:[#allocation9 + $0xd0] sm:$0xff]
    %v2653 = vld [vmem:[#allocation9 + $0xd8] sm:$0xff]
    %v2654 = vld [vmem:[#allocation9 + $0xe0] sm:$0xff]
    %v2655 = vld [vmem:[#allocation9 + $0xe8] sm:$0xff]
    %v2656 = vld [vmem:[#allocation9 + $0xf0] sm:$0xff]
    %v2657 = vld [vmem:[#allocation9 + $0xf8] sm:$0xff]
    %v2658 = vld [vmem:[#allocation9 + $0x100] sm:$0xff]
    %v2659 = vld [vmem:[#allocation9 + $0x108] sm:$0xff]
    %v2660 = vld [vmem:[#allocation9 + $0x110] sm:$0xff]
    %v2661 = vld [vmem:[#allocation9 + $0x118] sm:$0xff]
    %v2662 = vld [vmem:[#allocation9 + $0x120] sm:$0xff]
    %v2663 = vld [vmem:[#allocation9 + $0x128] sm:$0xff]
    %v2664 = vld [vmem:[#allocation9 + $0x130] sm:$0xff]
    %v2665 = vld [vmem:[#allocation9 + $0x138] sm:$0xff]
    %v2666 = vld [vmem:[#allocation9 + $0x140] sm:$0xff]
    %v2667 = vld [vmem:[#allocation9 + $0x148] sm:$0xff]
    %v2668 = vld [vmem:[#allocation9 + $0x150] sm:$0xff]
    %v2669 = vld [vmem:[#allocation9 + $0x158] sm:$0xff]
    %v2670 = vld [vmem:[#allocation9 + $0x160] sm:$0xff]
    %v2671 = vld [vmem:[#allocation9 + $0x168] sm:$0xff]
    %v2672 = vld [vmem:[#allocation9 + $0x170] sm:$0xff]
    %v2673 = vld [vmem:[#allocation9 + $0x178] sm:$0xff]
    %v2674 = vld [vmem:[#allocation9 + $0x180] sm:$0xff]
    %v2675 = vld [vmem:[#allocation9 + $0x188] sm:$0xff]
    %v2676 = vld [vmem:[#allocation9 + $0x190] sm:$0xff]
    %v2677 = vld [vmem:[#allocation9 + $0x198] sm:$0xff]
    %v2678 = vld [vmem:[#allocation9 + $0x1a0] sm:$0xff]
    %v2679 = vld [vmem:[#allocation9 + $0x1a8] sm:$0xff]
    %v2680 = vld [vmem:[#allocation9 + $0x1b0] sm:$0xff]
    %v2681 = vld [vmem:[#allocation9 + $0x1b8] sm:$0xff]
    %v2682 = vld [vmem:[#allocation9 + $0x1c0] sm:$0xff]
    %v2683 = vld [vmem:[#allocation9 + $0x1c8] sm:$0xff]
    %v2684 = vld [vmem:[#allocation9 + $0x1d0] sm:$0xff]
    %v2685 = vld [vmem:[#allocation9 + $0x1d8] sm:$0xff]
    %v2686 = vld [vmem:[#allocation9 + $0x1e0] sm:$0xff]
    %v2687 = vld [vmem:[#allocation9 + $0x1e8] sm:$0xff]
    %v2688 = vld [vmem:[#allocation9 + $0x1f0] sm:$0xff]
    %v2689 = vld [vmem:[#allocation9 + $0x1f8] sm:$0xff]
    %v2690 = vld [vmem:[#allocation9 + $0x200] sm:$0xff]
    %v2691 = vld [vmem:[#allocation9 + $0x208] sm:$0xff]
    %v2692 = vld [vmem:[#allocation9 + $0x210] sm:$0xff]
    %v2693 = vld [vmem:[#allocation9 + $0x218] sm:$0xff]
    %v2694 = vld [vmem:[#allocation9 + $0x220] sm:$0xff]
    %v2695 = vld [vmem:[#allocation9 + $0x228] sm:$0xff]
    %v2696 = vld [vmem:[#allocation9 + $0x230] sm:$0xff]
    %v2697 = vld [vmem:[#allocation9 + $0x238] sm:$0xff]
    %v2698 = vld [vmem:[#allocation9 + $0x240] sm:$0xff]
    %v2699 = vld [vmem:[#allocation9 + $0x248] sm:$0xff]
    %v2700 = vld [vmem:[#allocation9 + $0x250] sm:$0xff]
    %v2701 = vld [vmem:[#allocation9 + $0x258] sm:$0xff]
    %v2702 = vld [vmem:[#allocation9 + $0x260] sm:$0xff]
    %v2703 = vld [vmem:[#allocation9 + $0x268] sm:$0xff]
    %v2704 = vld [vmem:[#allocation9 + $0x270] sm:$0xff]
    %v2705 = vld [vmem:[#allocation9 + $0x278] sm:$0xff]
    %v2706 = vld [vmem:[#allocation9 + $0x280] sm:$0xff]
    %v2707 = vld [vmem:[#allocation9 + $0x288] sm:$0xff]
    %v2708 = vld [vmem:[#allocation9 + $0x290] sm:$0xff]
    %v2709 = vld [vmem:[#allocation9 + $0x298] sm:$0xff]
    %v2710 = vld [vmem:[#allocation9 + $0x2a0] sm:$0xff]
    %v2711 = vld [vmem:[#allocation9 + $0x2a8] sm:$0xff]
    %v2712 = vld [vmem:[#allocation9 + $0x2b0] sm:$0xff]
    %v2713 = vld [vmem:[#allocation9 + $0x2b8] sm:$0xff]
    %v2714 = vld [vmem:[#allocation9 + $0x2c0] sm:$0xff]
    %v2715 = vld [vmem:[#allocation9 + $0x2c8] sm:$0xff]
    %v2716 = vld [vmem:[#allocation9 + $0x2d0] sm:$0xff]
    %v2717 = vld [vmem:[#allocation9 + $0x2d8] sm:$0xff]
    %v2718 = vld [vmem:[#allocation9 + $0x2e0] sm:$0xff]
    %v2719 = vld [vmem:[#allocation9 + $0x2e8] sm:$0xff]
    %v2720 = vld [vmem:[#allocation9 + $0x2f0] sm:$0xff]
    %v2721 = vld [vmem:[#allocation9 + $0x2f8] sm:$0xff]
    %v2722 = vld [vmem:[#allocation9 + $0x300] sm:$0xff]
    %v2723 = vld [vmem:[#allocation9 + $0x308] sm:$0xff]
    %v2724 = vld [vmem:[#allocation9 + $0x310] sm:$0xff]
    %v2725 = vld [vmem:[#allocation9 + $0x318] sm:$0xff]
    %v2726 = vld [vmem:[#allocation9 + $0x320] sm:$0xff]
    %v2727 = vld [vmem:[#allocation9 + $0x328] sm:$0xff]
    %v2728 = vld [vmem:[#allocation9 + $0x330] sm:$0xff]
    %v2729 = vld [vmem:[#allocation9 + $0x338] sm:$0xff]
    %v2730 = vld [vmem:[#allocation9 + $0x340] sm:$0xff]
    %v2731 = vld [vmem:[#allocation9 + $0x348] sm:$0xff]
    %v2732 = vld [vmem:[#allocation9 + $0x350] sm:$0xff]
    %v2733 = vld [vmem:[#allocation9 + $0x358] sm:$0xff]
    %v2734 = vld [vmem:[#allocation9 + $0x360] sm:$0xff]
    %v2735 = vld [vmem:[#allocation9 + $0x368] sm:$0xff]
    %v2736 = vld [vmem:[#allocation9 + $0x370] sm:$0xff]
    %v2737 = vld [vmem:[#allocation9 + $0x378] sm:$0xff]
    %v2738 = vld [vmem:[#allocation9 + $0x380] sm:$0xff]
    %v2739 = vld [vmem:[#allocation9 + $0x388] sm:$0xff]
    %v2740 = vld [vmem:[#allocation9 + $0x390] sm:$0xff]
    %v2741 = vld [vmem:[#allocation9 + $0x398] sm:$0xff]
    %v2742 = vld [vmem:[#allocation9 + $0x3a0] sm:$0xff]
    %v2743 = vld [vmem:[#allocation9 + $0x3a8] sm:$0xff]
    %v2744 = vld [vmem:[#allocation9 + $0x3b0] sm:$0xff]
    %v2745 = vld [vmem:[#allocation9 + $0x3b8] sm:$0xff]
    %v2746 = vld [vmem:[#allocation9 + $0x3c0] sm:$0xff]
    %v2747 = vld [vmem:[#allocation9 + $0x3c8] sm:$0xff]
    %v2748 = vld [vmem:[#allocation9 + $0x3d0] sm:$0xff]
    %v2749 = vld [vmem:[#allocation9 + $0x3d8] sm:$0xff]
    %v2750 = vld [vmem:[#allocation9 + $0x3e0] sm:$0xff]
    %v2751 = vld [vmem:[#allocation9 + $0x3e8] sm:$0xff]
    %v2752 = vld [vmem:[#allocation9 + $0x3f0] sm:$0xff]
    %v2753 = vld [vmem:[#allocation9 + $0x3f8] sm:$0xff]
    %v2754 = vld [vmem:[%s12] sm:$0x3]
    %v2756 = vlaneseq
    %v2757 = vshrl.u32 %v2756, 7
    %v2758 = vsub.s32 0, %v2757
    %v2759 = vrot.slane %v2754, %v2758
    %v2760 = vlaneseq
    %v2761 = vshrl.u32 %v2760, 7
    %v2762 = vsub.s32 1, %v2761
    %v2763 = vrot.slane %v2754, %v2762
    %v2894 = vunpack.c.l.b16 %v2626
    %v2895 = vunpack.c.h.b16 %v2626
    %v2896 = vunpack.c.l.b16 %v2627
    %v2897 = vunpack.c.h.b16 %v2627
    %v2898 = vunpack.c.l.b16 %v2628
    %v2899 = vunpack.c.h.b16 %v2628
    %v2900 = vunpack.c.l.b16 %v2629
    %v2901 = vunpack.c.h.b16 %v2629
    %v2902 = vunpack.c.l.b16 %v2630
    %v2903 = vunpack.c.h.b16 %v2630
    %v2904 = vunpack.c.l.b16 %v2631
    %v2905 = vunpack.c.h.b16 %v2631
    %v2906 = vunpack.c.l.b16 %v2632
    %v2907 = vunpack.c.h.b16 %v2632
    %v2908 = vunpack.c.l.b16 %v2633
    %v2909 = vunpack.c.h.b16 %v2633
    %v2910 = vunpack.c.l.b16 %v2634
    %v2911 = vunpack.c.h.b16 %v2634
    %v2912 = vunpack.c.l.b16 %v2635
    %v2913 = vunpack.c.h.b16 %v2635
    %v2914 = vunpack.c.l.b16 %v2636
    %v2915 = vunpack.c.h.b16 %v2636
    %v2916 = vunpack.c.l.b16 %v2637
    %v2917 = vunpack.c.h.b16 %v2637
    %v2918 = vunpack.c.l.b16 %v2638
    %v2919 = vunpack.c.h.b16 %v2638
    %v2920 = vunpack.c.l.b16 %v2639
    %v2921 = vunpack.c.h.b16 %v2639
    %v2922 = vunpack.c.l.b16 %v2640
    %v2923 = vunpack.c.h.b16 %v2640
    %v2924 = vunpack.c.l.b16 %v2641
    %v2925 = vunpack.c.h.b16 %v2641
    %v2926 = vunpack.c.l.b16 %v2642
    %v2927 = vunpack.c.h.b16 %v2642
    %v2928 = vunpack.c.l.b16 %v2643
    %v2929 = vunpack.c.h.b16 %v2643
    %v2930 = vunpack.c.l.b16 %v2644
    %v2931 = vunpack.c.h.b16 %v2644
    %v2932 = vunpack.c.l.b16 %v2645
    %v2933 = vunpack.c.h.b16 %v2645
    %v2934 = vunpack.c.l.b16 %v2646
    %v2935 = vunpack.c.h.b16 %v2646
    %v2936 = vunpack.c.l.b16 %v2647
    %v2937 = vunpack.c.h.b16 %v2647
    %v2938 = vunpack.c.l.b16 %v2648
    %v2939 = vunpack.c.h.b16 %v2648
    %v2940 = vunpack.c.l.b16 %v2649
    %v2941 = vunpack.c.h.b16 %v2649
    %v2942 = vunpack.c.l.b16 %v2650
    %v2943 = vunpack.c.h.b16 %v2650
    %v2944 = vunpack.c.l.b16 %v2651
    %v2945 = vunpack.c.h.b16 %v2651
    %v2946 = vunpack.c.l.b16 %v2652
    %v2947 = vunpack.c.h.b16 %v2652
    %v2948 = vunpack.c.l.b16 %v2653
    %v2949 = vunpack.c.h.b16 %v2653
    %v2950 = vunpack.c.l.b16 %v2654
    %v2951 = vunpack.c.h.b16 %v2654
    %v2952 = vunpack.c.l.b16 %v2655
    %v2953 = vunpack.c.h.b16 %v2655
    %v2954 = vunpack.c.l.b16 %v2656
    %v2955 = vunpack.c.h.b16 %v2656
    %v2956 = vunpack.c.l.b16 %v2657
    %v2957 = vunpack.c.h.b16 %v2657
    %v2958 = vunpack.c.l.b16 %v2658
    %v2959 = vunpack.c.h.b16 %v2658
    %v2960 = vunpack.c.l.b16 %v2659
    %v2961 = vunpack.c.h.b16 %v2659
    %v2962 = vunpack.c.l.b16 %v2660
    %v2963 = vunpack.c.h.b16 %v2660
    %v2964 = vunpack.c.l.b16 %v2661
    %v2965 = vunpack.c.h.b16 %v2661
    %v2966 = vunpack.c.l.b16 %v2662
    %v2967 = vunpack.c.h.b16 %v2662
    %v2968 = vunpack.c.l.b16 %v2663
    %v2969 = vunpack.c.h.b16 %v2663
    %v2970 = vunpack.c.l.b16 %v2664
    %v2971 = vunpack.c.h.b16 %v2664
    %v2972 = vunpack.c.l.b16 %v2665
    %v2973 = vunpack.c.h.b16 %v2665
    %v2974 = vunpack.c.l.b16 %v2666
    %v2975 = vunpack.c.h.b16 %v2666
    %v2976 = vunpack.c.l.b16 %v2667
    %v2977 = vunpack.c.h.b16 %v2667
    %v2978 = vunpack.c.l.b16 %v2668
    %v2979 = vunpack.c.h.b16 %v2668
    %v2980 = vunpack.c.l.b16 %v2669
    %v2981 = vunpack.c.h.b16 %v2669
    %v2982 = vunpack.c.l.b16 %v2670
    %v2983 = vunpack.c.h.b16 %v2670
    %v2984 = vunpack.c.l.b16 %v2671
    %v2985 = vunpack.c.h.b16 %v2671
    %v2986 = vunpack.c.l.b16 %v2672
    %v2987 = vunpack.c.h.b16 %v2672
    %v2988 = vunpack.c.l.b16 %v2673
    %v2989 = vunpack.c.h.b16 %v2673
    %v2990 = vunpack.c.l.b16 %v2674
    %v2991 = vunpack.c.h.b16 %v2674
    %v2992 = vunpack.c.l.b16 %v2675
    %v2993 = vunpack.c.h.b16 %v2675
    %v2994 = vunpack.c.l.b16 %v2676
    %v2995 = vunpack.c.h.b16 %v2676
    %v2996 = vunpack.c.l.b16 %v2677
    %v2997 = vunpack.c.h.b16 %v2677
    %v2998 = vunpack.c.l.b16 %v2678
    %v2999 = vunpack.c.h.b16 %v2678
    %v3000 = vunpack.c.l.b16 %v2679
    %v3001 = vunpack.c.h.b16 %v2679
    %v3002 = vunpack.c.l.b16 %v2680
    %v3003 = vunpack.c.h.b16 %v2680
    %v3004 = vunpack.c.l.b16 %v2681
    %v3005 = vunpack.c.h.b16 %v2681
    %v3006 = vunpack.c.l.b16 %v2682
    %v3007 = vunpack.c.h.b16 %v2682
    %v3008 = vunpack.c.l.b16 %v2683
    %v3009 = vunpack.c.h.b16 %v2683
    %v3010 = vunpack.c.l.b16 %v2684
    %v3011 = vunpack.c.h.b16 %v2684
    %v3012 = vunpack.c.l.b16 %v2685
    %v3013 = vunpack.c.h.b16 %v2685
    %v3014 = vunpack.c.l.b16 %v2686
    %v3015 = vunpack.c.h.b16 %v2686
    %v3016 = vunpack.c.l.b16 %v2687
    %v3017 = vunpack.c.h.b16 %v2687
    %v3018 = vunpack.c.l.b16 %v2688
    %v3019 = vunpack.c.h.b16 %v2688
    %v3020 = vunpack.c.l.b16 %v2689
    %v3021 = vunpack.c.h.b16 %v2689
    %v3022 = vunpack.c.l.b16 %v2690
    %v3023 = vunpack.c.h.b16 %v2690
    %v3024 = vunpack.c.l.b16 %v2691
    %v3025 = vunpack.c.h.b16 %v2691
    %v3026 = vunpack.c.l.b16 %v2692
    %v3027 = vunpack.c.h.b16 %v2692
    %v3028 = vunpack.c.l.b16 %v2693
    %v3029 = vunpack.c.h.b16 %v2693
    %v3030 = vunpack.c.l.b16 %v2694
    %v3031 = vunpack.c.h.b16 %v2694
    %v3032 = vunpack.c.l.b16 %v2695
    %v3033 = vunpack.c.h.b16 %v2695
    %v3034 = vunpack.c.l.b16 %v2696
    %v3035 = vunpack.c.h.b16 %v2696
    %v3036 = vunpack.c.l.b16 %v2697
    %v3037 = vunpack.c.h.b16 %v2697
    %v3038 = vunpack.c.l.b16 %v2698
    %v3039 = vunpack.c.h.b16 %v2698
    %v3040 = vunpack.c.l.b16 %v2699
    %v3041 = vunpack.c.h.b16 %v2699
    %v3042 = vunpack.c.l.b16 %v2700
    %v3043 = vunpack.c.h.b16 %v2700
    %v3044 = vunpack.c.l.b16 %v2701
    %v3045 = vunpack.c.h.b16 %v2701
    %v3046 = vunpack.c.l.b16 %v2702
    %v3047 = vunpack.c.h.b16 %v2702
    %v3048 = vunpack.c.l.b16 %v2703
    %v3049 = vunpack.c.h.b16 %v2703
    %v3050 = vunpack.c.l.b16 %v2704
    %v3051 = vunpack.c.h.b16 %v2704
    %v3052 = vunpack.c.l.b16 %v2705
    %v3053 = vunpack.c.h.b16 %v2705
    %v3054 = vunpack.c.l.b16 %v2706
    %v3055 = vunpack.c.h.b16 %v2706
    %v3056 = vunpack.c.l.b16 %v2707
    %v3057 = vunpack.c.h.b16 %v2707
    %v3058 = vunpack.c.l.b16 %v2708
    %v3059 = vunpack.c.h.b16 %v2708
    %v3060 = vunpack.c.l.b16 %v2709
    %v3061 = vunpack.c.h.b16 %v2709
    %v3062 = vunpack.c.l.b16 %v2710
    %v3063 = vunpack.c.h.b16 %v2710
    %v3064 = vunpack.c.l.b16 %v2711
    %v3065 = vunpack.c.h.b16 %v2711
    %v3066 = vunpack.c.l.b16 %v2712
    %v3067 = vunpack.c.h.b16 %v2712
    %v3068 = vunpack.c.l.b16 %v2713
    %v3069 = vunpack.c.h.b16 %v2713
    %v3070 = vunpack.c.l.b16 %v2714
    %v3071 = vunpack.c.h.b16 %v2714
    %v3072 = vunpack.c.l.b16 %v2715
    %v3073 = vunpack.c.h.b16 %v2715
    %v3074 = vunpack.c.l.b16 %v2716
    %v3075 = vunpack.c.h.b16 %v2716
    %v3076 = vunpack.c.l.b16 %v2717
    %v3077 = vunpack.c.h.b16 %v2717
    %v3078 = vunpack.c.l.b16 %v2718
    %v3079 = vunpack.c.h.b16 %v2718
    %v3080 = vunpack.c.l.b16 %v2719
    %v3081 = vunpack.c.h.b16 %v2719
    %v3082 = vunpack.c.l.b16 %v2720
    %v3083 = vunpack.c.h.b16 %v2720
    %v3084 = vunpack.c.l.b16 %v2721
    %v3085 = vunpack.c.h.b16 %v2721
    %v3086 = vunpack.c.l.b16 %v2722
    %v3087 = vunpack.c.h.b16 %v2722
    %v3088 = vunpack.c.l.b16 %v2723
    %v3089 = vunpack.c.h.b16 %v2723
    %v3090 = vunpack.c.l.b16 %v2724
    %v3091 = vunpack.c.h.b16 %v2724
    %v3092 = vunpack.c.l.b16 %v2725
    %v3093 = vunpack.c.h.b16 %v2725
    %v3094 = vunpack.c.l.b16 %v2726
    %v3095 = vunpack.c.h.b16 %v2726
    %v3096 = vunpack.c.l.b16 %v2727
    %v3097 = vunpack.c.h.b16 %v2727
    %v3098 = vunpack.c.l.b16 %v2728
    %v3099 = vunpack.c.h.b16 %v2728
    %v3100 = vunpack.c.l.b16 %v2729
    %v3101 = vunpack.c.h.b16 %v2729
    %v3102 = vunpack.c.l.b16 %v2730
    %v3103 = vunpack.c.h.b16 %v2730
    %v3104 = vunpack.c.l.b16 %v2731
    %v3105 = vunpack.c.h.b16 %v2731
    %v3106 = vunpack.c.l.b16 %v2732
    %v3107 = vunpack.c.h.b16 %v2732
    %v3108 = vunpack.c.l.b16 %v2733
    %v3109 = vunpack.c.h.b16 %v2733
    %v3110 = vunpack.c.l.b16 %v2734
    %v3111 = vunpack.c.h.b16 %v2734
    %v3112 = vunpack.c.l.b16 %v2735
    %v3113 = vunpack.c.h.b16 %v2735
    %v3114 = vunpack.c.l.b16 %v2736
    %v3115 = vunpack.c.h.b16 %v2736
    %v3116 = vunpack.c.l.b16 %v2737
    %v3117 = vunpack.c.h.b16 %v2737
    %v3118 = vunpack.c.l.b16 %v2738
    %v3119 = vunpack.c.h.b16 %v2738
    %v3120 = vunpack.c.l.b16 %v2739
    %v3121 = vunpack.c.h.b16 %v2739
    %v3122 = vunpack.c.l.b16 %v2740
    %v3123 = vunpack.c.h.b16 %v2740
    %v3124 = vunpack.c.l.b16 %v2741
    %v3125 = vunpack.c.h.b16 %v2741
    %v3126 = vunpack.c.l.b16 %v2742
    %v3127 = vunpack.c.h.b16 %v2742
    %v3128 = vunpack.c.l.b16 %v2743
    %v3129 = vunpack.c.h.b16 %v2743
    %v3130 = vunpack.c.l.b16 %v2744
    %v3131 = vunpack.c.h.b16 %v2744
    %v3132 = vunpack.c.l.b16 %v2745
    %v3133 = vunpack.c.h.b16 %v2745
    %v3134 = vunpack.c.l.b16 %v2746
    %v3135 = vunpack.c.h.b16 %v2746
    %v3136 = vunpack.c.l.b16 %v2747
    %v3137 = vunpack.c.h.b16 %v2747
    %v3138 = vunpack.c.l.b16 %v2748
    %v3139 = vunpack.c.h.b16 %v2748
    %v3140 = vunpack.c.l.b16 %v2749
    %v3141 = vunpack.c.h.b16 %v2749
    %v3142 = vunpack.c.l.b16 %v2750
    %v3143 = vunpack.c.h.b16 %v2750
    %v3144 = vunpack.c.l.b16 %v2751
    %v3145 = vunpack.c.h.b16 %v2751
    %v3146 = vunpack.c.l.b16 %v2752
    %v3147 = vunpack.c.h.b16 %v2752
    %v3148 = vunpack.c.l.b16 %v2753
    %v3149 = vunpack.c.h.b16 %v2753
    %v3150 = vpack.c.b16 %v2896, %v2894
    %v3151 = vpack.c.b16 %v2897, %v2895
    %v3152 = vpack.c.b16 %v2900, %v2898
    %v3153 = vpack.c.b16 %v2901, %v2899
    %v3154 = vpack.c.b16 %v2904, %v2902
    %v3155 = vpack.c.b16 %v2905, %v2903
    %v3156 = vpack.c.b16 %v2908, %v2906
    %v3157 = vpack.c.b16 %v2909, %v2907
    %v3158 = vpack.c.b16 %v2912, %v2910
    %v3159 = vpack.c.b16 %v2913, %v2911
    %v3160 = vpack.c.b16 %v2916, %v2914
    %v3161 = vpack.c.b16 %v2917, %v2915
    %v3162 = vpack.c.b16 %v2920, %v2918
    %v3163 = vpack.c.b16 %v2921, %v2919
    %v3164 = vpack.c.b16 %v2924, %v2922
    %v3165 = vpack.c.b16 %v2925, %v2923
    %v3166 = vpack.c.b16 %v2928, %v2926
    %v3167 = vpack.c.b16 %v2929, %v2927
    %v3168 = vpack.c.b16 %v2932, %v2930
    %v3169 = vpack.c.b16 %v2933, %v2931
    %v3170 = vpack.c.b16 %v2936, %v2934
    %v3171 = vpack.c.b16 %v2937, %v2935
    %v3172 = vpack.c.b16 %v2940, %v2938
    %v3173 = vpack.c.b16 %v2941, %v2939
    %v3174 = vpack.c.b16 %v2944, %v2942
    %v3175 = vpack.c.b16 %v2945, %v2943
    %v3176 = vpack.c.b16 %v2948, %v2946
    %v3177 = vpack.c.b16 %v2949, %v2947
    %v3178 = vpack.c.b16 %v2952, %v2950
    %v3179 = vpack.c.b16 %v2953, %v2951
    %v3180 = vpack.c.b16 %v2956, %v2954
    %v3181 = vpack.c.b16 %v2957, %v2955
    %v3182 = vpack.c.b16 %v2960, %v2958
    %v3183 = vpack.c.b16 %v2961, %v2959
    %v3184 = vpack.c.b16 %v2964, %v2962
    %v3185 = vpack.c.b16 %v2965, %v2963
    %v3186 = vpack.c.b16 %v2968, %v2966
    %v3187 = vpack.c.b16 %v2969, %v2967
    %v3188 = vpack.c.b16 %v2972, %v2970
    %v3189 = vpack.c.b16 %v2973, %v2971
    %v3190 = vpack.c.b16 %v2976, %v2974
    %v3191 = vpack.c.b16 %v2977, %v2975
    %v3192 = vpack.c.b16 %v2980, %v2978
    %v3193 = vpack.c.b16 %v2981, %v2979
    %v3194 = vpack.c.b16 %v2984, %v2982
    %v3195 = vpack.c.b16 %v2985, %v2983
    %v3196 = vpack.c.b16 %v2988, %v2986
    %v3197 = vpack.c.b16 %v2989, %v2987
    %v3198 = vpack.c.b16 %v2992, %v2990
    %v3199 = vpack.c.b16 %v2993, %v2991
    %v3200 = vpack.c.b16 %v2996, %v2994
    %v3201 = vpack.c.b16 %v2997, %v2995
    %v3202 = vpack.c.b16 %v3000, %v2998
    %v3203 = vpack.c.b16 %v3001, %v2999
    %v3204 = vpack.c.b16 %v3004, %v3002
    %v3205 = vpack.c.b16 %v3005, %v3003
    %v3206 = vpack.c.b16 %v3008, %v3006
    %v3207 = vpack.c.b16 %v3009, %v3007
    %v3208 = vpack.c.b16 %v3012, %v3010
    %v3209 = vpack.c.b16 %v3013, %v3011
    %v3210 = vpack.c.b16 %v3016, %v3014
    %v3211 = vpack.c.b16 %v3017, %v3015
    %v3212 = vpack.c.b16 %v3020, %v3018
    %v3213 = vpack.c.b16 %v3021, %v3019
    %v3214 = vpack.c.b16 %v3024, %v3022
    %v3215 = vpack.c.b16 %v3025, %v3023
    %v3216 = vpack.c.b16 %v3028, %v3026
    %v3217 = vpack.c.b16 %v3029, %v3027
    %v3218 = vpack.c.b16 %v3032, %v3030
    %v3219 = vpack.c.b16 %v3033, %v3031
    %v3220 = vpack.c.b16 %v3036, %v3034
    %v3221 = vpack.c.b16 %v3037, %v3035
    %v3222 = vpack.c.b16 %v3040, %v3038
    %v3223 = vpack.c.b16 %v3041, %v3039
    %v3224 = vpack.c.b16 %v3044, %v3042
    %v3225 = vpack.c.b16 %v3045, %v3043
    %v3226 = vpack.c.b16 %v3048, %v3046
    %v3227 = vpack.c.b16 %v3049, %v3047
    %v3228 = vpack.c.b16 %v3052, %v3050
    %v3229 = vpack.c.b16 %v3053, %v3051
    %v3230 = vpack.c.b16 %v3056, %v3054
    %v3231 = vpack.c.b16 %v3057, %v3055
    %v3232 = vpack.c.b16 %v3060, %v3058
    %v3233 = vpack.c.b16 %v3061, %v3059
    %v3234 = vpack.c.b16 %v3064, %v3062
    %v3235 = vpack.c.b16 %v3065, %v3063
    %v3236 = vpack.c.b16 %v3068, %v3066
    %v3237 = vpack.c.b16 %v3069, %v3067
    %v3238 = vpack.c.b16 %v3072, %v3070
    %v3239 = vpack.c.b16 %v3073, %v3071
    %v3240 = vpack.c.b16 %v3076, %v3074
    %v3241 = vpack.c.b16 %v3077, %v3075
    %v3242 = vpack.c.b16 %v3080, %v3078
    %v3243 = vpack.c.b16 %v3081, %v3079
    %v3244 = vpack.c.b16 %v3084, %v3082
    %v3245 = vpack.c.b16 %v3085, %v3083
    %v3246 = vpack.c.b16 %v3088, %v3086
    %v3247 = vpack.c.b16 %v3089, %v3087
    %v3248 = vpack.c.b16 %v3092, %v3090
    %v3249 = vpack.c.b16 %v3093, %v3091
    %v3250 = vpack.c.b16 %v3096, %v3094
    %v3251 = vpack.c.b16 %v3097, %v3095
    %v3252 = vpack.c.b16 %v3100, %v3098
    %v3253 = vpack.c.b16 %v3101, %v3099
    %v3254 = vpack.c.b16 %v3104, %v3102
    %v3255 = vpack.c.b16 %v3105, %v3103
    %v3256 = vpack.c.b16 %v3108, %v3106
    %v3257 = vpack.c.b16 %v3109, %v3107
    %v3258 = vpack.c.b16 %v3112, %v3110
    %v3259 = vpack.c.b16 %v3113, %v3111
    %v3260 = vpack.c.b16 %v3116, %v3114
    %v3261 = vpack.c.b16 %v3117, %v3115
    %v3262 = vpack.c.b16 %v3120, %v3118
    %v3263 = vpack.c.b16 %v3121, %v3119
    %v3264 = vpack.c.b16 %v3124, %v3122
    %v3265 = vpack.c.b16 %v3125, %v3123
    %v3266 = vpack.c.b16 %v3128, %v3126
    %v3267 = vpack.c.b16 %v3129, %v3127
    %v3268 = vpack.c.b16 %v3132, %v3130
    %v3269 = vpack.c.b16 %v3133, %v3131
    %v3270 = vpack.c.b16 %v3136, %v3134
    %v3271 = vpack.c.b16 %v3137, %v3135
    %v3272 = vpack.c.b16 %v3140, %v3138
    %v3273 = vpack.c.b16 %v3141, %v3139
    %v3274 = vpack.c.b16 %v3144, %v3142
    %v3275 = vpack.c.b16 %v3145, %v3143
    %v3276 = vpack.c.b16 %v3148, %v3146
    %v3277 = vpack.c.b16 %v3149, %v3147
    %3406 = vmatprep.subr.bf16.mxu0 %v3151
    %3407 = vmatpush1.bf16.msra.mxu0 %v3150
    %3408 = vmatprep.subr.bf16.mxu0 %v3153
    %3409 = vmatpush1.bf16.msra.mxu0 %v3152
    %3410 = vmatprep.subr.bf16.mxu0 %v3155
    %3411 = vmatpush1.bf16.msra.mxu0 %v3154
    %3412 = vmatprep.subr.bf16.mxu0 %v3157
    %3413 = vmatpush1.bf16.msra.mxu0 %v3156
    %3414 = vmatprep.subr.bf16.mxu0 %v3159
    %3415 = vmatpush1.bf16.msra.mxu0 %v3158
    %3416 = vmatprep.subr.bf16.mxu0 %v3161
    %3417 = vmatpush1.bf16.msra.mxu0 %v3160
    %3418 = vmatprep.subr.bf16.mxu0 %v3163
    %3419 = vmatpush1.bf16.msra.mxu0 %v3162
    %3420 = vmatprep.subr.bf16.mxu0 %v3165
    %3421 = vmatpush1.bf16.msra.mxu0 %v3164
    %3422 = vmatprep.subr.bf16.mxu0 %v3167
    %3423 = vmatpush1.bf16.msra.mxu0 %v3166
    %3424 = vmatprep.subr.bf16.mxu0 %v3169
    %3425 = vmatpush1.bf16.msra.mxu0 %v3168
    %3426 = vmatprep.subr.bf16.mxu0 %v3171
    %3427 = vmatpush1.bf16.msra.mxu0 %v3170
    %3428 = vmatprep.subr.bf16.mxu0 %v3173
    %3429 = vmatpush1.bf16.msra.mxu0 %v3172
    %3430 = vmatprep.subr.bf16.mxu0 %v3175
    %3431 = vmatpush1.bf16.msra.mxu0 %v3174
    %3432 = vmatprep.subr.bf16.mxu0 %v3177
    %3433 = vmatpush1.bf16.msra.mxu0 %v3176
    %3434 = vmatprep.subr.bf16.mxu0 %v3179
    %3435 = vmatpush1.bf16.msra.mxu0 %v3178
    %3436 = vmatprep.subr.bf16.mxu0 %v3181
    %3437 = vmatpush1.bf16.msra.mxu0 %v3180
    %3438 = vmatprep.mubr.bf16.mxu0 %v2619
    %3439 = vmatmul.mubr.bf16.gmra.mrb[0].mxu0 %v2618
    %v3440 = vpop.f32.mrb[0].mxu0
    %v3441 = vadd.f32 %v2759, %v3440
    %v3442 = vpop.f32.mrb[0].mxu0
    %v3443 = vadd.f32 %v2763, %v3442
    %v3444 = vpop.f32.mrb[0].mxu0
    %v3445 = vpop.f32.mrb[0].mxu0
    %3446 = vdwg.mxu0
    %3447 = vmatprep.subr.bf16.mxu0 %v3183
    %3448 = vmatpush1.bf16.msra.mxu0 %v3182
    %3449 = vmatprep.subr.bf16.mxu0 %v3185
    %3450 = vmatpush1.bf16.msra.mxu0 %v3184
    %3451 = vmatprep.subr.bf16.mxu0 %v3187
    %3452 = vmatpush1.bf16.msra.mxu0 %v3186
    %3453 = vmatprep.subr.bf16.mxu0 %v3189
    %3454 = vmatpush1.bf16.msra.mxu0 %v3188
    %3455 = vmatprep.subr.bf16.mxu0 %v3191
    %3456 = vmatpush1.bf16.msra.mxu0 %v3190
    %3457 = vmatprep.subr.bf16.mxu0 %v3193
    %3458 = vmatpush1.bf16.msra.mxu0 %v3192
    %3459 = vmatprep.subr.bf16.mxu0 %v3195
    %3460 = vmatpush1.bf16.msra.mxu0 %v3194
    %3461 = vmatprep.subr.bf16.mxu0 %v3197
    %3462 = vmatpush1.bf16.msra.mxu0 %v3196
    %3463 = vmatprep.subr.bf16.mxu0 %v3199
    %3464 = vmatpush1.bf16.msra.mxu0 %v3198
    %3465 = vmatprep.subr.bf16.mxu0 %v3201
    %3466 = vmatpush1.bf16.msra.mxu0 %v3200
    %3467 = vmatprep.subr.bf16.mxu0 %v3203
    %3468 = vmatpush1.bf16.msra.mxu0 %v3202
    %3469 = vmatprep.subr.bf16.mxu0 %v3205
    %3470 = vmatpush1.bf16.msra.mxu0 %v3204
    %3471 = vmatprep.subr.bf16.mxu0 %v3207
    %3472 = vmatpush1.bf16.msra.mxu0 %v3206
    %3473 = vmatprep.subr.bf16.mxu0 %v3209
    %3474 = vmatpush1.bf16.msra.mxu0 %v3208
    %3475 = vmatprep.subr.bf16.mxu0 %v3211
    %3476 = vmatpush1.bf16.msra.mxu0 %v3210
    %3477 = vmatprep.subr.bf16.mxu0 %v3213
    %3478 = vmatpush1.bf16.msra.mxu0 %v3212
    %3479 = vmatprep.mubr.bf16.mxu0 %v2621
    %3480 = vmatmul.mubr.bf16.gmra.mrb[0].mxu0 %v2620
    %v3481 = vpop.f32.mrb[0].mxu0
    %v3482 = vadd.f32 %v3441, %v3481
    %v3483 = vpop.f32.mrb[0].mxu0
    %v3484 = vadd.f32 %v3443, %v3483
    %v3485 = vpop.f32.mrb[0].mxu0
    %v3486 = vpop.f32.mrb[0].mxu0
    %3487 = vdwg.mxu0
    %3488 = vmatprep.subr.bf16.mxu0 %v3215
    %3489 = vmatpush1.bf16.msra.mxu0 %v3214
    %3490 = vmatprep.subr.bf16.mxu0 %v3217
    %3491 = vmatpush1.bf16.msra.mxu0 %v3216
    %3492 = vmatprep.subr.bf16.mxu0 %v3219
    %3493 = vmatpush1.bf16.msra.mxu0 %v3218
    %3494 = vmatprep.subr.bf16.mxu0 %v3221
    %3495 = vmatpush1.bf16.msra.mxu0 %v3220
    %3496 = vmatprep.subr.bf16.mxu0 %v3223
    %3497 = vmatpush1.bf16.msra.mxu0 %v3222
    %3498 = vmatprep.subr.bf16.mxu0 %v3225
    %3499 = vmatpush1.bf16.msra.mxu0 %v3224
    %3500 = vmatprep.subr.bf16.mxu0 %v3227
    %3501 = vmatpush1.bf16.msra.mxu0 %v3226
    %3502 = vmatprep.subr.bf16.mxu0 %v3229
    %3503 = vmatpush1.bf16.msra.mxu0 %v3228
    %3504 = vmatprep.subr.bf16.mxu0 %v3231
    %3505 = vmatpush1.bf16.msra.mxu0 %v3230
    %3506 = vmatprep.subr.bf16.mxu0 %v3233
    %3507 = vmatpush1.bf16.msra.mxu0 %v3232
    %3508 = vmatprep.subr.bf16.mxu0 %v3235
    %3509 = vmatpush1.bf16.msra.mxu0 %v3234
    %3510 = vmatprep.subr.bf16.mxu0 %v3237
    %3511 = vmatpush1.bf16.msra.mxu0 %v3236
    %3512 = vmatprep.subr.bf16.mxu0 %v3239
    %3513 = vmatpush1.bf16.msra.mxu0 %v3238
    %3514 = vmatprep.subr.bf16.mxu0 %v3241
    %3515 = vmatpush1.bf16.msra.mxu0 %v3240
    %3516 = vmatprep.subr.bf16.mxu0 %v3243
    %3517 = vmatpush1.bf16.msra.mxu0 %v3242
    %3518 = vmatprep.subr.bf16.mxu0 %v3245
    %3519 = vmatpush1.bf16.msra.mxu0 %v3244
    %3520 = vmatprep.mubr.bf16.mxu0 %v2623
    %3521 = vmatmul.mubr.bf16.gmra.mrb[0].mxu0 %v2622
    %v3522 = vpop.f32.mrb[0].mxu0
    %v3523 = vadd.f32 %v3482, %v3522
    %v3524 = vpop.f32.mrb[0].mxu0
    %v3525 = vadd.f32 %v3484, %v3524
    %v3526 = vpop.f32.mrb[0].mxu0
    %v3527 = vpop.f32.mrb[0].mxu0
    %3528 = vdwg.mxu0
    %3529 = vmatprep.subr.bf16.mxu0 %v3247
    %3530 = vmatpush1.bf16.msra.mxu0 %v3246
    %3531 = vmatprep.subr.bf16.mxu0 %v3249
    %3532 = vmatpush1.bf16.msra.mxu0 %v3248
    %3533 = vmatprep.subr.bf16.mxu0 %v3251
    %3534 = vmatpush1.bf16.msra.mxu0 %v3250
    %3535 = vmatprep.subr.bf16.mxu0 %v3253
    %3536 = vmatpush1.bf16.msra.mxu0 %v3252
    %3537 = vmatprep.subr.bf16.mxu0 %v3255
    %3538 = vmatpush1.bf16.msra.mxu0 %v3254
    %3539 = vmatprep.subr.bf16.mxu0 %v3257
    %3540 = vmatpush1.bf16.msra.mxu0 %v3256
    %3541 = vmatprep.subr.bf16.mxu0 %v3259
    %3542 = vmatpush1.bf16.msra.mxu0 %v3258
    %3543 = vmatprep.subr.bf16.mxu0 %v3261
    %3544 = vmatpush1.bf16.msra.mxu0 %v3260
    %3545 = vmatprep.subr.bf16.mxu0 %v3263
    %3546 = vmatpush1.bf16.msra.mxu0 %v3262
    %3547 = vmatprep.subr.bf16.mxu0 %v3265
    %3548 = vmatpush1.bf16.msra.mxu0 %v3264
    %3549 = vmatprep.subr.bf16.mxu0 %v3267
    %3550 = vmatpush1.bf16.msra.mxu0 %v3266
    %3551 = vmatprep.subr.bf16.mxu0 %v3269
    %3552 = vmatpush1.bf16.msra.mxu0 %v3268
    %3553 = vmatprep.subr.bf16.mxu0 %v3271
    %3554 = vmatpush1.bf16.msra.mxu0 %v3270
    %3555 = vmatprep.subr.bf16.mxu0 %v3273
    %3556 = vmatpush1.bf16.msra.mxu0 %v3272
    %3557 = vmatprep.subr.bf16.mxu0 %v3275
    %3558 = vmatpush1.bf16.msra.mxu0 %v3274
    %3559 = vmatprep.subr.bf16.mxu0 %v3277
    %3560 = vmatpush1.bf16.msra.mxu0 %v3276
    %3561 = vmatprep.mubr.bf16.mxu0 %v2625
    %3562 = vmatmul.mubr.bf16.gmra.mrb[0].mxu0 %v2624
    %v3563 = vpop.f32.mrb[0].mxu0
    %v3564 = vadd.f32 %v3523, %v3563
    %v3565 = vpop.f32.mrb[0].mxu0
    %v3566 = vadd.f32 %v3525, %v3565
    %v3567 = vpop.f32.mrb[0].mxu0
    %v3568 = vpop.f32.mrb[0].mxu0
    %3569 = vdwg.mxu0
    %v3570 = vsub.f32 0.0, %v3564
    %v3571 = vsub.f32 0.0, %v3566
    %v3572 = vmul.f32 %v3570, 1.442695
    %v3573 = vpow.pop %v3572
    %v3574 = vmul.f32 %v3571, 1.442695
    %v3575 = vpow.pop %v3574
    %v3576 = vadd.f32 %v3573, 1.0
    %v3577 = vadd.f32 %v3575, 1.0
    %v3578 = vrcp.pop %v3576
    %v3579 = vrcp.pop %v3577
    %3580 = vst [vmem:[%s13] sm:$0xff] %v3578
    %3581 = vst [vmem:[%s13 + $0x8] sm:$0xff] %v3579
    // Predicated region
    $region74: #{conv_autoencoder_forward.1} parent=1 // pred_check
      _
    $region75: #{conv_autoencoder_forward.1} parent=1 // pred_check_branch
      %3583 = sbr.rel (0) target = $region77
    $region76: #{conv_autoencoder_forward.1} parent=1 // pred_region
      _
    $region77: #{conv_autoencoder_forward.1} parent=1 // pred_fallthru
      _
    // Predicated region
    $region78: #{conv_autoencoder_forward.1} parent=1 // pred_check
      _
    $region79: #{conv_autoencoder_forward.1} parent=1 // pred_check_branch
      %3585 = sbr.rel (0) target = $region81
    $region80: #{conv_autoencoder_forward.1} parent=1 // pred_region
      _
    $region81: #{conv_autoencoder_forward.1} parent=1 // pred_fallthru
      _
    // Predicated region
    $region82: #{conv_autoencoder_forward.1} parent=1 // pred_check
      _
    $region83: #{conv_autoencoder_forward.1} parent=1 // pred_check_branch
      %3587 = sbr.rel (0) target = $region85
    $region84: #{conv_autoencoder_forward.1} parent=1 // pred_region
      _
    $region85: #{conv_autoencoder_forward.1} parent=1 // pred_fallthru
      _
    // Predicated region
    $region86: #{conv_autoencoder_forward.1} parent=1 // pred_check
      _
    $region87: #{conv_autoencoder_forward.1} parent=1 // pred_check_branch
      %3589 = sbr.rel (0) target = $region89
    $region88: #{conv_autoencoder_forward.1} parent=1 // pred_region
      _
    $region89: #{conv_autoencoder_forward.1} parent=1 // pred_fallthru
      _
    %3590 = vsyncpa [#allocation3], 1
    %3591 = vsyncpa [#allocation5], 1
    %3592 = vsyncpa [#allocation8], 1

</llo_original>
